<compile_context>
chip_gen: v7x
topology: tpu7x:2x2x1
jax: 0.10.0
libtpu: 0.0.40
codegen_flags: <defaults>
</compile_context>

<pallas_src>
import functools

import jax
import jax.numpy as jnp
from jax import lax
from jax.experimental import pallas as pl
from jax.experimental.pallas import tpu as pltpu

K = 4        # kernel size
STRIDE = 2
PAD = 1


def _round_up(v, m):
    return (v + m - 1) // m * m


def _upsample_kernel(xs_hbm, w_hbm, b_ref, o_ref, plane_buf, w_vmem, sems, *,
                     height, width, c_pad):
    """One grid step (n, qd): all 8 parity slabs for depth-quotient qd.

    xs_hbm   : (N, D+2, (H+2)*Wp, 3*Cp) bf16 in HBM (manual DMA)
    w_hbm    : (8, 2, 2, 2*Cp, Coutp)   bf16 in HBM (manual DMA, single copy)
    b_ref    : (1, Coutp) f32           bias
    o_ref    : (1, 1, 8, H*Wp, Coutp)   bf16 output slab for (n, qd)
    plane_buf: (4, (H+2)*Wp, 3*Cp) bf16 revolving depth-plane buffer
    w_vmem   : resident weights
    sems     : DMA semaphores: [0..3] plane slots, [4] weights
    """
    ni = pl.program_id(0)
    di = pl.program_id(1)
    n_d = pl.num_programs(1)
    hw = height * width

    def plane_copy(plane, slot):
        return pltpu.make_async_copy(xs_hbm.at[ni, plane], plane_buf.at[slot],
                                     sems.at[slot])

    @pl.when(di == 0)
    def _():
        # New batch element: (re)load weights + the first 3 depth planes.
        w_cp = pltpu.make_async_copy(w_hbm, w_vmem, sems.at[4])
        w_cp.start()
        for p in range(3):
            plane_copy(p, p).start()
        for p in range(2):
            plane_copy(p, p).wait()
        w_cp.wait()

    # Newest plane of this step's halo (planes di, di+1 were waited earlier).
    plane_copy(di + 2, (di + 2) & 3).wait()

    # Prefetch the single plane the next step needs; overlaps this step's GEMMs.
    @pl.when(di + 1 < n_d)
    def _():
        plane_copy(di + 3, (di + 3) & 3).start()

    bias = b_ref[...]                                       # (1, Coutp) f32
    for rd in range(2):
        for rh in range(2):
            for rw in range(2):
                par = rd * 4 + rh * 2 + rw
                acc = None
                for jd in range(2):
                    slot = (di + rd + jd) & 3                # plane qd + rd + jd
                    for jh in range(2):
                        off = (rh + jh) * width              # multiple of 8
                        # (H*Wp, 2Cp) window: rows (qh+rh+jh, qw), lanes (jw, c)
                        rhs = plane_buf[slot, pl.ds(off, hw),
                                        pl.ds(rw * c_pad, 2 * c_pad)]
                        part = jnp.dot(rhs, w_vmem[par, jd, jh],
                                       preferred_element_type=jnp.float32)
                        acc = part + bias if acc is None else acc + part
                o_ref[0, 0, par] = acc.astype(o_ref.dtype)


def upsample_conv_transpose3d(x, w, b, out_dtype=None):
    """ConvTranspose3d(kernel=4, stride=2, padding=1), matching torch semantics.

    x: (N, C, D, H, W) f32,  w: (C, Cout, 4, 4, 4) (torch layout),  b: (Cout,)
    returns: (N, Cout, 2D, 2H, 2W) in out_dtype (default: x.dtype)
    """
    n, c, d, h, wd = x.shape
    c_in, c_out = w.shape[0], w.shape[1]
    assert c_in == c and w.shape[2:] == (K, K, K)
    out_dtype = x.dtype if out_dtype is None else out_dtype

    c_pad = _round_up(c, 128)          # lane alignment for the rw*Cp slice
    cout_pad = _round_up(c_out, 128)   # lane-dense output stores
    wd_pad = _round_up(wd, 8)          # sublane-aligned (rh+jh)*W offsets
    dp = d + 2
    hpw = (h + 2) * wd_pad
    hw = h * wd_pad

    # ---- glue: channels-last, bf16 BEFORE the transpose, pad-1 halo, 3 W-shifts in lanes
    xt = jnp.transpose(x.astype(jnp.bfloat16), (0, 2, 3, 4, 1))       # (N,D,H,W,C)
    xt = jnp.pad(xt, ((0, 0), (1, 1), (1, 1),
                      (1, 1 + wd_pad - wd), (0, c_pad - c)))          # (N,Dp,Hp,Wp+2,Cp)
    xs = jnp.stack([xt[:, :, :, s:s + wd_pad, :] for s in range(3)], axis=4)
    xs = xs.reshape(n, dp, hpw, 3 * c_pad)                            # lanes = (shift, c)

    # ---- weights: wm[rd*4+rh*2+rw, jd, jh][(jw*Cp + c), co] = w[c, co, 3-rd-2jd, 3-rh-2jh, 3-rw-2jw]
    wp = jnp.pad(w, ((0, c_pad - c), (0, cout_pad - c_out),
                     (0, 0), (0, 0), (0, 0))).astype(jnp.bfloat16)
    par_blocks = []
    for rd in (0, 1):
        for rh in (0, 1):
            for rw in (0, 1):
                per_jd = []
                for jd in (0, 1):
                    per_jh = []
                    for jh in (0, 1):
                        taps = [wp[:, :, 3 - rd - 2 * jd, 3 - rh - 2 * jh, 3 - rw - 2 * jw]
                                for jw in (0, 1)]                      # (Cp, Coutp) each
                        per_jh.append(jnp.concatenate(taps, axis=0))    # (2Cp, Coutp)
                    per_jd.append(jnp.stack(per_jh, axis=0))            # (2, 2Cp, Coutp)
                par_blocks.append(jnp.stack(per_jd, axis=0))            # (2, 2, 2Cp, Coutp)
    wm = jnp.stack(par_blocks, axis=0)                                  # (8, 2, 2, 2Cp, Coutp)
    b2 = jnp.pad(b, (0, cout_pad - c_out)).reshape(1, cout_pad).astype(jnp.float32)

    # ---- VMEM budget from the actual resident blocks
    vmem_need = (4 * hpw * 3 * c_pad * 2          # 4 revolving bf16 planes
                 + wm.size * 2                    # single-buffered bf16 weights
                 + 2 * 8 * hw * cout_pad * 2      # double-buffered bf16 out slab
                 + 2 * cout_pad * 4)              # bias
    vmem_limit = int(min(max(32 << 20, int(1.2 * vmem_need) + (8 << 20)), 100 << 20))

    kernel = functools.partial(_upsample_kernel, height=h, width=wd_pad, c_pad=c_pad)
    out_perm = pl.pallas_call(
        kernel,
        out_shape=jax.ShapeDtypeStruct((n, d, 8, hw, cout_pad), jnp.bfloat16),
        grid_spec=pltpu.PrefetchScalarGridSpec(
            num_scalar_prefetch=0,
            grid=(n, d),
            in_specs=[
                pl.BlockSpec(memory_space=pl.ANY),     # staged input, manual rolling DMA
                pl.BlockSpec(memory_space=pl.ANY),     # weights, manual single-buffer DMA
                pl.BlockSpec((1, cout_pad), lambda ni, di: (0, 0)),
            ],
            out_specs=pl.BlockSpec((1, 1, 8, hw, cout_pad),
                                   lambda ni, di: (ni, di, 0, 0, 0)),
            scratch_shapes=[
                pltpu.VMEM((4, hpw, 3 * c_pad), jnp.bfloat16),            # depth planes
                pltpu.VMEM((8, 2, 2, 2 * c_pad, cout_pad), jnp.bfloat16),  # weights
                pltpu.SemaphoreType.DMA((5,)),                             # 4 slots + weights
            ]),
        compiler_params=pltpu.CompilerParams(
            dimension_semantics=("parallel", "arbitrary"),   # d sequential: plane reuse
            vmem_limit_bytes=vmem_limit),
    )(xs, wm, b2)

    # ---- reassemble parities -> NCDHW (bf16 all the way; single cast at the end)
    out = out_perm.reshape(n, d, 2, 2, 2, h, wd_pad, cout_pad)
    out = out[:, :, :, :, :, :, :wd, :c_out]
    out = jnp.transpose(out, (0, 7, 1, 2, 5, 3, 6, 4))
    return out.reshape(n, c_out, STRIDE * d, STRIDE * h, STRIDE * wd).astype(out_dtype)


if __name__ == "__main__":
    key = jax.random.PRNGKey(0)
    kx, kw, kb = jax.random.split(key, 3)

    N, C, COUT, D, H, W = 2, 4, 8, 8, 8, 8
    x = jax.random.normal(kx, (N, C, D, H, W), jnp.float32)
    fan = C * K * K * K
    bound = 1.0 / (fan ** 0.5)
    w = jax.random.uniform(kw, (C, COUT, K, K, K), jnp.float32, -bound, bound)
    b = jax.random.uniform(kb, (COUT,), jnp.float32, -bound, bound)

    out = upsample_conv_transpose3d(x, w, b)
    out = jax.block_until_ready(out)

    # pure-JAX reference on the same bf16-rounded operands (kernel: bf16 x bf16 -> f32
    # accumulate, bf16 store).  conv_transpose == lhs-dilated correlation with flipped,
    # (in<->out)-transposed weights, padding = K - 1 - PAD.
    x_r = x.astype(jnp.bfloat16).astype(jnp.float32)
    w_r = w.astype(jnp.bfloat16).astype(jnp.float32)
    w_conv = jnp.transpose(jnp.flip(w_r, axis=(2, 3, 4)), (1, 0, 2, 3, 4))
    ref = lax.conv_general_dilated(
        x_r, w_conv, window_strides=(1, 1, 1),
        padding=((2, 2), (2, 2), (2, 2)), lhs_dilation=(2, 2, 2),
        dimension_numbers=("NCDHW", "OIDHW", "NCDHW"),
        precision=lax.Precision.HIGHEST,
    ) + b.reshape(1, -1, 1, 1, 1)

    assert out.shape == (N, COUT, STRIDE * D, STRIDE * H, STRIDE * W)
    err = float(jnp.max(jnp.abs(out - ref)))
    # bf16 output store => tolerance ~ a bf16 ulp of the result magnitude
    assert jnp.allclose(out, ref, atol=5e-3, rtol=3e-2), err
    print("KERNEL_OK")
</pallas_src>

<mosaic_0001>
module attributes {stable_mosaic.version = 11 : i64} {
  func.func @_upsample_kernel(%arg0: i32, %arg1: i32, %arg2: memref<2x10x80x384xbf16, #tpu.memory_space<any>>, %arg3: memref<8x2x2x256x128xbf16, #tpu.memory_space<any>>, %arg4: memref<1x128xf32, #tpu.memory_space<vmem>>, %arg5: memref<1x1x8x64x128xbf16, #tpu.memory_space<vmem>>, %arg6: memref<4x80x384xbf16, #tpu.memory_space<vmem>>, %arg7: memref<8x2x2x256x128xbf16, #tpu.memory_space<vmem>>, %arg8: memref<5x!tpu.dma_semaphore, #tpu.memory_space<semaphore_mem>>) attributes {dimension_semantics = [#tpu.dimension_semantics<parallel>, #tpu.dimension_semantics<arbitrary>], iteration_bounds = array<i64: 2, 8>, scalar_prefetch = 0 : i64, scratch_operands = 3 : i64, tpu.core_type = #tpu.core_type<tc>, window_params = [{}, {}, {pipeline_mode = #tpu.pipeline_mode<synchronous>, transform_indices = @transform_2, window_bounds = array<i64: 1, 128>}, {transform_indices = @transform_3, window_bounds = array<i64: 1, 1, 8, 64, 128>}]} {
    %c0_i32 = arith.constant 0 : i32
    %0 = arith.cmpi eq, %arg1, %c0_i32 : i32
    %1 = arith.extui %0 : i1 to i32
    %c0_i32_0 = arith.constant 0 : i32
    %2 = arith.cmpi ne, %1, %c0_i32_0 : i32
    scf.if %2 {
      %c4_i32 = arith.constant 4 : i32
      %329 = tpu.memref_slice %arg8[%c4_i32] : memref<5x!tpu.dma_semaphore, #tpu.memory_space<semaphore_mem>> -> memref<1x!tpu.dma_semaphore, #tpu.memory_space<semaphore_mem>>
      %330 = tpu.memref_squeeze %329 : memref<1x!tpu.dma_semaphore, #tpu.memory_space<semaphore_mem>> -> memref<!tpu.dma_semaphore, #tpu.memory_space<semaphore_mem>>
      tpu.enqueue_dma source(%arg3 : memref<8x2x2x256x128xbf16, #tpu.memory_space<any>>) target(%arg7 : memref<8x2x2x256x128xbf16, #tpu.memory_space<vmem>>) target_semaphore(%330 : memref<!tpu.dma_semaphore, #tpu.memory_space<semaphore_mem>>)
      %c0_i32_341 = arith.constant 0 : i32
      %c0_i32_342 = arith.constant 0 : i32
      %c0_i32_343 = arith.constant 0 : i32
      %c0_i32_344 = arith.constant 0 : i32
      %c0_i32_345 = arith.constant 0 : i32
      %331 = tpu.memref_slice %arg2[%arg0, %c0_i32_341, %c0_i32_344, %c0_i32_345] : memref<2x10x80x384xbf16, #tpu.memory_space<any>> -> memref<1x1x80x384xbf16, #tpu.memory_space<any>>
      %332 = tpu.memref_squeeze %331 : memref<1x1x80x384xbf16, #tpu.memory_space<any>> -> memref<80x384xbf16, #tpu.memory_space<any>>
      %c0_i32_346 = arith.constant 0 : i32
      %c0_i32_347 = arith.constant 0 : i32
      %333 = tpu.memref_slice %arg6[%c0_i32_342, %c0_i32_346, %c0_i32_347] : memref<4x80x384xbf16, #tpu.memory_space<vmem>> -> memref<1x80x384xbf16, #tpu.memory_space<vmem>>
      %334 = tpu.memref_squeeze %333 : memref<1x80x384xbf16, #tpu.memory_space<vmem>> -> memref<80x384xbf16, #tpu.memory_space<vmem>>
      %335 = tpu.memref_slice %arg8[%c0_i32_343] : memref<5x!tpu.dma_semaphore, #tpu.memory_space<semaphore_mem>> -> memref<1x!tpu.dma_semaphore, #tpu.memory_space<semaphore_mem>>
      %336 = tpu.memref_squeeze %335 : memref<1x!tpu.dma_semaphore, #tpu.memory_space<semaphore_mem>> -> memref<!tpu.dma_semaphore, #tpu.memory_space<semaphore_mem>>
      tpu.enqueue_dma source(%332 : memref<80x384xbf16, #tpu.memory_space<any>>) target(%334 : memref<80x384xbf16, #tpu.memory_space<vmem>>) target_semaphore(%336 : memref<!tpu.dma_semaphore, #tpu.memory_space<semaphore_mem>>)
      %c1_i32_348 = arith.constant 1 : i32
      %c1_i32_349 = arith.constant 1 : i32
      %c1_i32_350 = arith.constant 1 : i32
      %c0_i32_351 = arith.constant 0 : i32
      %c0_i32_352 = arith.constant 0 : i32
      %337 = tpu.memref_slice %arg2[%arg0, %c1_i32_348, %c0_i32_351, %c0_i32_352] : memref<2x10x80x384xbf16, #tpu.memory_space<any>> -> memref<1x1x80x384xbf16, #tpu.memory_space<any>>
      %338 = tpu.memref_squeeze %337 : memref<1x1x80x384xbf16, #tpu.memory_space<any>> -> memref<80x384xbf16, #tpu.memory_space<any>>
      %c0_i32_353 = arith.constant 0 : i32
      %c0_i32_354 = arith.constant 0 : i32
      %339 = tpu.memref_slice %arg6[%c1_i32_349, %c0_i32_353, %c0_i32_354] : memref<4x80x384xbf16, #tpu.memory_space<vmem>> -> memref<1x80x384xbf16, #tpu.memory_space<vmem>>
      %340 = tpu.memref_squeeze %339 : memref<1x80x384xbf16, #tpu.memory_space<vmem>> -> memref<80x384xbf16, #tpu.memory_space<vmem>>
      %341 = tpu.memref_slice %arg8[%c1_i32_350] : memref<5x!tpu.dma_semaphore, #tpu.memory_space<semaphore_mem>> -> memref<1x!tpu.dma_semaphore, #tpu.memory_space<semaphore_mem>>
      %342 = tpu.memref_squeeze %341 : memref<1x!tpu.dma_semaphore, #tpu.memory_space<semaphore_mem>> -> memref<!tpu.dma_semaphore, #tpu.memory_space<semaphore_mem>>
      tpu.enqueue_dma source(%338 : memref<80x384xbf16, #tpu.memory_space<any>>) target(%340 : memref<80x384xbf16, #tpu.memory_space<vmem>>) target_semaphore(%342 : memref<!tpu.dma_semaphore, #tpu.memory_space<semaphore_mem>>)
      %c2_i32_355 = arith.constant 2 : i32
      %c2_i32_356 = arith.constant 2 : i32
      %c2_i32_357 = arith.constant 2 : i32
      %c0_i32_358 = arith.constant 0 : i32
      %c0_i32_359 = arith.constant 0 : i32
      %343 = tpu.memref_slice %arg2[%arg0, %c2_i32_355, %c0_i32_358, %c0_i32_359] : memref<2x10x80x384xbf16, #tpu.memory_space<any>> -> memref<1x1x80x384xbf16, #tpu.memory_space<any>>
      %344 = tpu.memref_squeeze %343 : memref<1x1x80x384xbf16, #tpu.memory_space<any>> -> memref<80x384xbf16, #tpu.memory_space<any>>
      %c0_i32_360 = arith.constant 0 : i32
      %c0_i32_361 = arith.constant 0 : i32
      %345 = tpu.memref_slice %arg6[%c2_i32_356, %c0_i32_360, %c0_i32_361] : memref<4x80x384xbf16, #tpu.memory_space<vmem>> -> memref<1x80x384xbf16, #tpu.memory_space<vmem>>
      %346 = tpu.memref_squeeze %345 : memref<1x80x384xbf16, #tpu.memory_space<vmem>> -> memref<80x384xbf16, #tpu.memory_space<vmem>>
      %347 = tpu.memref_slice %arg8[%c2_i32_357] : memref<5x!tpu.dma_semaphore, #tpu.memory_space<semaphore_mem>> -> memref<1x!tpu.dma_semaphore, #tpu.memory_space<semaphore_mem>>
      %348 = tpu.memref_squeeze %347 : memref<1x!tpu.dma_semaphore, #tpu.memory_space<semaphore_mem>> -> memref<!tpu.dma_semaphore, #tpu.memory_space<semaphore_mem>>
      tpu.enqueue_dma source(%344 : memref<80x384xbf16, #tpu.memory_space<any>>) target(%346 : memref<80x384xbf16, #tpu.memory_space<vmem>>) target_semaphore(%348 : memref<!tpu.dma_semaphore, #tpu.memory_space<semaphore_mem>>)
      %c0_i32_362 = arith.constant 0 : i32
      %c0_i32_363 = arith.constant 0 : i32
      %c0_i32_364 = arith.constant 0 : i32
      %c0_i32_365 = arith.constant 0 : i32
      %c0_i32_366 = arith.constant 0 : i32
      %349 = tpu.memref_slice %arg2[%arg0, %c0_i32_362, %c0_i32_365, %c0_i32_366] : memref<2x10x80x384xbf16, #tpu.memory_space<any>> -> memref<1x1x80x384xbf16, #tpu.memory_space<any>>
      %350 = tpu.memref_squeeze %349 : memref<1x1x80x384xbf16, #tpu.memory_space<any>> -> memref<80x384xbf16, #tpu.memory_space<any>>
      %c0_i32_367 = arith.constant 0 : i32
      %c0_i32_368 = arith.constant 0 : i32
      %351 = tpu.memref_slice %arg6[%c0_i32_363, %c0_i32_367, %c0_i32_368] : memref<4x80x384xbf16, #tpu.memory_space<vmem>> -> memref<1x80x384xbf16, #tpu.memory_space<vmem>>
      %352 = tpu.memref_squeeze %351 : memref<1x80x384xbf16, #tpu.memory_space<vmem>> -> memref<80x384xbf16, #tpu.memory_space<vmem>>
      %353 = tpu.memref_slice %arg8[%c0_i32_364] : memref<5x!tpu.dma_semaphore, #tpu.memory_space<semaphore_mem>> -> memref<1x!tpu.dma_semaphore, #tpu.memory_space<semaphore_mem>>
      %354 = tpu.memref_squeeze %353 : memref<1x!tpu.dma_semaphore, #tpu.memory_space<semaphore_mem>> -> memref<!tpu.dma_semaphore, #tpu.memory_space<semaphore_mem>>
      tpu.wait_dma2 semaphore(%354 : memref<!tpu.dma_semaphore, #tpu.memory_space<semaphore_mem>>) src(%350 : memref<80x384xbf16, #tpu.memory_space<any>>) dst(%352 : memref<80x384xbf16, #tpu.memory_space<vmem>>)
      %c1_i32_369 = arith.constant 1 : i32
      %c1_i32_370 = arith.constant 1 : i32
      %c1_i32_371 = arith.constant 1 : i32
      %c0_i32_372 = arith.constant 0 : i32
      %c0_i32_373 = arith.constant 0 : i32
      %355 = tpu.memref_slice %arg2[%arg0, %c1_i32_369, %c0_i32_372, %c0_i32_373] : memref<2x10x80x384xbf16, #tpu.memory_space<any>> -> memref<1x1x80x384xbf16, #tpu.memory_space<any>>
      %356 = tpu.memref_squeeze %355 : memref<1x1x80x384xbf16, #tpu.memory_space<any>> -> memref<80x384xbf16, #tpu.memory_space<any>>
      %c0_i32_374 = arith.constant 0 : i32
      %c0_i32_375 = arith.constant 0 : i32
      %357 = tpu.memref_slice %arg6[%c1_i32_370, %c0_i32_374, %c0_i32_375] : memref<4x80x384xbf16, #tpu.memory_space<vmem>> -> memref<1x80x384xbf16, #tpu.memory_space<vmem>>
      %358 = tpu.memref_squeeze %357 : memref<1x80x384xbf16, #tpu.memory_space<vmem>> -> memref<80x384xbf16, #tpu.memory_space<vmem>>
      %359 = tpu.memref_slice %arg8[%c1_i32_371] : memref<5x!tpu.dma_semaphore, #tpu.memory_space<semaphore_mem>> -> memref<1x!tpu.dma_semaphore, #tpu.memory_space<semaphore_mem>>
      %360 = tpu.memref_squeeze %359 : memref<1x!tpu.dma_semaphore, #tpu.memory_space<semaphore_mem>> -> memref<!tpu.dma_semaphore, #tpu.memory_space<semaphore_mem>>
      tpu.wait_dma2 semaphore(%360 : memref<!tpu.dma_semaphore, #tpu.memory_space<semaphore_mem>>) src(%356 : memref<80x384xbf16, #tpu.memory_space<any>>) dst(%358 : memref<80x384xbf16, #tpu.memory_space<vmem>>)
      %c4_i32_376 = arith.constant 4 : i32
      %361 = tpu.memref_slice %arg8[%c4_i32_376] : memref<5x!tpu.dma_semaphore, #tpu.memory_space<semaphore_mem>> -> memref<1x!tpu.dma_semaphore, #tpu.memory_space<semaphore_mem>>
      %362 = tpu.memref_squeeze %361 : memref<1x!tpu.dma_semaphore, #tpu.memory_space<semaphore_mem>> -> memref<!tpu.dma_semaphore, #tpu.memory_space<semaphore_mem>>
      tpu.wait_dma2 semaphore(%362 : memref<!tpu.dma_semaphore, #tpu.memory_space<semaphore_mem>>) src(%arg3 : memref<8x2x2x256x128xbf16, #tpu.memory_space<any>>) dst(%arg7 : memref<8x2x2x256x128xbf16, #tpu.memory_space<vmem>>)
    } else {
    }
    %c2_i32 = arith.constant 2 : i32
    %3 = arith.addi %arg1, %c2_i32 : i32
    %c2_i32_1 = arith.constant 2 : i32
    %4 = arith.addi %arg1, %c2_i32_1 : i32
    %c3_i32 = arith.constant 3 : i32
    %5 = arith.andi %4, %c3_i32 : i32
    %c0_i32_2 = arith.constant 0 : i32
    %c0_i32_3 = arith.constant 0 : i32
    %6 = tpu.memref_slice %arg2[%arg0, %3, %c0_i32_2, %c0_i32_3] : memref<2x10x80x384xbf16, #tpu.memory_space<any>> -> memref<1x1x80x384xbf16, #tpu.memory_space<any>>
    %7 = tpu.memref_squeeze %6 : memref<1x1x80x384xbf16, #tpu.memory_space<any>> -> memref<80x384xbf16, #tpu.memory_space<any>>
    %c0_i32_4 = arith.constant 0 : i32
    %c0_i32_5 = arith.constant 0 : i32
    %8 = tpu.memref_slice %arg6[%5, %c0_i32_4, %c0_i32_5] : memref<4x80x384xbf16, #tpu.memory_space<vmem>> -> memref<1x80x384xbf16, #tpu.memory_space<vmem>>
    %9 = tpu.memref_squeeze %8 : memref<1x80x384xbf16, #tpu.memory_space<vmem>> -> memref<80x384xbf16, #tpu.memory_space<vmem>>
    %10 = tpu.memref_slice %arg8[%5] : memref<5x!tpu.dma_semaphore, #tpu.memory_space<semaphore_mem>> -> memref<1x!tpu.dma_semaphore, #tpu.memory_space<semaphore_mem>>
    %11 = tpu.memref_squeeze %10 : memref<1x!tpu.dma_semaphore, #tpu.memory_space<semaphore_mem>> -> memref<!tpu.dma_semaphore, #tpu.memory_space<semaphore_mem>>
    tpu.wait_dma2 semaphore(%11 : memref<!tpu.dma_semaphore, #tpu.memory_space<semaphore_mem>>) src(%7 : memref<80x384xbf16, #tpu.memory_space<any>>) dst(%9 : memref<80x384xbf16, #tpu.memory_space<vmem>>)
    %c1_i32 = arith.constant 1 : i32
    %12 = arith.addi %arg1, %c1_i32 : i32
    %c8_i32 = arith.constant 8 : i32
    %13 = arith.cmpi slt, %12, %c8_i32 : i32
    %14 = arith.extui %13 : i1 to i32
    %c0_i32_6 = arith.constant 0 : i32
    %15 = arith.cmpi ne, %14, %c0_i32_6 : i32
    scf.if %15 {
      %c3_i32_341 = arith.constant 3 : i32
      %329 = arith.addi %arg1, %c3_i32_341 : i32
      %c3_i32_342 = arith.constant 3 : i32
      %330 = arith.addi %arg1, %c3_i32_342 : i32
      %c3_i32_343 = arith.constant 3 : i32
      %331 = arith.andi %330, %c3_i32_343 : i32
      %c0_i32_344 = arith.constant 0 : i32
      %c0_i32_345 = arith.constant 0 : i32
      %332 = tpu.memref_slice %arg2[%arg0, %329, %c0_i32_344, %c0_i32_345] : memref<2x10x80x384xbf16, #tpu.memory_space<any>> -> memref<1x1x80x384xbf16, #tpu.memory_space<any>>
      %333 = tpu.memref_squeeze %332 : memref<1x1x80x384xbf16, #tpu.memory_space<any>> -> memref<80x384xbf16, #tpu.memory_space<any>>
      %c0_i32_346 = arith.constant 0 : i32
      %c0_i32_347 = arith.constant 0 : i32
      %334 = tpu.memref_slice %arg6[%331, %c0_i32_346, %c0_i32_347] : memref<4x80x384xbf16, #tpu.memory_space<vmem>> -> memref<1x80x384xbf16, #tpu.memory_space<vmem>>
      %335 = tpu.memref_squeeze %334 : memref<1x80x384xbf16, #tpu.memory_space<vmem>> -> memref<80x384xbf16, #tpu.memory_space<vmem>>
      %336 = tpu.memref_slice %arg8[%331] : memref<5x!tpu.dma_semaphore, #tpu.memory_space<semaphore_mem>> -> memref<1x!tpu.dma_semaphore, #tpu.memory_space<semaphore_mem>>
      %337 = tpu.memref_squeeze %336 : memref<1x!tpu.dma_semaphore, #tpu.memory_space<semaphore_mem>> -> memref<!tpu.dma_semaphore, #tpu.memory_space<semaphore_mem>>
      tpu.enqueue_dma source(%333 : memref<80x384xbf16, #tpu.memory_space<any>>) target(%335 : memref<80x384xbf16, #tpu.memory_space<vmem>>) target_semaphore(%337 : memref<!tpu.dma_semaphore, #tpu.memory_space<semaphore_mem>>)
    } else {
    }
    %c0 = arith.constant 0 : index
    %c0_7 = arith.constant 0 : index
    %16 = vector.load %arg4[%c0, %c0_7] : memref<1x128xf32, #tpu.memory_space<vmem>>, vector<1x128xf32>
    %c0_i32_8 = arith.constant 0 : i32
    %17 = arith.addi %arg1, %c0_i32_8 : i32
    %c0_i32_9 = arith.constant 0 : i32
    %18 = arith.addi %17, %c0_i32_9 : i32
    %c3_i32_10 = arith.constant 3 : i32
    %19 = arith.andi %18, %c3_i32_10 : i32
    %20 = arith.index_cast %19 : i32 to index
    %c0_11 = arith.constant 0 : index
    %c0_12 = arith.constant 0 : index
    %21 = vector.load %arg6[%20, %c0_11, %c0_12] : memref<4x80x384xbf16, #tpu.memory_space<vmem>>, vector<1x64x256xbf16>
    %22 = vector.shape_cast %21 : vector<1x64x256xbf16> to vector<64x256xbf16>
    %c0_13 = arith.constant 0 : index
    %c0_14 = arith.constant 0 : index
    %c0_15 = arith.constant 0 : index
    %c0_16 = arith.constant 0 : index
    %c0_17 = arith.constant 0 : index
    %23 = vector.load %arg7[%c0_13, %c0_14, %c0_15, %c0_16, %c0_17] : memref<8x2x2x256x128xbf16, #tpu.memory_space<vmem>>, vector<1x1x1x256x128xbf16>
    %24 = vector.shape_cast %23 : vector<1x1x1x256x128xbf16> to vector<256x128xbf16>
    %cst = arith.constant dense<0.000000e+00> : vector<64x128xf32>
    %25 = tpu.matmul %22, %24, %cst {dimension_numbers = #tpu.dot_dimension_numbers<[1], [0], [0], [1], [0, 0, 1, 1], [], []>} : vector<64x256xbf16>, vector<256x128xbf16>, vector<64x128xf32> -> vector<64x128xf32>
    %26 = vector.broadcast %16 : vector<1x128xf32> to vector<64x128xf32>
    %27 = arith.addf %25, %26 : vector<64x128xf32>
    %28 = arith.index_cast %19 : i32 to index
    %c8 = arith.constant 8 : index
    %c0_18 = arith.constant 0 : index
    %29 = vector.load %arg6[%28, %c8, %c0_18] : memref<4x80x384xbf16, #tpu.memory_space<vmem>>, vector<1x64x256xbf16>
    %30 = vector.shape_cast %29 : vector<1x64x256xbf16> to vector<64x256xbf16>
    %c0_19 = arith.constant 0 : index
    %c0_20 = arith.constant 0 : index
    %c1 = arith.constant 1 : index
    %c0_21 = arith.constant 0 : index
    %c0_22 = arith.constant 0 : index
    %31 = vector.load %arg7[%c0_19, %c0_20, %c1, %c0_21, %c0_22] : memref<8x2x2x256x128xbf16, #tpu.memory_space<vmem>>, vector<1x1x1x256x128xbf16>
    %32 = vector.shape_cast %31 : vector<1x1x1x256x128xbf16> to vector<256x128xbf16>
    %cst_23 = arith.constant dense<0.000000e+00> : vector<64x128xf32>
    %33 = tpu.matmul %30, %32, %cst_23 {dimension_numbers = #tpu.dot_dimension_numbers<[1], [0], [0], [1], [0, 0, 1, 1], [], []>} : vector<64x256xbf16>, vector<256x128xbf16>, vector<64x128xf32> -> vector<64x128xf32>
    %34 = arith.addf %27, %33 : vector<64x128xf32>
    %c0_i32_24 = arith.constant 0 : i32
    %35 = arith.addi %arg1, %c0_i32_24 : i32
    %c1_i32_25 = arith.constant 1 : i32
    %36 = arith.addi %35, %c1_i32_25 : i32
    %c3_i32_26 = arith.constant 3 : i32
    %37 = arith.andi %36, %c3_i32_26 : i32
    %38 = arith.index_cast %37 : i32 to index
    %c0_27 = arith.constant 0 : index
    %c0_28 = arith.constant 0 : index
    %39 = vector.load %arg6[%38, %c0_27, %c0_28] : memref<4x80x384xbf16, #tpu.memory_space<vmem>>, vector<1x64x256xbf16>
    %40 = vector.shape_cast %39 : vector<1x64x256xbf16> to vector<64x256xbf16>
    %c0_29 = arith.constant 0 : index
    %c1_30 = arith.constant 1 : index
    %c0_31 = arith.constant 0 : index
    %c0_32 = arith.constant 0 : index
    %c0_33 = arith.constant 0 : index
    %41 = vector.load %arg7[%c0_29, %c1_30, %c0_31, %c0_32, %c0_33] : memref<8x2x2x256x128xbf16, #tpu.memory_space<vmem>>, vector<1x1x1x256x128xbf16>
    %42 = vector.shape_cast %41 : vector<1x1x1x256x128xbf16> to vector<256x128xbf16>
    %cst_34 = arith.constant dense<0.000000e+00> : vector<64x128xf32>
    %43 = tpu.matmul %40, %42, %cst_34 {dimension_numbers = #tpu.dot_dimension_numbers<[1], [0], [0], [1], [0, 0, 1, 1], [], []>} : vector<64x256xbf16>, vector<256x128xbf16>, vector<64x128xf32> -> vector<64x128xf32>
    %44 = arith.addf %34, %43 : vector<64x128xf32>
    %45 = arith.index_cast %37 : i32 to index
    %c8_35 = arith.constant 8 : index
    %c0_36 = arith.constant 0 : index
    %46 = vector.load %arg6[%45, %c8_35, %c0_36] : memref<4x80x384xbf16, #tpu.memory_space<vmem>>, vector<1x64x256xbf16>
    %47 = vector.shape_cast %46 : vector<1x64x256xbf16> to vector<64x256xbf16>
    %c0_37 = arith.constant 0 : index
    %c1_38 = arith.constant 1 : index
    %c1_39 = arith.constant 1 : index
    %c0_40 = arith.constant 0 : index
    %c0_41 = arith.constant 0 : index
    %48 = vector.load %arg7[%c0_37, %c1_38, %c1_39, %c0_40, %c0_41] : memref<8x2x2x256x128xbf16, #tpu.memory_space<vmem>>, vector<1x1x1x256x128xbf16>
    %49 = vector.shape_cast %48 : vector<1x1x1x256x128xbf16> to vector<256x128xbf16>
    %cst_42 = arith.constant dense<0.000000e+00> : vector<64x128xf32>
    %50 = tpu.matmul %47, %49, %cst_42 {dimension_numbers = #tpu.dot_dimension_numbers<[1], [0], [0], [1], [0, 0, 1, 1], [], []>} : vector<64x256xbf16>, vector<256x128xbf16>, vector<64x128xf32> -> vector<64x128xf32>
    %51 = arith.addf %44, %50 : vector<64x128xf32>
    %52 = arith.truncf %51 : vector<64x128xf32> to vector<64x128xbf16>
    %c0_43 = arith.constant 0 : index
    %c0_44 = arith.constant 0 : index
    %c0_45 = arith.constant 0 : index
    %c0_46 = arith.constant 0 : index
    %c0_47 = arith.constant 0 : index
    %53 = vector.load %arg5[%c0_43, %c0_44, %c0_45, %c0_46, %c0_47] : memref<1x1x8x64x128xbf16, #tpu.memory_space<vmem>>, vector<1x1x1x64x128xbf16>
    %54 = vector.shape_cast %53 : vector<1x1x1x64x128xbf16> to vector<64x128xbf16>
    %55 = vector.shape_cast %52 : vector<64x128xbf16> to vector<1x1x1x64x128xbf16>
    tpu.vector_store %arg5[%c0_43, %c0_44, %c0_45, %c0_46, %c0_47], %55 {strides = array<i32>} : memref<1x1x8x64x128xbf16, #tpu.memory_space<vmem>>, vector<1x1x1x64x128xbf16>,
    %c0_i32_48 = arith.constant 0 : i32
    %56 = arith.addi %arg1, %c0_i32_48 : i32
    %c0_i32_49 = arith.constant 0 : i32
    %57 = arith.addi %56, %c0_i32_49 : i32
    %c3_i32_50 = arith.constant 3 : i32
    %58 = arith.andi %57, %c3_i32_50 : i32
    %59 = arith.index_cast %58 : i32 to index
    %c0_51 = arith.constant 0 : index
    %c128 = arith.constant 128 : index
    %60 = vector.load %arg6[%59, %c0_51, %c128] : memref<4x80x384xbf16, #tpu.memory_space<vmem>>, vector<1x64x256xbf16>
    %61 = vector.shape_cast %60 : vector<1x64x256xbf16> to vector<64x256xbf16>
    %c1_52 = arith.constant 1 : index
    %c0_53 = arith.constant 0 : index
    %c0_54 = arith.constant 0 : index
    %c0_55 = arith.constant 0 : index
    %c0_56 = arith.constant 0 : index
    %62 = vector.load %arg7[%c1_52, %c0_53, %c0_54, %c0_55, %c0_56] : memref<8x2x2x256x128xbf16, #tpu.memory_space<vmem>>, vector<1x1x1x256x128xbf16>
    %63 = vector.shape_cast %62 : vector<1x1x1x256x128xbf16> to vector<256x128xbf16>
    %cst_57 = arith.constant dense<0.000000e+00> : vector<64x128xf32>
    %64 = tpu.matmul %61, %63, %cst_57 {dimension_numbers = #tpu.dot_dimension_numbers<[1], [0], [0], [1], [0, 0, 1, 1], [], []>} : vector<64x256xbf16>, vector<256x128xbf16>, vector<64x128xf32> -> vector<64x128xf32>
    %65 = vector.broadcast %16 : vector<1x128xf32> to vector<64x128xf32>
    %66 = arith.addf %64, %65 : vector<64x128xf32>
    %67 = arith.index_cast %58 : i32 to index
    %c8_58 = arith.constant 8 : index
    %c128_59 = arith.constant 128 : index
    %68 = vector.load %arg6[%67, %c8_58, %c128_59] : memref<4x80x384xbf16, #tpu.memory_space<vmem>>, vector<1x64x256xbf16>
    %69 = vector.shape_cast %68 : vector<1x64x256xbf16> to vector<64x256xbf16>
    %c1_60 = arith.constant 1 : index
    %c0_61 = arith.constant 0 : index
    %c1_62 = arith.constant 1 : index
    %c0_63 = arith.constant 0 : index
    %c0_64 = arith.constant 0 : index
    %70 = vector.load %arg7[%c1_60, %c0_61, %c1_62, %c0_63, %c0_64] : memref<8x2x2x256x128xbf16, #tpu.memory_space<vmem>>, vector<1x1x1x256x128xbf16>
    %71 = vector.shape_cast %70 : vector<1x1x1x256x128xbf16> to vector<256x128xbf16>
    %cst_65 = arith.constant dense<0.000000e+00> : vector<64x128xf32>
    %72 = tpu.matmul %69, %71, %cst_65 {dimension_numbers = #tpu.dot_dimension_numbers<[1], [0], [0], [1], [0, 0, 1, 1], [], []>} : vector<64x256xbf16>, vector<256x128xbf16>, vector<64x128xf32> -> vector<64x128xf32>
    %73 = arith.addf %66, %72 : vector<64x128xf32>
    %c0_i32_66 = arith.constant 0 : i32
    %74 = arith.addi %arg1, %c0_i32_66 : i32
    %c1_i32_67 = arith.constant 1 : i32
    %75 = arith.addi %74, %c1_i32_67 : i32
    %c3_i32_68 = arith.constant 3 : i32
    %76 = arith.andi %75, %c3_i32_68 : i32
    %77 = arith.index_cast %76 : i32 to index
    %c0_69 = arith.constant 0 : index
    %c128_70 = arith.constant 128 : index
    %78 = vector.load %arg6[%77, %c0_69, %c128_70] : memref<4x80x384xbf16, #tpu.memory_space<vmem>>, vector<1x64x256xbf16>
    %79 = vector.shape_cast %78 : vector<1x64x256xbf16> to vector<64x256xbf16>
    %c1_71 = arith.constant 1 : index
    %c1_72 = arith.constant 1 : index
    %c0_73 = arith.constant 0 : index
    %c0_74 = arith.constant 0 : index
    %c0_75 = arith.constant 0 : index
    %80 = vector.load %arg7[%c1_71, %c1_72, %c0_73, %c0_74, %c0_75] : memref<8x2x2x256x128xbf16, #tpu.memory_space<vmem>>, vector<1x1x1x256x128xbf16>
    %81 = vector.shape_cast %80 : vector<1x1x1x256x128xbf16> to vector<256x128xbf16>
    %cst_76 = arith.constant dense<0.000000e+00> : vector<64x128xf32>
    %82 = tpu.matmul %79, %81, %cst_76 {dimension_numbers = #tpu.dot_dimension_numbers<[1], [0], [0], [1], [0, 0, 1, 1], [], []>} : vector<64x256xbf16>, vector<256x128xbf16>, vector<64x128xf32> -> vector<64x128xf32>
    %83 = arith.addf %73, %82 : vector<64x128xf32>
    %84 = arith.index_cast %76 : i32 to index
    %c8_77 = arith.constant 8 : index
    %c128_78 = arith.constant 128 : index
    %85 = vector.load %arg6[%84, %c8_77, %c128_78] : memref<4x80x384xbf16, #tpu.memory_space<vmem>>, vector<1x64x256xbf16>
    %86 = vector.shape_cast %85 : vector<1x64x256xbf16> to vector<64x256xbf16>
    %c1_79 = arith.constant 1 : index
    %c1_80 = arith.constant 1 : index
    %c1_81 = arith.constant 1 : index
    %c0_82 = arith.constant 0 : index
    %c0_83 = arith.constant 0 : index
    %87 = vector.load %arg7[%c1_79, %c1_80, %c1_81, %c0_82, %c0_83] : memref<8x2x2x256x128xbf16, #tpu.memory_space<vmem>>, vector<1x1x1x256x128xbf16>
    %88 = vector.shape_cast %87 : vector<1x1x1x256x128xbf16> to vector<256x128xbf16>
    %cst_84 = arith.constant dense<0.000000e+00> : vector<64x128xf32>
    %89 = tpu.matmul %86, %88, %cst_84 {dimension_numbers = #tpu.dot_dimension_numbers<[1], [0], [0], [1], [0, 0, 1, 1], [], []>} : vector<64x256xbf16>, vector<256x128xbf16>, vector<64x128xf32> -> vector<64x128xf32>
    %90 = arith.addf %83, %89 : vector<64x128xf32>
    %91 = arith.truncf %90 : vector<64x128xf32> to vector<64x128xbf16>
    %c0_85 = arith.constant 0 : index
    %c0_86 = arith.constant 0 : index
    %c1_87 = arith.constant 1 : index
    %c0_88 = arith.constant 0 : index
    %c0_89 = arith.constant 0 : index
    %92 = vector.load %arg5[%c0_85, %c0_86, %c1_87, %c0_88, %c0_89] : memref<1x1x8x64x128xbf16, #tpu.memory_space<vmem>>, vector<1x1x1x64x128xbf16>
    %93 = vector.shape_cast %92 : vector<1x1x1x64x128xbf16> to vector<64x128xbf16>
    %94 = vector.shape_cast %91 : vector<64x128xbf16> to vector<1x1x1x64x128xbf16>
    tpu.vector_store %arg5[%c0_85, %c0_86, %c1_87, %c0_88, %c0_89], %94 {strides = array<i32>} : memref<1x1x8x64x128xbf16, #tpu.memory_space<vmem>>, vector<1x1x1x64x128xbf16>,
    %c0_i32_90 = arith.constant 0 : i32
    %95 = arith.addi %arg1, %c0_i32_90 : i32
    %c0_i32_91 = arith.constant 0 : i32
    %96 = arith.addi %95, %c0_i32_91 : i32
    %c3_i32_92 = arith.constant 3 : i32
    %97 = arith.andi %96, %c3_i32_92 : i32
    %98 = arith.index_cast %97 : i32 to index
    %c8_93 = arith.constant 8 : index
    %c0_94 = arith.constant 0 : index
    %99 = vector.load %arg6[%98, %c8_93, %c0_94] : memref<4x80x384xbf16, #tpu.memory_space<vmem>>, vector<1x64x256xbf16>
    %100 = vector.shape_cast %99 : vector<1x64x256xbf16> to vector<64x256xbf16>
    %c2 = arith.constant 2 : index
    %c0_95 = arith.constant 0 : index
    %c0_96 = arith.constant 0 : index
    %c0_97 = arith.constant 0 : index
    %c0_98 = arith.constant 0 : index
    %101 = vector.load %arg7[%c2, %c0_95, %c0_96, %c0_97, %c0_98] : memref<8x2x2x256x128xbf16, #tpu.memory_space<vmem>>, vector<1x1x1x256x128xbf16>
    %102 = vector.shape_cast %101 : vector<1x1x1x256x128xbf16> to vector<256x128xbf16>
    %cst_99 = arith.constant dense<0.000000e+00> : vector<64x128xf32>
    %103 = tpu.matmul %100, %102, %cst_99 {dimension_numbers = #tpu.dot_dimension_numbers<[1], [0], [0], [1], [0, 0, 1, 1], [], []>} : vector<64x256xbf16>, vector<256x128xbf16>, vector<64x128xf32> -> vector<64x128xf32>
    %104 = vector.broadcast %16 : vector<1x128xf32> to vector<64x128xf32>
    %105 = arith.addf %103, %104 : vector<64x128xf32>
    %106 = arith.index_cast %97 : i32 to index
    %c16 = arith.constant 16 : index
    %c0_100 = arith.constant 0 : index
    %107 = vector.load %arg6[%106, %c16, %c0_100] : memref<4x80x384xbf16, #tpu.memory_space<vmem>>, vector<1x64x256xbf16>
    %108 = vector.shape_cast %107 : vector<1x64x256xbf16> to vector<64x256xbf16>
    %c2_101 = arith.constant 2 : index
    %c0_102 = arith.constant 0 : index
    %c1_103 = arith.constant 1 : index
    %c0_104 = arith.constant 0 : index
    %c0_105 = arith.constant 0 : index
    %109 = vector.load %arg7[%c2_101, %c0_102, %c1_103, %c0_104, %c0_105] : memref<8x2x2x256x128xbf16, #tpu.memory_space<vmem>>, vector<1x1x1x256x128xbf16>
    %110 = vector.shape_cast %109 : vector<1x1x1x256x128xbf16> to vector<256x128xbf16>
    %cst_106 = arith.constant dense<0.000000e+00> : vector<64x128xf32>
    %111 = tpu.matmul %108, %110, %cst_106 {dimension_numbers = #tpu.dot_dimension_numbers<[1], [0], [0], [1], [0, 0, 1, 1], [], []>} : vector<64x256xbf16>, vector<256x128xbf16>, vector<64x128xf32> -> vector<64x128xf32>
    %112 = arith.addf %105, %111 : vector<64x128xf32>
    %c0_i32_107 = arith.constant 0 : i32
    %113 = arith.addi %arg1, %c0_i32_107 : i32
    %c1_i32_108 = arith.constant 1 : i32
    %114 = arith.addi %113, %c1_i32_108 : i32
    %c3_i32_109 = arith.constant 3 : i32
    %115 = arith.andi %114, %c3_i32_109 : i32
    %116 = arith.index_cast %115 : i32 to index
    %c8_110 = arith.constant 8 : index
    %c0_111 = arith.constant 0 : index
    %117 = vector.load %arg6[%116, %c8_110, %c0_111] : memref<4x80x384xbf16, #tpu.memory_space<vmem>>, vector<1x64x256xbf16>
    %118 = vector.shape_cast %117 : vector<1x64x256xbf16> to vector<64x256xbf16>
    %c2_112 = arith.constant 2 : index
    %c1_113 = arith.constant 1 : index
    %c0_114 = arith.constant 0 : index
    %c0_115 = arith.constant 0 : index
    %c0_116 = arith.constant 0 : index
    %119 = vector.load %arg7[%c2_112, %c1_113, %c0_114, %c0_115, %c0_116] : memref<8x2x2x256x128xbf16, #tpu.memory_space<vmem>>, vector<1x1x1x256x128xbf16>
    %120 = vector.shape_cast %119 : vector<1x1x1x256x128xbf16> to vector<256x128xbf16>
    %cst_117 = arith.constant dense<0.000000e+00> : vector<64x128xf32>
    %121 = tpu.matmul %118, %120, %cst_117 {dimension_numbers = #tpu.dot_dimension_numbers<[1], [0], [0], [1], [0, 0, 1, 1], [], []>} : vector<64x256xbf16>, vector<256x128xbf16>, vector<64x128xf32> -> vector<64x128xf32>
    %122 = arith.addf %112, %121 : vector<64x128xf32>
    %123 = arith.index_cast %115 : i32 to index
    %c16_118 = arith.constant 16 : index
    %c0_119 = arith.constant 0 : index
    %124 = vector.load %arg6[%123, %c16_118, %c0_119] : memref<4x80x384xbf16, #tpu.memory_space<vmem>>, vector<1x64x256xbf16>
    %125 = vector.shape_cast %124 : vector<1x64x256xbf16> to vector<64x256xbf16>
    %c2_120 = arith.constant 2 : index
    %c1_121 = arith.constant 1 : index
    %c1_122 = arith.constant 1 : index
    %c0_123 = arith.constant 0 : index
    %c0_124 = arith.constant 0 : index
    %126 = vector.load %arg7[%c2_120, %c1_121, %c1_122, %c0_123, %c0_124] : memref<8x2x2x256x128xbf16, #tpu.memory_space<vmem>>, vector<1x1x1x256x128xbf16>
    %127 = vector.shape_cast %126 : vector<1x1x1x256x128xbf16> to vector<256x128xbf16>
    %cst_125 = arith.constant dense<0.000000e+00> : vector<64x128xf32>
    %128 = tpu.matmul %125, %127, %cst_125 {dimension_numbers = #tpu.dot_dimension_numbers<[1], [0], [0], [1], [0, 0, 1, 1], [], []>} : vector<64x256xbf16>, vector<256x128xbf16>, vector<64x128xf32> -> vector<64x128xf32>
    %129 = arith.addf %122, %128 : vector<64x128xf32>
    %130 = arith.truncf %129 : vector<64x128xf32> to vector<64x128xbf16>
    %c0_126 = arith.constant 0 : index
    %c0_127 = arith.constant 0 : index
    %c2_128 = arith.constant 2 : index
    %c0_129 = arith.constant 0 : index
    %c0_130 = arith.constant 0 : index
    %131 = vector.load %arg5[%c0_126, %c0_127, %c2_128, %c0_129, %c0_130] : memref<1x1x8x64x128xbf16, #tpu.memory_space<vmem>>, vector<1x1x1x64x128xbf16>
    %132 = vector.shape_cast %131 : vector<1x1x1x64x128xbf16> to vector<64x128xbf16>
    %133 = vector.shape_cast %130 : vector<64x128xbf16> to vector<1x1x1x64x128xbf16>
    tpu.vector_store %arg5[%c0_126, %c0_127, %c2_128, %c0_129, %c0_130], %133 {strides = array<i32>} : memref<1x1x8x64x128xbf16, #tpu.memory_space<vmem>>, vector<1x1x1x64x128xbf16>,
    %c0_i32_131 = arith.constant 0 : i32
    %134 = arith.addi %arg1, %c0_i32_131 : i32
    %c0_i32_132 = arith.constant 0 : i32
    %135 = arith.addi %134, %c0_i32_132 : i32
    %c3_i32_133 = arith.constant 3 : i32
    %136 = arith.andi %135, %c3_i32_133 : i32
    %137 = arith.index_cast %136 : i32 to index
    %c8_134 = arith.constant 8 : index
    %c128_135 = arith.constant 128 : index
    %138 = vector.load %arg6[%137, %c8_134, %c128_135] : memref<4x80x384xbf16, #tpu.memory_space<vmem>>, vector<1x64x256xbf16>
    %139 = vector.shape_cast %138 : vector<1x64x256xbf16> to vector<64x256xbf16>
    %c3 = arith.constant 3 : index
    %c0_136 = arith.constant 0 : index
    %c0_137 = arith.constant 0 : index
    %c0_138 = arith.constant 0 : index
    %c0_139 = arith.constant 0 : index
    %140 = vector.load %arg7[%c3, %c0_136, %c0_137, %c0_138, %c0_139] : memref<8x2x2x256x128xbf16, #tpu.memory_space<vmem>>, vector<1x1x1x256x128xbf16>
    %141 = vector.shape_cast %140 : vector<1x1x1x256x128xbf16> to vector<256x128xbf16>
    %cst_140 = arith.constant dense<0.000000e+00> : vector<64x128xf32>
    %142 = tpu.matmul %139, %141, %cst_140 {dimension_numbers = #tpu.dot_dimension_numbers<[1], [0], [0], [1], [0, 0, 1, 1], [], []>} : vector<64x256xbf16>, vector<256x128xbf16>, vector<64x128xf32> -> vector<64x128xf32>
    %143 = vector.broadcast %16 : vector<1x128xf32> to vector<64x128xf32>
    %144 = arith.addf %142, %143 : vector<64x128xf32>
    %145 = arith.index_cast %136 : i32 to index
    %c16_141 = arith.constant 16 : index
    %c128_142 = arith.constant 128 : index
    %146 = vector.load %arg6[%145, %c16_141, %c128_142] : memref<4x80x384xbf16, #tpu.memory_space<vmem>>, vector<1x64x256xbf16>
    %147 = vector.shape_cast %146 : vector<1x64x256xbf16> to vector<64x256xbf16>
    %c3_143 = arith.constant 3 : index
    %c0_144 = arith.constant 0 : index
    %c1_145 = arith.constant 1 : index
    %c0_146 = arith.constant 0 : index
    %c0_147 = arith.constant 0 : index
    %148 = vector.load %arg7[%c3_143, %c0_144, %c1_145, %c0_146, %c0_147] : memref<8x2x2x256x128xbf16, #tpu.memory_space<vmem>>, vector<1x1x1x256x128xbf16>
    %149 = vector.shape_cast %148 : vector<1x1x1x256x128xbf16> to vector<256x128xbf16>
    %cst_148 = arith.constant dense<0.000000e+00> : vector<64x128xf32>
    %150 = tpu.matmul %147, %149, %cst_148 {dimension_numbers = #tpu.dot_dimension_numbers<[1], [0], [0], [1], [0, 0, 1, 1], [], []>} : vector<64x256xbf16>, vector<256x128xbf16>, vector<64x128xf32> -> vector<64x128xf32>
    %151 = arith.addf %144, %150 : vector<64x128xf32>
    %c0_i32_149 = arith.constant 0 : i32
    %152 = arith.addi %arg1, %c0_i32_149 : i32
    %c1_i32_150 = arith.constant 1 : i32
    %153 = arith.addi %152, %c1_i32_150 : i32
    %c3_i32_151 = arith.constant 3 : i32
    %154 = arith.andi %153, %c3_i32_151 : i32
    %155 = arith.index_cast %154 : i32 to index
    %c8_152 = arith.constant 8 : index
    %c128_153 = arith.constant 128 : index
    %156 = vector.load %arg6[%155, %c8_152, %c128_153] : memref<4x80x384xbf16, #tpu.memory_space<vmem>>, vector<1x64x256xbf16>
    %157 = vector.shape_cast %156 : vector<1x64x256xbf16> to vector<64x256xbf16>
    %c3_154 = arith.constant 3 : index
    %c1_155 = arith.constant 1 : index
    %c0_156 = arith.constant 0 : index
    %c0_157 = arith.constant 0 : index
    %c0_158 = arith.constant 0 : index
    %158 = vector.load %arg7[%c3_154, %c1_155, %c0_156, %c0_157, %c0_158] : memref<8x2x2x256x128xbf16, #tpu.memory_space<vmem>>, vector<1x1x1x256x128xbf16>
    %159 = vector.shape_cast %158 : vector<1x1x1x256x128xbf16> to vector<256x128xbf16>
    %cst_159 = arith.constant dense<0.000000e+00> : vector<64x128xf32>
    %160 = tpu.matmul %157, %159, %cst_159 {dimension_numbers = #tpu.dot_dimension_numbers<[1], [0], [0], [1], [0, 0, 1, 1], [], []>} : vector<64x256xbf16>, vector<256x128xbf16>, vector<64x128xf32> -> vector<64x128xf32>
    %161 = arith.addf %151, %160 : vector<64x128xf32>
    %162 = arith.index_cast %154 : i32 to index
    %c16_160 = arith.constant 16 : index
    %c128_161 = arith.constant 128 : index
    %163 = vector.load %arg6[%162, %c16_160, %c128_161] : memref<4x80x384xbf16, #tpu.memory_space<vmem>>, vector<1x64x256xbf16>
    %164 = vector.shape_cast %163 : vector<1x64x256xbf16> to vector<64x256xbf16>
    %c3_162 = arith.constant 3 : index
    %c1_163 = arith.constant 1 : index
    %c1_164 = arith.constant 1 : index
    %c0_165 = arith.constant 0 : index
    %c0_166 = arith.constant 0 : index
    %165 = vector.load %arg7[%c3_162, %c1_163, %c1_164, %c0_165, %c0_166] : memref<8x2x2x256x128xbf16, #tpu.memory_space<vmem>>, vector<1x1x1x256x128xbf16>
    %166 = vector.shape_cast %165 : vector<1x1x1x256x128xbf16> to vector<256x128xbf16>
    %cst_167 = arith.constant dense<0.000000e+00> : vector<64x128xf32>
    %167 = tpu.matmul %164, %166, %cst_167 {dimension_numbers = #tpu.dot_dimension_numbers<[1], [0], [0], [1], [0, 0, 1, 1], [], []>} : vector<64x256xbf16>, vector<256x128xbf16>, vector<64x128xf32> -> vector<64x128xf32>
    %168 = arith.addf %161, %167 : vector<64x128xf32>
    %169 = arith.truncf %168 : vector<64x128xf32> to vector<64x128xbf16>
    %c0_168 = arith.constant 0 : index
    %c0_169 = arith.constant 0 : index
    %c3_170 = arith.constant 3 : index
    %c0_171 = arith.constant 0 : index
    %c0_172 = arith.constant 0 : index
    %170 = vector.load %arg5[%c0_168, %c0_169, %c3_170, %c0_171, %c0_172] : memref<1x1x8x64x128xbf16, #tpu.memory_space<vmem>>, vector<1x1x1x64x128xbf16>
    %171 = vector.shape_cast %170 : vector<1x1x1x64x128xbf16> to vector<64x128xbf16>
    %172 = vector.shape_cast %169 : vector<64x128xbf16> to vector<1x1x1x64x128xbf16>
    tpu.vector_store %arg5[%c0_168, %c0_169, %c3_170, %c0_171, %c0_172], %172 {strides = array<i32>} : memref<1x1x8x64x128xbf16, #tpu.memory_space<vmem>>, vector<1x1x1x64x128xbf16>,
    %c1_i32_173 = arith.constant 1 : i32
    %173 = arith.addi %arg1, %c1_i32_173 : i32
    %c0_i32_174 = arith.constant 0 : i32
    %174 = arith.addi %173, %c0_i32_174 : i32
    %c3_i32_175 = arith.constant 3 : i32
    %175 = arith.andi %174, %c3_i32_175 : i32
    %176 = arith.index_cast %175 : i32 to index
    %c0_176 = arith.constant 0 : index
    %c0_177 = arith.constant 0 : index
    %177 = vector.load %arg6[%176, %c0_176, %c0_177] : memref<4x80x384xbf16, #tpu.memory_space<vmem>>, vector<1x64x256xbf16>
    %178 = vector.shape_cast %177 : vector<1x64x256xbf16> to vector<64x256xbf16>
    %c4 = arith.constant 4 : index
    %c0_178 = arith.constant 0 : index
    %c0_179 = arith.constant 0 : index
    %c0_180 = arith.constant 0 : index
    %c0_181 = arith.constant 0 : index
    %179 = vector.load %arg7[%c4, %c0_178, %c0_179, %c0_180, %c0_181] : memref<8x2x2x256x128xbf16, #tpu.memory_space<vmem>>, vector<1x1x1x256x128xbf16>
    %180 = vector.shape_cast %179 : vector<1x1x1x256x128xbf16> to vector<256x128xbf16>
    %cst_182 = arith.constant dense<0.000000e+00> : vector<64x128xf32>
    %181 = tpu.matmul %178, %180, %cst_182 {dimension_numbers = #tpu.dot_dimension_numbers<[1], [0], [0], [1], [0, 0, 1, 1], [], []>} : vector<64x256xbf16>, vector<256x128xbf16>, vector<64x128xf32> -> vector<64x128xf32>
    %182 = vector.broadcast %16 : vector<1x128xf32> to vector<64x128xf32>
    %183 = arith.addf %181, %182 : vector<64x128xf32>
    %184 = arith.index_cast %175 : i32 to index
    %c8_183 = arith.constant 8 : index
    %c0_184 = arith.constant 0 : index
    %185 = vector.load %arg6[%184, %c8_183, %c0_184] : memref<4x80x384xbf16, #tpu.memory_space<vmem>>, vector<1x64x256xbf16>
    %186 = vector.shape_cast %185 : vector<1x64x256xbf16> to vector<64x256xbf16>
    %c4_185 = arith.constant 4 : index
    %c0_186 = arith.constant 0 : index
    %c1_187 = arith.constant 1 : index
    %c0_188 = arith.constant 0 : index
    %c0_189 = arith.constant 0 : index
    %187 = vector.load %arg7[%c4_185, %c0_186, %c1_187, %c0_188, %c0_189] : memref<8x2x2x256x128xbf16, #tpu.memory_space<vmem>>, vector<1x1x1x256x128xbf16>
    %188 = vector.shape_cast %187 : vector<1x1x1x256x128xbf16> to vector<256x128xbf16>
    %cst_190 = arith.constant dense<0.000000e+00> : vector<64x128xf32>
    %189 = tpu.matmul %186, %188, %cst_190 {dimension_numbers = #tpu.dot_dimension_numbers<[1], [0], [0], [1], [0, 0, 1, 1], [], []>} : vector<64x256xbf16>, vector<256x128xbf16>, vector<64x128xf32> -> vector<64x128xf32>
    %190 = arith.addf %183, %189 : vector<64x128xf32>
    %c1_i32_191 = arith.constant 1 : i32
    %191 = arith.addi %arg1, %c1_i32_191 : i32
    %c1_i32_192 = arith.constant 1 : i32
    %192 = arith.addi %191, %c1_i32_192 : i32
    %c3_i32_193 = arith.constant 3 : i32
    %193 = arith.andi %192, %c3_i32_193 : i32
    %194 = arith.index_cast %193 : i32 to index
    %c0_194 = arith.constant 0 : index
    %c0_195 = arith.constant 0 : index
    %195 = vector.load %arg6[%194, %c0_194, %c0_195] : memref<4x80x384xbf16, #tpu.memory_space<vmem>>, vector<1x64x256xbf16>
    %196 = vector.shape_cast %195 : vector<1x64x256xbf16> to vector<64x256xbf16>
    %c4_196 = arith.constant 4 : index
    %c1_197 = arith.constant 1 : index
    %c0_198 = arith.constant 0 : index
    %c0_199 = arith.constant 0 : index
    %c0_200 = arith.constant 0 : index
    %197 = vector.load %arg7[%c4_196, %c1_197, %c0_198, %c0_199, %c0_200] : memref<8x2x2x256x128xbf16, #tpu.memory_space<vmem>>, vector<1x1x1x256x128xbf16>
    %198 = vector.shape_cast %197 : vector<1x1x1x256x128xbf16> to vector<256x128xbf16>
    %cst_201 = arith.constant dense<0.000000e+00> : vector<64x128xf32>
    %199 = tpu.matmul %196, %198, %cst_201 {dimension_numbers = #tpu.dot_dimension_numbers<[1], [0], [0], [1], [0, 0, 1, 1], [], []>} : vector<64x256xbf16>, vector<256x128xbf16>, vector<64x128xf32> -> vector<64x128xf32>
    %200 = arith.addf %190, %199 : vector<64x128xf32>
    %201 = arith.index_cast %193 : i32 to index
    %c8_202 = arith.constant 8 : index
    %c0_203 = arith.constant 0 : index
    %202 = vector.load %arg6[%201, %c8_202, %c0_203] : memref<4x80x384xbf16, #tpu.memory_space<vmem>>, vector<1x64x256xbf16>
    %203 = vector.shape_cast %202 : vector<1x64x256xbf16> to vector<64x256xbf16>
    %c4_204 = arith.constant 4 : index
    %c1_205 = arith.constant 1 : index
    %c1_206 = arith.constant 1 : index
    %c0_207 = arith.constant 0 : index
    %c0_208 = arith.constant 0 : index
    %204 = vector.load %arg7[%c4_204, %c1_205, %c1_206, %c0_207, %c0_208] : memref<8x2x2x256x128xbf16, #tpu.memory_space<vmem>>, vector<1x1x1x256x128xbf16>
    %205 = vector.shape_cast %204 : vector<1x1x1x256x128xbf16> to vector<256x128xbf16>
    %cst_209 = arith.constant dense<0.000000e+00> : vector<64x128xf32>
    %206 = tpu.matmul %203, %205, %cst_209 {dimension_numbers = #tpu.dot_dimension_numbers<[1], [0], [0], [1], [0, 0, 1, 1], [], []>} : vector<64x256xbf16>, vector<256x128xbf16>, vector<64x128xf32> -> vector<64x128xf32>
    %207 = arith.addf %200, %206 : vector<64x128xf32>
    %208 = arith.truncf %207 : vector<64x128xf32> to vector<64x128xbf16>
    %c0_210 = arith.constant 0 : index
    %c0_211 = arith.constant 0 : index
    %c4_212 = arith.constant 4 : index
    %c0_213 = arith.constant 0 : index
    %c0_214 = arith.constant 0 : index
    %209 = vector.load %arg5[%c0_210, %c0_211, %c4_212, %c0_213, %c0_214] : memref<1x1x8x64x128xbf16, #tpu.memory_space<vmem>>, vector<1x1x1x64x128xbf16>
    %210 = vector.shape_cast %209 : vector<1x1x1x64x128xbf16> to vector<64x128xbf16>
    %211 = vector.shape_cast %208 : vector<64x128xbf16> to vector<1x1x1x64x128xbf16>
    tpu.vector_store %arg5[%c0_210, %c0_211, %c4_212, %c0_213, %c0_214], %211 {strides = array<i32>} : memref<1x1x8x64x128xbf16, #tpu.memory_space<vmem>>, vector<1x1x1x64x128xbf16>,
    %c1_i32_215 = arith.constant 1 : i32
    %212 = arith.addi %arg1, %c1_i32_215 : i32
    %c0_i32_216 = arith.constant 0 : i32
    %213 = arith.addi %212, %c0_i32_216 : i32
    %c3_i32_217 = arith.constant 3 : i32
    %214 = arith.andi %213, %c3_i32_217 : i32
    %215 = arith.index_cast %214 : i32 to index
    %c0_218 = arith.constant 0 : index
    %c128_219 = arith.constant 128 : index
    %216 = vector.load %arg6[%215, %c0_218, %c128_219] : memref<4x80x384xbf16, #tpu.memory_space<vmem>>, vector<1x64x256xbf16>
    %217 = vector.shape_cast %216 : vector<1x64x256xbf16> to vector<64x256xbf16>
    %c5 = arith.constant 5 : index
    %c0_220 = arith.constant 0 : index
    %c0_221 = arith.constant 0 : index
    %c0_222 = arith.constant 0 : index
    %c0_223 = arith.constant 0 : index
    %218 = vector.load %arg7[%c5, %c0_220, %c0_221, %c0_222, %c0_223] : memref<8x2x2x256x128xbf16, #tpu.memory_space<vmem>>, vector<1x1x1x256x128xbf16>
    %219 = vector.shape_cast %218 : vector<1x1x1x256x128xbf16> to vector<256x128xbf16>
    %cst_224 = arith.constant dense<0.000000e+00> : vector<64x128xf32>
    %220 = tpu.matmul %217, %219, %cst_224 {dimension_numbers = #tpu.dot_dimension_numbers<[1], [0], [0], [1], [0, 0, 1, 1], [], []>} : vector<64x256xbf16>, vector<256x128xbf16>, vector<64x128xf32> -> vector<64x128xf32>
    %221 = vector.broadcast %16 : vector<1x128xf32> to vector<64x128xf32>
    %222 = arith.addf %220, %221 : vector<64x128xf32>
    %223 = arith.index_cast %214 : i32 to index
    %c8_225 = arith.constant 8 : index
    %c128_226 = arith.constant 128 : index
    %224 = vector.load %arg6[%223, %c8_225, %c128_226] : memref<4x80x384xbf16, #tpu.memory_space<vmem>>, vector<1x64x256xbf16>
    %225 = vector.shape_cast %224 : vector<1x64x256xbf16> to vector<64x256xbf16>
    %c5_227 = arith.constant 5 : index
    %c0_228 = arith.constant 0 : index
    %c1_229 = arith.constant 1 : index
    %c0_230 = arith.constant 0 : index
    %c0_231 = arith.constant 0 : index
    %226 = vector.load %arg7[%c5_227, %c0_228, %c1_229, %c0_230, %c0_231] : memref<8x2x2x256x128xbf16, #tpu.memory_space<vmem>>, vector<1x1x1x256x128xbf16>
    %227 = vector.shape_cast %226 : vector<1x1x1x256x128xbf16> to vector<256x128xbf16>
    %cst_232 = arith.constant dense<0.000000e+00> : vector<64x128xf32>
    %228 = tpu.matmul %225, %227, %cst_232 {dimension_numbers = #tpu.dot_dimension_numbers<[1], [0], [0], [1], [0, 0, 1, 1], [], []>} : vector<64x256xbf16>, vector<256x128xbf16>, vector<64x128xf32> -> vector<64x128xf32>
    %229 = arith.addf %222, %228 : vector<64x128xf32>
    %c1_i32_233 = arith.constant 1 : i32
    %230 = arith.addi %arg1, %c1_i32_233 : i32
    %c1_i32_234 = arith.constant 1 : i32
    %231 = arith.addi %230, %c1_i32_234 : i32
    %c3_i32_235 = arith.constant 3 : i32
    %232 = arith.andi %231, %c3_i32_235 : i32
    %233 = arith.index_cast %232 : i32 to index
    %c0_236 = arith.constant 0 : index
    %c128_237 = arith.constant 128 : index
    %234 = vector.load %arg6[%233, %c0_236, %c128_237] : memref<4x80x384xbf16, #tpu.memory_space<vmem>>, vector<1x64x256xbf16>
    %235 = vector.shape_cast %234 : vector<1x64x256xbf16> to vector<64x256xbf16>
    %c5_238 = arith.constant 5 : index
    %c1_239 = arith.constant 1 : index
    %c0_240 = arith.constant 0 : index
    %c0_241 = arith.constant 0 : index
    %c0_242 = arith.constant 0 : index
    %236 = vector.load %arg7[%c5_238, %c1_239, %c0_240, %c0_241, %c0_242] : memref<8x2x2x256x128xbf16, #tpu.memory_space<vmem>>, vector<1x1x1x256x128xbf16>
    %237 = vector.shape_cast %236 : vector<1x1x1x256x128xbf16> to vector<256x128xbf16>
    %cst_243 = arith.constant dense<0.000000e+00> : vector<64x128xf32>
    %238 = tpu.matmul %235, %237, %cst_243 {dimension_numbers = #tpu.dot_dimension_numbers<[1], [0], [0], [1], [0, 0, 1, 1], [], []>} : vector<64x256xbf16>, vector<256x128xbf16>, vector<64x128xf32> -> vector<64x128xf32>
    %239 = arith.addf %229, %238 : vector<64x128xf32>
    %240 = arith.index_cast %232 : i32 to index
    %c8_244 = arith.constant 8 : index
    %c128_245 = arith.constant 128 : index
    %241 = vector.load %arg6[%240, %c8_244, %c128_245] : memref<4x80x384xbf16, #tpu.memory_space<vmem>>, vector<1x64x256xbf16>
    %242 = vector.shape_cast %241 : vector<1x64x256xbf16> to vector<64x256xbf16>
    %c5_246 = arith.constant 5 : index
    %c1_247 = arith.constant 1 : index
    %c1_248 = arith.constant 1 : index
    %c0_249 = arith.constant 0 : index
    %c0_250 = arith.constant 0 : index
    %243 = vector.load %arg7[%c5_246, %c1_247, %c1_248, %c0_249, %c0_250] : memref<8x2x2x256x128xbf16, #tpu.memory_space<vmem>>, vector<1x1x1x256x128xbf16>
    %244 = vector.shape_cast %243 : vector<1x1x1x256x128xbf16> to vector<256x128xbf16>
    %cst_251 = arith.constant dense<0.000000e+00> : vector<64x128xf32>
    %245 = tpu.matmul %242, %244, %cst_251 {dimension_numbers = #tpu.dot_dimension_numbers<[1], [0], [0], [1], [0, 0, 1, 1], [], []>} : vector<64x256xbf16>, vector<256x128xbf16>, vector<64x128xf32> -> vector<64x128xf32>
    %246 = arith.addf %239, %245 : vector<64x128xf32>
    %247 = arith.truncf %246 : vector<64x128xf32> to vector<64x128xbf16>
    %c0_252 = arith.constant 0 : index
    %c0_253 = arith.constant 0 : index
    %c5_254 = arith.constant 5 : index
    %c0_255 = arith.constant 0 : index
    %c0_256 = arith.constant 0 : index
    %248 = vector.load %arg5[%c0_252, %c0_253, %c5_254, %c0_255, %c0_256] : memref<1x1x8x64x128xbf16, #tpu.memory_space<vmem>>, vector<1x1x1x64x128xbf16>
    %249 = vector.shape_cast %248 : vector<1x1x1x64x128xbf16> to vector<64x128xbf16>
    %250 = vector.shape_cast %247 : vector<64x128xbf16> to vector<1x1x1x64x128xbf16>
    tpu.vector_store %arg5[%c0_252, %c0_253, %c5_254, %c0_255, %c0_256], %250 {strides = array<i32>} : memref<1x1x8x64x128xbf16, #tpu.memory_space<vmem>>, vector<1x1x1x64x128xbf16>,
    %c1_i32_257 = arith.constant 1 : i32
    %251 = arith.addi %arg1, %c1_i32_257 : i32
    %c0_i32_258 = arith.constant 0 : i32
    %252 = arith.addi %251, %c0_i32_258 : i32
    %c3_i32_259 = arith.constant 3 : i32
    %253 = arith.andi %252, %c3_i32_259 : i32
    %254 = arith.index_cast %253 : i32 to index
    %c8_260 = arith.constant 8 : index
    %c0_261 = arith.constant 0 : index
    %255 = vector.load %arg6[%254, %c8_260, %c0_261] : memref<4x80x384xbf16, #tpu.memory_space<vmem>>, vector<1x64x256xbf16>
    %256 = vector.shape_cast %255 : vector<1x64x256xbf16> to vector<64x256xbf16>
    %c6 = arith.constant 6 : index
    %c0_262 = arith.constant 0 : index
    %c0_263 = arith.constant 0 : index
    %c0_264 = arith.constant 0 : index
    %c0_265 = arith.constant 0 : index
    %257 = vector.load %arg7[%c6, %c0_262, %c0_263, %c0_264, %c0_265] : memref<8x2x2x256x128xbf16, #tpu.memory_space<vmem>>, vector<1x1x1x256x128xbf16>
    %258 = vector.shape_cast %257 : vector<1x1x1x256x128xbf16> to vector<256x128xbf16>
    %cst_266 = arith.constant dense<0.000000e+00> : vector<64x128xf32>
    %259 = tpu.matmul %256, %258, %cst_266 {dimension_numbers = #tpu.dot_dimension_numbers<[1], [0], [0], [1], [0, 0, 1, 1], [], []>} : vector<64x256xbf16>, vector<256x128xbf16>, vector<64x128xf32> -> vector<64x128xf32>
    %260 = vector.broadcast %16 : vector<1x128xf32> to vector<64x128xf32>
    %261 = arith.addf %259, %260 : vector<64x128xf32>
    %262 = arith.index_cast %253 : i32 to index
    %c16_267 = arith.constant 16 : index
    %c0_268 = arith.constant 0 : index
    %263 = vector.load %arg6[%262, %c16_267, %c0_268] : memref<4x80x384xbf16, #tpu.memory_space<vmem>>, vector<1x64x256xbf16>
    %264 = vector.shape_cast %263 : vector<1x64x256xbf16> to vector<64x256xbf16>
    %c6_269 = arith.constant 6 : index
    %c0_270 = arith.constant 0 : index
    %c1_271 = arith.constant 1 : index
    %c0_272 = arith.constant 0 : index
    %c0_273 = arith.constant 0 : index
    %265 = vector.load %arg7[%c6_269, %c0_270, %c1_271, %c0_272, %c0_273] : memref<8x2x2x256x128xbf16, #tpu.memory_space<vmem>>, vector<1x1x1x256x128xbf16>
    %266 = vector.shape_cast %265 : vector<1x1x1x256x128xbf16> to vector<256x128xbf16>
    %cst_274 = arith.constant dense<0.000000e+00> : vector<64x128xf32>
    %267 = tpu.matmul %264, %266, %cst_274 {dimension_numbers = #tpu.dot_dimension_numbers<[1], [0], [0], [1], [0, 0, 1, 1], [], []>} : vector<64x256xbf16>, vector<256x128xbf16>, vector<64x128xf32> -> vector<64x128xf32>
    %268 = arith.addf %261, %267 : vector<64x128xf32>
    %c1_i32_275 = arith.constant 1 : i32
    %269 = arith.addi %arg1, %c1_i32_275 : i32
    %c1_i32_276 = arith.constant 1 : i32
    %270 = arith.addi %269, %c1_i32_276 : i32
    %c3_i32_277 = arith.constant 3 : i32
    %271 = arith.andi %270, %c3_i32_277 : i32
    %272 = arith.index_cast %271 : i32 to index
    %c8_278 = arith.constant 8 : index
    %c0_279 = arith.constant 0 : index
    %273 = vector.load %arg6[%272, %c8_278, %c0_279] : memref<4x80x384xbf16, #tpu.memory_space<vmem>>, vector<1x64x256xbf16>
    %274 = vector.shape_cast %273 : vector<1x64x256xbf16> to vector<64x256xbf16>
    %c6_280 = arith.constant 6 : index
    %c1_281 = arith.constant 1 : index
    %c0_282 = arith.constant 0 : index
    %c0_283 = arith.constant 0 : index
    %c0_284 = arith.constant 0 : index
    %275 = vector.load %arg7[%c6_280, %c1_281, %c0_282, %c0_283, %c0_284] : memref<8x2x2x256x128xbf16, #tpu.memory_space<vmem>>, vector<1x1x1x256x128xbf16>
    %276 = vector.shape_cast %275 : vector<1x1x1x256x128xbf16> to vector<256x128xbf16>
    %cst_285 = arith.constant dense<0.000000e+00> : vector<64x128xf32>
    %277 = tpu.matmul %274, %276, %cst_285 {dimension_numbers = #tpu.dot_dimension_numbers<[1], [0], [0], [1], [0, 0, 1, 1], [], []>} : vector<64x256xbf16>, vector<256x128xbf16>, vector<64x128xf32> -> vector<64x128xf32>
    %278 = arith.addf %268, %277 : vector<64x128xf32>
    %279 = arith.index_cast %271 : i32 to index
    %c16_286 = arith.constant 16 : index
    %c0_287 = arith.constant 0 : index
    %280 = vector.load %arg6[%279, %c16_286, %c0_287] : memref<4x80x384xbf16, #tpu.memory_space<vmem>>, vector<1x64x256xbf16>
    %281 = vector.shape_cast %280 : vector<1x64x256xbf16> to vector<64x256xbf16>
    %c6_288 = arith.constant 6 : index
    %c1_289 = arith.constant 1 : index
    %c1_290 = arith.constant 1 : index
    %c0_291 = arith.constant 0 : index
    %c0_292 = arith.constant 0 : index
    %282 = vector.load %arg7[%c6_288, %c1_289, %c1_290, %c0_291, %c0_292] : memref<8x2x2x256x128xbf16, #tpu.memory_space<vmem>>, vector<1x1x1x256x128xbf16>
    %283 = vector.shape_cast %282 : vector<1x1x1x256x128xbf16> to vector<256x128xbf16>
    %cst_293 = arith.constant dense<0.000000e+00> : vector<64x128xf32>
    %284 = tpu.matmul %281, %283, %cst_293 {dimension_numbers = #tpu.dot_dimension_numbers<[1], [0], [0], [1], [0, 0, 1, 1], [], []>} : vector<64x256xbf16>, vector<256x128xbf16>, vector<64x128xf32> -> vector<64x128xf32>
    %285 = arith.addf %278, %284 : vector<64x128xf32>
    %286 = arith.truncf %285 : vector<64x128xf32> to vector<64x128xbf16>
    %c0_294 = arith.constant 0 : index
    %c0_295 = arith.constant 0 : index
    %c6_296 = arith.constant 6 : index
    %c0_297 = arith.constant 0 : index
    %c0_298 = arith.constant 0 : index
    %287 = vector.load %arg5[%c0_294, %c0_295, %c6_296, %c0_297, %c0_298] : memref<1x1x8x64x128xbf16, #tpu.memory_space<vmem>>, vector<1x1x1x64x128xbf16>
    %288 = vector.shape_cast %287 : vector<1x1x1x64x128xbf16> to vector<64x128xbf16>
    %289 = vector.shape_cast %286 : vector<64x128xbf16> to vector<1x1x1x64x128xbf16>
    tpu.vector_store %arg5[%c0_294, %c0_295, %c6_296, %c0_297, %c0_298], %289 {strides = array<i32>} : memref<1x1x8x64x128xbf16, #tpu.memory_space<vmem>>, vector<1x1x1x64x128xbf16>,
    %c1_i32_299 = arith.constant 1 : i32
    %290 = arith.addi %arg1, %c1_i32_299 : i32
    %c0_i32_300 = arith.constant 0 : i32
    %291 = arith.addi %290, %c0_i32_300 : i32
    %c3_i32_301 = arith.constant 3 : i32
    %292 = arith.andi %291, %c3_i32_301 : i32
    %293 = arith.index_cast %292 : i32 to index
    %c8_302 = arith.constant 8 : index
    %c128_303 = arith.constant 128 : index
    %294 = vector.load %arg6[%293, %c8_302, %c128_303] : memref<4x80x384xbf16, #tpu.memory_space<vmem>>, vector<1x64x256xbf16>
    %295 = vector.shape_cast %294 : vector<1x64x256xbf16> to vector<64x256xbf16>
    %c7 = arith.constant 7 : index
    %c0_304 = arith.constant 0 : index
    %c0_305 = arith.constant 0 : index
    %c0_306 = arith.constant 0 : index
    %c0_307 = arith.constant 0 : index
    %296 = vector.load %arg7[%c7, %c0_304, %c0_305, %c0_306, %c0_307] : memref<8x2x2x256x128xbf16, #tpu.memory_space<vmem>>, vector<1x1x1x256x128xbf16>
    %297 = vector.shape_cast %296 : vector<1x1x1x256x128xbf16> to vector<256x128xbf16>
    %cst_308 = arith.constant dense<0.000000e+00> : vector<64x128xf32>
    %298 = tpu.matmul %295, %297, %cst_308 {dimension_numbers = #tpu.dot_dimension_numbers<[1], [0], [0], [1], [0, 0, 1, 1], [], []>} : vector<64x256xbf16>, vector<256x128xbf16>, vector<64x128xf32> -> vector<64x128xf32>
    %299 = vector.broadcast %16 : vector<1x128xf32> to vector<64x128xf32>
    %300 = arith.addf %298, %299 : vector<64x128xf32>
    %301 = arith.index_cast %292 : i32 to index
    %c16_309 = arith.constant 16 : index
    %c128_310 = arith.constant 128 : index
    %302 = vector.load %arg6[%301, %c16_309, %c128_310] : memref<4x80x384xbf16, #tpu.memory_space<vmem>>, vector<1x64x256xbf16>
    %303 = vector.shape_cast %302 : vector<1x64x256xbf16> to vector<64x256xbf16>
    %c7_311 = arith.constant 7 : index
    %c0_312 = arith.constant 0 : index
    %c1_313 = arith.constant 1 : index
    %c0_314 = arith.constant 0 : index
    %c0_315 = arith.constant 0 : index
    %304 = vector.load %arg7[%c7_311, %c0_312, %c1_313, %c0_314, %c0_315] : memref<8x2x2x256x128xbf16, #tpu.memory_space<vmem>>, vector<1x1x1x256x128xbf16>
    %305 = vector.shape_cast %304 : vector<1x1x1x256x128xbf16> to vector<256x128xbf16>
    %cst_316 = arith.constant dense<0.000000e+00> : vector<64x128xf32>
    %306 = tpu.matmul %303, %305, %cst_316 {dimension_numbers = #tpu.dot_dimension_numbers<[1], [0], [0], [1], [0, 0, 1, 1], [], []>} : vector<64x256xbf16>, vector<256x128xbf16>, vector<64x128xf32> -> vector<64x128xf32>
    %307 = arith.addf %300, %306 : vector<64x128xf32>
    %c1_i32_317 = arith.constant 1 : i32
    %308 = arith.addi %arg1, %c1_i32_317 : i32
    %c1_i32_318 = arith.constant 1 : i32
    %309 = arith.addi %308, %c1_i32_318 : i32
    %c3_i32_319 = arith.constant 3 : i32
    %310 = arith.andi %309, %c3_i32_319 : i32
    %311 = arith.index_cast %310 : i32 to index
    %c8_320 = arith.constant 8 : index
    %c128_321 = arith.constant 128 : index
    %312 = vector.load %arg6[%311, %c8_320, %c128_321] : memref<4x80x384xbf16, #tpu.memory_space<vmem>>, vector<1x64x256xbf16>
    %313 = vector.shape_cast %312 : vector<1x64x256xbf16> to vector<64x256xbf16>
    %c7_322 = arith.constant 7 : index
    %c1_323 = arith.constant 1 : index
    %c0_324 = arith.constant 0 : index
    %c0_325 = arith.constant 0 : index
    %c0_326 = arith.constant 0 : index
    %314 = vector.load %arg7[%c7_322, %c1_323, %c0_324, %c0_325, %c0_326] : memref<8x2x2x256x128xbf16, #tpu.memory_space<vmem>>, vector<1x1x1x256x128xbf16>
    %315 = vector.shape_cast %314 : vector<1x1x1x256x128xbf16> to vector<256x128xbf16>
    %cst_327 = arith.constant dense<0.000000e+00> : vector<64x128xf32>
    %316 = tpu.matmul %313, %315, %cst_327 {dimension_numbers = #tpu.dot_dimension_numbers<[1], [0], [0], [1], [0, 0, 1, 1], [], []>} : vector<64x256xbf16>, vector<256x128xbf16>, vector<64x128xf32> -> vector<64x128xf32>
    %317 = arith.addf %307, %316 : vector<64x128xf32>
    %318 = arith.index_cast %310 : i32 to index
    %c16_328 = arith.constant 16 : index
    %c128_329 = arith.constant 128 : index
    %319 = vector.load %arg6[%318, %c16_328, %c128_329] : memref<4x80x384xbf16, #tpu.memory_space<vmem>>, vector<1x64x256xbf16>
    %320 = vector.shape_cast %319 : vector<1x64x256xbf16> to vector<64x256xbf16>
    %c7_330 = arith.constant 7 : index
    %c1_331 = arith.constant 1 : index
    %c1_332 = arith.constant 1 : index
    %c0_333 = arith.constant 0 : index
    %c0_334 = arith.constant 0 : index
    %321 = vector.load %arg7[%c7_330, %c1_331, %c1_332, %c0_333, %c0_334] : memref<8x2x2x256x128xbf16, #tpu.memory_space<vmem>>, vector<1x1x1x256x128xbf16>
    %322 = vector.shape_cast %321 : vector<1x1x1x256x128xbf16> to vector<256x128xbf16>
    %cst_335 = arith.constant dense<0.000000e+00> : vector<64x128xf32>
    %323 = tpu.matmul %320, %322, %cst_335 {dimension_numbers = #tpu.dot_dimension_numbers<[1], [0], [0], [1], [0, 0, 1, 1], [], []>} : vector<64x256xbf16>, vector<256x128xbf16>, vector<64x128xf32> -> vector<64x128xf32>
    %324 = arith.addf %317, %323 : vector<64x128xf32>
    %325 = arith.truncf %324 : vector<64x128xf32> to vector<64x128xbf16>
    %c0_336 = arith.constant 0 : index
    %c0_337 = arith.constant 0 : index
    %c7_338 = arith.constant 7 : index
    %c0_339 = arith.constant 0 : index
    %c0_340 = arith.constant 0 : index
    %326 = vector.load %arg5[%c0_336, %c0_337, %c7_338, %c0_339, %c0_340] : memref<1x1x8x64x128xbf16, #tpu.memory_space<vmem>>, vector<1x1x1x64x128xbf16>
    %327 = vector.shape_cast %326 : vector<1x1x1x64x128xbf16> to vector<64x128xbf16>
    %328 = vector.shape_cast %325 : vector<64x128xbf16> to vector<1x1x1x64x128xbf16>
    tpu.vector_store %arg5[%c0_336, %c0_337, %c7_338, %c0_339, %c0_340], %328 {strides = array<i32>} : memref<1x1x8x64x128xbf16, #tpu.memory_space<vmem>>, vector<1x1x1x64x128xbf16>,
    return
  }
  func.func @transform_2(%arg0: i32, %arg1: i32) -> (i32, i32) {
    %c0_i32 = arith.constant 0 : i32
    %c0_i32_0 = arith.constant 0 : i32
    %c0_i32_1 = arith.constant 0 : i32
    return %c0_i32, %c0_i32_0 : i32, i32
  }
  func.func @transform_3(%arg0: i32, %arg1: i32) -> (i32, i32, i32, i32, i32) {
    %c0_i32 = arith.constant 0 : i32
    %c0_i32_0 = arith.constant 0 : i32
    %c0_i32_1 = arith.constant 0 : i32
    %c0_i32_2 = arith.constant 0 : i32
    return %arg0, %arg1, %c0_i32, %c0_i32_0, %c0_i32_1 : i32, i32, i32, i32, i32
  }
}

</mosaic_0001>

<llo_original>
// kernel: tpu_custom_call.1
$region0: #{tpu_custom_call.1}
  #allocation0 [shape = 'u32[]', space=smem, size = 0x4, offset = 0x4, fixed_abs, tag = 'smem constant byte address 0x4 - core index']
  #allocation1 [shape = 'u32[144,128]{1,0:T(1,128)}', space=vmem, size = 0x12000, scoped, tag = 'internal scratch']
  #allocation2 [shape = 'bf16[4,80,384]{2,1,0:T(16,128)(2,1)}', space=vmem, size = 0x3c000, scoped, tag = 'scratch operand']
  #allocation3 [shape = 'bf16[8,2,2,256,128]{4,3,2,1,0:T(16,128)(2,1)}', space=vmem, size = 0x200000, scoped, tag = 'scratch operand']
  #allocation4 [shape = 's32[5]{0}', space=sflag, size = 0x14, scoped, tag = 'scratch operand']
  #allocation9 [shape = 's32[]', space=sflag, size = 0x4, offset = 0, fixed_abs, tag = 'sflag constant byte address 0x0 - dummy sync flag']
  #allocation10 [shape = 's32[]', space=sflag, size = 0x4, offset = 0, fixed_abs, tag = 'sflag constant byte address 0x0 - dummy sync flag']
  #allocation11 [shape = 'u32[]', space=smem, size = 0x4, offset = 0x44, fixed_abs, tag = 'smem constant byte address 0x44 - assertion arg 0']
  #allocation12 [shape = 'u32[]', space=smem, size = 0x4, offset = 0x48, fixed_abs, tag = 'smem constant byte address 0x48 - assertion arg 1']
  #allocation13 [shape = 's32[]', space=sflag, size = 0x4, offset = 0, fixed_abs, tag = 'sflag constant byte address 0x0 - dummy sync flag']
  #allocation15 [shape = 's32[]', space=sflag, size = 0x4, offset = 0, fixed_abs, tag = 'sflag constant byte address 0x0 - dummy sync flag']
  #allocation17 [shape = 's32[]', space=sflag, size = 0x4, offset = 0, fixed_abs, tag = 'sflag constant byte address 0x0 - dummy sync flag']
  #allocation19 [shape = 's32[]', space=sflag, size = 0x4, offset = 0, fixed_abs, tag = 'sflag constant byte address 0x0 - dummy sync flag']
  %s0 = inlined_call_operand.hbm [shape: bf16[2,10,80,384], index: 0, kind: input, shape index: {}]
  %s1 = inlined_call_operand.hbm [shape: bf16[8,2,2,256,128], index: 1, kind: input, shape index: {}]
  %s2 = inlined_call_operand.hbm [shape: f32[1,128], index: 2, kind: input, shape index: {}]
  %s3 = inlined_call_operand.hbm [shape: bf16[2,8,8,64,128], index: 3, kind: output, shape index: {}]
  %s4 = sld [smem:[#allocation0]]
  $region53: #{tpu_custom_call.1} parent=0
    _
  %s6 = ssub.s32 1, %s4
  %s7 = scalar_select 0, %s6, %s4
  $region1: #{tpu_custom_call.1} parent=0
    #allocation5 [shape = 'u8[512]{0}', space=vmem, size = 0x400, scoped, tag = 'input window, operand 2, single buffered']
    #allocation6 [shape = 's32[2]{0}', space=sflag, size = 0x8, scoped, tag = 'scoped memory for tpu_custom_call.1']
    #allocation7 [shape = 's32[2]{0}', space=sflag, size = 0x8, scoped, tag = 'scoped memory for tpu_custom_call.1']
    #allocation8 [shape = 'u8[262144]{0}', space=vmem, size = 0x40000, scoped, tag = 'output window, operand 0']
    %8 = vsyncpa [#allocation6], 0
    %9 = vsyncpa [#allocation7], 0
    %s10 = scalar_lea.sflag [#allocation7], 1
    %11 = vsyncpa %s10, 0
    loop: start=0, step=1, limit=18
    $region2: #{tpu_custom_call.1} parent=1 // loop_pre_header
      _
    $region3: #{tpu_custom_call.1} parent=1 // loop_header
      %s13 = sphi 0, %s17
      %p14 = scmp.ge.s32.totalorder %s13, 18
      %s20 = sphi 0, %s32
      %s21 = sphi 0, %s28
      %s22 = sphi 0, %s20
      %s23 = sphi 0, %s21
      %s24 = sphi 0, %s22
      %s25 = sphi 0, %s23
      %s33 = sphi 0, %s33
      %s35 = sphi 0, %s33
      %s36 = sphi 0, %s35
      %s50 = sphi 0, %s36
      %s58 = sphi 0, %s60
      %s61 = sphi 0, %s58
      %s62 = sphi 0, %s61
      %s78 = sphi 0, %s62
    $region4: #{tpu_custom_call.1} parent=1 // loop_header_branch
      %16 = sbr.rel (%p14) target = $region8
    $region5: #{tpu_custom_call.1} parent=1 // loop_body
      %s18 = ssub.s32 %s13, 1
      %s19 = ssub.s32 %s13, 2
      %s26 = sadd.s32 1, %s21
      %p27 = scmp.ge.s32.totalorder %s26, 8
      %s28 = scalar_select %p27, 0, %s26
      %s29 = sadd.s32 1, %s20
      %s30 = scalar_select %p27, %s29, %s20
      %p31 = scmp.ge.s32.totalorder %s30, 2
      %s32 = scalar_select %p31, 0, %s30
      %s34 = sadd.s32 %s33, 1
      %p37 = scmp.eq.s32.totalorder %s13, 15
      %p38 = scmp.ne.s32.totalorder %s33, %s35
      %p39 = scmp.eq.s32.totalorder %s13, 0
      %p40 = por %p38, %p39
      %p41 = scmp.ne.s32.totalorder %s33, %s35
      %p42 = scmp.eq.s32.totalorder %s18, 15
      %p43 = por %p41, %p42
      %p44 = scmp.ne.s32.totalorder %s35, %s36
      %p45 = scmp.eq.s32.totalorder %s18, 0
      %p46 = por %p44, %p45
      %p47 = scmp.ne.s32.totalorder %s35, %s36
      %p48 = scmp.eq.s32.totalorder %s19, 15
      %p49 = por %p47, %p48
      %p51 = scmp.ne.s32.totalorder %s36, %s50
      %p52 = scmp.eq.s32.totalorder %s19, 0
      %p53 = por %p51, %p52
      %s54 = ssub.s32 %s20, %s32
      %s55 = ssub.s32 %s21, %s28
      %s56 = sor.u32 %s54, %s55
      %p57 = scmp.eq.s32.totalorder %s56, 0
      %s59 = sadd.s32 %s58, 1
      %s60 = scalar_select %p57, %s58, %s59
      %p63 = pneg %p57
      %p64 = scmp.eq.s32.totalorder %s13, 15
      %p65 = por %p63, %p64
      %p66 = scmp.ne.s32.totalorder %s58, %s61
      %p67 = scmp.eq.s32.totalorder %s13, 0
      %p68 = por %p66, %p67
      %p69 = scmp.ne.s32.totalorder %s58, %s61
      %p70 = scmp.eq.s32.totalorder %s18, 15
      %p71 = por %p69, %p70
      %p72 = scmp.ne.s32.totalorder %s61, %s62
      %p73 = scmp.eq.s32.totalorder %s18, 0
      %p74 = por %p72, %p73
      %p75 = scmp.ne.s32.totalorder %s61, %s62
      %p76 = scmp.eq.s32.totalorder %s19, 15
      %p77 = por %p75, %p76
      %p79 = scmp.ne.s32.totalorder %s62, %s78
      %p80 = scmp.eq.s32.totalorder %s19, 0
      %p81 = por %p79, %p80
      %p82 = scmp.le.s32.totalorder 1, %s13
      %p83 = scmp.lt.s32.totalorder %s13, 17
      %p84 = pnand %p82, %p83
      %p85 = pneg %p84
      // Predicated region
      $region9: #{tpu_custom_call.1} parent=5 // pred_check
        _
      $region10: #{tpu_custom_call.1} parent=5 // pred_check_branch
        %87 = sbr.rel (%p84) target = $region12
      $region11: #{tpu_custom_call.1} parent=5 // pred_region
        %s88 = ssub.s32 %s13, 1
        // Predicated region
        $region13: #{tpu_custom_call.1} parent=11 // pred_check
          %p89 = pneg %p46
        $region14: #{tpu_custom_call.1} parent=11 // pred_check_branch
          %91 = sbr.rel (%p89) target = $region16
        $region15: #{tpu_custom_call.1} parent=11 // pred_region
          %s93 = ssub.s32 16, 16
          %94 = vsyncadd [#allocation6], %s93
          %s96 = sshll.u32 [#allocation5], 4
          %s97 = int_to_ptr.vmem [resolvable:$true] %s96
          %99 = dma.hbm_to_vmem [thread:$0]  %s2, 16, %s97, [#allocation6]
        $region16: #{tpu_custom_call.1} parent=11 // pred_fallthru
          _
      $region12: #{tpu_custom_call.1} parent=5 // pred_fallthru
        _
      %p100 = scmp.lt.s32.totalorder %s13, 16
      // Predicated region
      $region17: #{tpu_custom_call.1} parent=5 // pred_check
        %p101 = pneg %p100
      $region18: #{tpu_custom_call.1} parent=5 // pred_check_branch
        %103 = sbr.rel (%p101) target = $region20
      $region19: #{tpu_custom_call.1} parent=5 // pred_region
        _
      $region20: #{tpu_custom_call.1} parent=5 // pred_fallthru
        _
      %p104 = scmp.le.s32.totalorder 1, %s13
      %p105 = scmp.lt.s32.totalorder %s13, 17
      %p106 = pnand %p104, %p105
      %p107 = pneg %p106
      // Predicated region
      $region21: #{tpu_custom_call.1} parent=5 // pred_check
        _
      $region22: #{tpu_custom_call.1} parent=5 // pred_check_branch
        %109 = sbr.rel (%p106) target = $region24
      $region23: #{tpu_custom_call.1} parent=5 // pred_region
        %s110 = ssub.s32 %s13, 1
        // Predicated region
        $region25: #{tpu_custom_call.1} parent=23 // pred_check
          %p111 = pneg %p46
        $region26: #{tpu_custom_call.1} parent=23 // pred_check_branch
          %113 = sbr.rel (%p111) target = $region28
        $region27: #{tpu_custom_call.1} parent=23 // pred_region
          %114 = dma.done [#allocation6], 16
        $region28: #{tpu_custom_call.1} parent=23 // pred_fallthru
          _
        %p115 = pneg %p46
        %p116 = pneg %p43
        %p117 = pneg %p74
        %p118 = pneg %p71
        %s119 = sand.u32 %s61, 1
        %s120 = scalar_lea.sflag [#allocation7], %s119
        %s121 = sand.u32 %s61, 1
        %s122 = smul.addr %s121, 256
        %s123 = scalar_lea.vmem [#allocation8], %s122
        %p125 = scmp.eq.s32.totalorder %s23, 0
        // Predicated region
        $region29: #{tpu_custom_call.1} parent=23 // pred_check
          %p126 = pneg %p125
        $region30: #{tpu_custom_call.1} parent=23 // pred_check_branch
          %128 = sbr.rel (%p126) target = $region32
        $region31: #{tpu_custom_call.1} parent=23 // pred_region
          #allocation14 [shape = 'u32[9]{0}', space=smem, size = 0x24, scoped, tag = 'DMA stride descriptor']
          #allocation16 [shape = 'u32[9]{0}', space=smem, size = 0x24, scoped, tag = 'DMA stride descriptor']
          #allocation18 [shape = 'u32[9]{0}', space=smem, size = 0x24, scoped, tag = 'DMA stride descriptor']
          %s129 = scalar_lea.sflag [#allocation4], 4
          // Predicated region
          $region33: #{tpu_custom_call.1} parent=31 // pred_check
            _
          $region34: #{tpu_custom_call.1} parent=31 // pred_check_branch
            %131 = sbr.rel target = $region36
          $region35: #{tpu_custom_call.1} parent=31 // pred_region
            %132 = sst [smem:[#allocation11]] [#allocation10]
            %133 = sst [smem:[#allocation12]] [#allocation9]
          $region36: #{tpu_custom_call.1} parent=31 // pred_fallthru
            _
          %135 = shalt.err (0)
          %s137 = sshll.u32 [#allocation3], 4
          %s138 = int_to_ptr.vmem [resolvable:$true] %s137
          %140 = dma.hbm_to_vmem [thread:$0]  %s1, 65536, %s138, %s129
          %s141 = smul.u32 %s22, 300
          %s142 = smul.addr %s141, 64
          %s143 = scalar_lea.hbm %s0, %s142
          %s145 = sshll.u32 1, 14
          %s146 = sxor.u32 4294967295, %s145
          %s148 = sld [smem:[#allocation0]]
          %s149 = sadd.s32 2, %s148
          %s151 = sshll.u32 7, 26
          %s152 = sxor.u32 4294967295, %s151
          %s153 = sand.u32 0, %s152
          %s154 = sshll.u32 %s149, 26
          %s155 = sor.u32 %s153, %s154
          %s156 = sshll.u32 [#allocation2], 4
          %s157 = int_to_ptr.vmem [resolvable:$true] %s156
          %160 = sst [smem:[#allocation14]] 384
          %s161 = scalar_lea.smem [#allocation14], 1
          %162 = sst [smem:[%s161]] 384
          %s163 = scalar_lea.smem [#allocation14], 2
          %164 = sst [smem:[%s163]] 3
          %s165 = scalar_lea.smem [#allocation14], 3
          %166 = sst [smem:[%s165]] 64
          %s167 = scalar_lea.smem [#allocation14], 4
          %168 = sst [smem:[%s167]] 128
          %s169 = scalar_lea.smem [#allocation14], 5
          %170 = sst [smem:[%s169]] 2
          %s171 = scalar_lea.smem [#allocation14], 6
          %172 = sst [smem:[%s171]] 192
          %s173 = scalar_lea.smem [#allocation14], 7
          %174 = sst [smem:[%s173]] 64
          %s175 = scalar_lea.smem [#allocation14], 8
          %176 = sst [smem:[%s175]] 4
          %178 = dma.general %s143, 1920, %s157, [#allocation4], [#allocation13], [#allocation14], %s155, 0
          %s179 = sadd.s32 30, %s141
          %s180 = smul.addr %s179, 64
          %s181 = scalar_lea.hbm %s0, %s180
          %s182 = scalar_lea.vmem [#allocation2], 120
          %s183 = scalar_lea.sflag [#allocation4], 1
          %s185 = sshll.u32 1, 14
          %s186 = sxor.u32 4294967295, %s185
          %s188 = sadd.s32 2, %s148
          %s190 = sshll.u32 7, 26
          %s191 = sxor.u32 4294967295, %s190
          %s192 = sand.u32 0, %s191
          %s193 = sshll.u32 %s188, 26
          %s194 = sor.u32 %s192, %s193
          %s195 = sshll.u32 %s182, 4
          %s196 = int_to_ptr.vmem [resolvable:$true] %s195
          %199 = sst [smem:[#allocation16]] 384
          %s200 = scalar_lea.smem [#allocation16], 1
          %201 = sst [smem:[%s200]] 384
          %s202 = scalar_lea.smem [#allocation16], 2
          %203 = sst [smem:[%s202]] 3
          %s204 = scalar_lea.smem [#allocation16], 3
          %205 = sst [smem:[%s204]] 64
          %s206 = scalar_lea.smem [#allocation16], 4
          %207 = sst [smem:[%s206]] 128
          %s208 = scalar_lea.smem [#allocation16], 5
          %209 = sst [smem:[%s208]] 2
          %s210 = scalar_lea.smem [#allocation16], 6
          %211 = sst [smem:[%s210]] 192
          %s212 = scalar_lea.smem [#allocation16], 7
          %213 = sst [smem:[%s212]] 64
          %s214 = scalar_lea.smem [#allocation16], 8
          %215 = sst [smem:[%s214]] 4
          %217 = dma.general %s181, 1920, %s196, %s183, [#allocation15], [#allocation16], %s194, 0
          %s218 = sadd.s32 60, %s141
          %s219 = smul.addr %s218, 64
          %s220 = scalar_lea.hbm %s0, %s219
          %s221 = scalar_lea.vmem [#allocation2], 240
          %s222 = scalar_lea.sflag [#allocation4], 2
          %s224 = sshll.u32 1, 14
          %s225 = sxor.u32 4294967295, %s224
          %s227 = sadd.s32 2, %s148
          %s229 = sshll.u32 7, 26
          %s230 = sxor.u32 4294967295, %s229
          %s231 = sand.u32 0, %s230
          %s232 = sshll.u32 %s227, 26
          %s233 = sor.u32 %s231, %s232
          %s234 = sshll.u32 %s221, 4
          %s235 = int_to_ptr.vmem [resolvable:$true] %s234
          %238 = sst [smem:[#allocation18]] 384
          %s239 = scalar_lea.smem [#allocation18], 1
          %240 = sst [smem:[%s239]] 384
          %s241 = scalar_lea.smem [#allocation18], 2
          %242 = sst [smem:[%s241]] 3
          %s243 = scalar_lea.smem [#allocation18], 3
          %244 = sst [smem:[%s243]] 64
          %s245 = scalar_lea.smem [#allocation18], 4
          %246 = sst [smem:[%s245]] 128
          %s247 = scalar_lea.smem [#allocation18], 5
          %248 = sst [smem:[%s247]] 2
          %s249 = scalar_lea.smem [#allocation18], 6
          %250 = sst [smem:[%s249]] 192
          %s251 = scalar_lea.smem [#allocation18], 7
          %252 = sst [smem:[%s251]] 64
          %s253 = scalar_lea.smem [#allocation18], 8
          %254 = sst [smem:[%s253]] 4
          %256 = dma.general %s220, 1920, %s235, %s222, [#allocation17], [#allocation18], %s233, 0
          %s257 = smul.u32 4, 10
          %s258 = smul.u32 %s257, 3
          %s259 = sshll.u32 %s258, 4
          %260 = dma.done [#allocation4], %s259
          %s261 = sshll.u32 %s258, 4
          %262 = dma.done %s183, %s261
          %s263 = smul.u32 4, 8
          %s264 = smul.u32 %s263, 2
          %s265 = smul.u32 %s264, 2
          %s266 = smul.u32 %s265, 32
          %s267 = smul.u32 %s266, 1
          %s268 = sshll.u32 %s267, 4
          %269 = dma.done %s129, %s268
        $region32: #{tpu_custom_call.1} parent=23 // pred_fallthru
          _
        %s270 = sadd.s32 %s23, 2
        %s271 = sand.u32 %s270, 3
        %s272 = smul.u32 %s271, 15
        %s273 = smul.addr %s272, 8
        %s274 = scalar_lea.vmem [#allocation2], %s273
        %s275 = scalar_lea.sflag [#allocation4], %s271
        %s276 = smul.u32 4, 10
        %s277 = smul.u32 %s276, 3
        %s278 = sshll.u32 %s277, 4
        %279 = dma.done %s275, %s278
        %s280 = sadd.s32 %s23, 1
        %p281 = scmp.lt.s32.totalorder %s280, 8
        // Predicated region
        $region37: #{tpu_custom_call.1} parent=23 // pred_check
          %p282 = pneg %p281
        $region38: #{tpu_custom_call.1} parent=23 // pred_check_branch
          %284 = sbr.rel (%p282) target = $region40
        $region39: #{tpu_custom_call.1} parent=23 // pred_region
          #allocation20 [shape = 'u32[9]{0}', space=smem, size = 0x24, scoped, tag = 'DMA stride descriptor']
          %s285 = sadd.s32 %s23, 3
          %s286 = sand.u32 %s285, 3
          %s287 = smul.u32 %s285, 30
          %s288 = smul.u32 %s22, 300
          %s289 = sadd.s32 %s287, %s288
          %s290 = smul.addr %s289, 64
          %s291 = scalar_lea.hbm %s0, %s290
          %s292 = smul.u32 %s286, 15
          %s293 = smul.addr %s292, 8
          %s294 = scalar_lea.vmem [#allocation2], %s293
          %s295 = scalar_lea.sflag [#allocation4], %s286
          %s297 = sshll.u32 1, 14
          %s298 = sxor.u32 4294967295, %s297
          %s300 = sld [smem:[#allocation0]]
          %s301 = sadd.s32 2, %s300
          %s303 = sshll.u32 7, 26
          %s304 = sxor.u32 4294967295, %s303
          %s305 = sand.u32 0, %s304
          %s306 = sshll.u32 %s301, 26
          %s307 = sor.u32 %s305, %s306
          %s308 = sshll.u32 %s294, 4
          %s309 = int_to_ptr.vmem [resolvable:$true] %s308
          %312 = sst [smem:[#allocation20]] 384
          %s313 = scalar_lea.smem [#allocation20], 1
          %314 = sst [smem:[%s313]] 384
          %s315 = scalar_lea.smem [#allocation20], 2
          %316 = sst [smem:[%s315]] 3
          %s317 = scalar_lea.smem [#allocation20], 3
          %318 = sst [smem:[%s317]] 64
          %s319 = scalar_lea.smem [#allocation20], 4
          %320 = sst [smem:[%s319]] 128
          %s321 = scalar_lea.smem [#allocation20], 5
          %322 = sst [smem:[%s321]] 2
          %s323 = scalar_lea.smem [#allocation20], 6
          %324 = sst [smem:[%s323]] 192
          %s325 = scalar_lea.smem [#allocation20], 7
          %326 = sst [smem:[%s325]] 64
          %s327 = scalar_lea.smem [#allocation20], 8
          %328 = sst [smem:[%s327]] 4
          %330 = dma.general %s291, 1920, %s309, %s295, [#allocation19], [#allocation20], %s307, 0
        $region40: #{tpu_custom_call.1} parent=23 // pred_fallthru
          _
        %v331 = vld [vmem:[#allocation5] sm:$0x1]
        %s332 = sand.u32 %s23, 3
        %s333 = smul.u32 %s332, 15
        %s334 = smul.addr %s333, 8
        %s335 = scalar_lea.vmem [#allocation2], %s334
        %v336 = vld [vmem:[%s335] sm:$0xff]
        %v337 = vld [vmem:[%s335 + $0x8] sm:$0xff]
        %v338 = vld [vmem:[%s335 + $0x18] sm:$0xff]
        %v339 = vld [vmem:[%s335 + $0x20] sm:$0xff]
        %v340 = vld [vmem:[%s335 + $0x30] sm:$0xff]
        %v341 = vld [vmem:[%s335 + $0x38] sm:$0xff]
        %v342 = vld [vmem:[%s335 + $0x48] sm:$0xff]
        %v343 = vld [vmem:[%s335 + $0x50] sm:$0xff]
        %v344 = vld [vmem:[#allocation3] sm:$0xff]
        %v345 = vld [vmem:[#allocation3 + $0x8] sm:$0xff]
        %v346 = vld [vmem:[#allocation3 + $0x10] sm:$0xff]
        %v347 = vld [vmem:[#allocation3 + $0x18] sm:$0xff]
        %v348 = vld [vmem:[#allocation3 + $0x20] sm:$0xff]
        %v349 = vld [vmem:[#allocation3 + $0x28] sm:$0xff]
        %v350 = vld [vmem:[#allocation3 + $0x30] sm:$0xff]
        %v351 = vld [vmem:[#allocation3 + $0x38] sm:$0xff]
        %v352 = vld [vmem:[#allocation3 + $0x40] sm:$0xff]
        %v353 = vld [vmem:[#allocation3 + $0x48] sm:$0xff]
        %v354 = vld [vmem:[#allocation3 + $0x50] sm:$0xff]
        %v355 = vld [vmem:[#allocation3 + $0x58] sm:$0xff]
        %v356 = vld [vmem:[#allocation3 + $0x60] sm:$0xff]
        %v357 = vld [vmem:[#allocation3 + $0x68] sm:$0xff]
        %v358 = vld [vmem:[#allocation3 + $0x70] sm:$0xff]
        %v359 = vld [vmem:[#allocation3 + $0x78] sm:$0xff]
        %v361 = vlaneseq
        %v362 = vshrl.u32 %v361, 7
        %v363 = vsub.s32 0, %v362
        %v364 = vrot.slane %v331, %v363
        %366 = vmatprep.subr.bf16.mxu0 0
        %367 = vmatpush1.bf16.msra.mxu0 %v344
        %368 = vmatprep.subr.bf16.mxu0 0
        %369 = vmatpush1.bf16.msra.mxu0 %v345
        %370 = vmatprep.subr.bf16.mxu0 0
        %371 = vmatpush1.bf16.msra.mxu0 %v346
        %372 = vmatprep.subr.bf16.mxu0 0
        %373 = vmatpush1.bf16.msra.mxu0 %v347
        %374 = vmatprep.subr.bf16.mxu0 0
        %375 = vmatpush1.bf16.msra.mxu0 %v348
        %376 = vmatprep.subr.bf16.mxu0 0
        %377 = vmatpush1.bf16.msra.mxu0 %v349
        %378 = vmatprep.subr.bf16.mxu0 0
        %379 = vmatpush1.bf16.msra.mxu0 %v350
        %380 = vmatprep.subr.bf16.mxu0 0
        %381 = vmatpush1.bf16.msra.mxu0 %v351
        %382 = vmatprep.subr.bf16.mxu0 0
        %383 = vmatpush1.bf16.msra.mxu0 %v352
        %384 = vmatprep.subr.bf16.mxu0 0
        %385 = vmatpush1.bf16.msra.mxu0 %v353
        %386 = vmatprep.subr.bf16.mxu0 0
        %387 = vmatpush1.bf16.msra.mxu0 %v354
        %388 = vmatprep.subr.bf16.mxu0 0
        %389 = vmatpush1.bf16.msra.mxu0 %v355
        %390 = vmatprep.subr.bf16.mxu0 0
        %391 = vmatpush1.bf16.msra.mxu0 %v356
        %392 = vmatprep.subr.bf16.mxu0 0
        %393 = vmatpush1.bf16.msra.mxu0 %v357
        %394 = vmatprep.subr.bf16.mxu0 0
        %395 = vmatpush1.bf16.msra.mxu0 %v358
        %396 = vmatprep.subr.bf16.mxu0 0
        %397 = vmatpush1.bf16.msra.mxu0 %v359
        %398 = vmatprep.mubr.bf16.mxu0 %v337
        %399 = vmatmul.mubr.bf16.gmra.mrb[0].mxu0 %v336
        %v400 = vpop.f32.mrb[0].mxu0
        %v401 = vadd.f32 %v364, %v400
        %v402 = vpop.f32.mrb[0].mxu0
        %v403 = vpop.f32.mrb[0].mxu0
        %v404 = vadd.f32 %v364, %v403
        %v405 = vpop.f32.mrb[0].mxu0
        %406 = vmatprep.mubr.bf16.mxu0 %v339
        %407 = vmatmul.mubr.bf16.gmra.mrb[0].mxu0 %v338
        %v408 = vpop.f32.mrb[0].mxu0
        %v409 = vadd.f32 %v364, %v408
        %v410 = vpop.f32.mrb[0].mxu0
        %v411 = vpop.f32.mrb[0].mxu0
        %v412 = vadd.f32 %v364, %v411
        %v413 = vpop.f32.mrb[0].mxu0
        %414 = vmatprep.mubr.bf16.mxu0 %v341
        %415 = vmatmul.mubr.bf16.gmra.mrb[0].mxu0 %v340
        %v416 = vpop.f32.mrb[0].mxu0
        %v417 = vadd.f32 %v364, %v416
        %v418 = vpop.f32.mrb[0].mxu0
        %v419 = vpop.f32.mrb[0].mxu0
        %v420 = vadd.f32 %v364, %v419
        %v421 = vpop.f32.mrb[0].mxu0
        %422 = vmatprep.mubr.bf16.mxu0 %v343
        %423 = vmatmul.mubr.bf16.gmra.mrb[0].mxu0 %v342
        %v424 = vpop.f32.mrb[0].mxu0
        %v425 = vadd.f32 %v364, %v424
        %v426 = vpop.f32.mrb[0].mxu0
        %v427 = vpop.f32.mrb[0].mxu0
        %v428 = vadd.f32 %v364, %v427
        %v429 = vpop.f32.mrb[0].mxu0
        %430 = vdwg.mxu0
        %v431 = vld [vmem:[%s335] sm:$0xf0]
        %v432 = vld [vmem:[%s335 + $0x8] sm:$0xf0]
        %v433 = vld [vmem:[%s335 + $0x18] sm:$0xff]
        %v434 = vld [vmem:[%s335 + $0x20] sm:$0xff]
        %v435 = vld [vmem:[%s335 + $0x30] sm:$0xff]
        %v436 = vld [vmem:[%s335 + $0x38] sm:$0xff]
        %v437 = vld [vmem:[%s335 + $0x48] sm:$0xff]
        %v438 = vld [vmem:[%s335 + $0x50] sm:$0xff]
        %v439 = vld [vmem:[%s335 + $0x60] sm:$0xf]
        %v440 = vld [vmem:[%s335 + $0x68] sm:$0xf]
        %s441 = scalar_lea.vmem [#allocation3], 128
        %v442 = vld [vmem:[%s441] sm:$0xff]
        %v443 = vld [vmem:[%s441 + $0x8] sm:$0xff]
        %v444 = vld [vmem:[%s441 + $0x10] sm:$0xff]
        %v445 = vld [vmem:[%s441 + $0x18] sm:$0xff]
        %v446 = vld [vmem:[%s441 + $0x20] sm:$0xff]
        %v447 = vld [vmem:[%s441 + $0x28] sm:$0xff]
        %v448 = vld [vmem:[%s441 + $0x30] sm:$0xff]
        %v449 = vld [vmem:[%s441 + $0x38] sm:$0xff]
        %v450 = vld [vmem:[%s441 + $0x40] sm:$0xff]
        %v451 = vld [vmem:[%s441 + $0x48] sm:$0xff]
        %v452 = vld [vmem:[%s441 + $0x50] sm:$0xff]
        %v453 = vld [vmem:[%s441 + $0x58] sm:$0xff]
        %v454 = vld [vmem:[%s441 + $0x60] sm:$0xff]
        %v455 = vld [vmem:[%s441 + $0x68] sm:$0xff]
        %v456 = vld [vmem:[%s441 + $0x70] sm:$0xff]
        %v457 = vld [vmem:[%s441 + $0x78] sm:$0xff]
        %vm468 = vcmask 1043456
        %v469 = vrot.slane %v431, 4
        %v470 = vrot.slane %v433, 4
        %v471 = vsel %vm468, %v469, %v470
        %v472 = vrot.slane %v432, 4
        %v473 = vrot.slane %v434, 4
        %v474 = vsel %vm468, %v472, %v473
        %v475 = vrot.slane %v435, 4
        %v476 = vsel %vm468, %v470, %v475
        %v477 = vrot.slane %v436, 4
        %v478 = vsel %vm468, %v473, %v477
        %v479 = vrot.slane %v437, 4
        %v480 = vsel %vm468, %v475, %v479
        %v481 = vrot.slane %v438, 4
        %v482 = vsel %vm468, %v477, %v481
        %v483 = vrot.slane %v439, 4
        %v484 = vsel %vm468, %v479, %v483
        %v485 = vrot.slane %v440, 4
        %v486 = vsel %vm468, %v481, %v485
        %495 = vmatprep.subr.bf16.mxu0 0
        %496 = vmatpush1.bf16.msra.mxu0 %v442
        %497 = vmatprep.subr.bf16.mxu0 0
        %498 = vmatpush1.bf16.msra.mxu0 %v443
        %499 = vmatprep.subr.bf16.mxu0 0
        %500 = vmatpush1.bf16.msra.mxu0 %v444
        %501 = vmatprep.subr.bf16.mxu0 0
        %502 = vmatpush1.bf16.msra.mxu0 %v445
        %503 = vmatprep.subr.bf16.mxu0 0
        %504 = vmatpush1.bf16.msra.mxu0 %v446
        %505 = vmatprep.subr.bf16.mxu0 0
        %506 = vmatpush1.bf16.msra.mxu0 %v447
        %507 = vmatprep.subr.bf16.mxu0 0
        %508 = vmatpush1.bf16.msra.mxu0 %v448
        %509 = vmatprep.subr.bf16.mxu0 0
        %510 = vmatpush1.bf16.msra.mxu0 %v449
        %511 = vmatprep.subr.bf16.mxu0 0
        %512 = vmatpush1.bf16.msra.mxu0 %v450
        %513 = vmatprep.subr.bf16.mxu0 0
        %514 = vmatpush1.bf16.msra.mxu0 %v451
        %515 = vmatprep.subr.bf16.mxu0 0
        %516 = vmatpush1.bf16.msra.mxu0 %v452
        %517 = vmatprep.subr.bf16.mxu0 0
        %518 = vmatpush1.bf16.msra.mxu0 %v453
        %519 = vmatprep.subr.bf16.mxu0 0
        %520 = vmatpush1.bf16.msra.mxu0 %v454
        %521 = vmatprep.subr.bf16.mxu0 0
        %522 = vmatpush1.bf16.msra.mxu0 %v455
        %523 = vmatprep.subr.bf16.mxu0 0
        %524 = vmatpush1.bf16.msra.mxu0 %v456
        %525 = vmatprep.subr.bf16.mxu0 0
        %526 = vmatpush1.bf16.msra.mxu0 %v457
        %527 = vmatprep.mubr.bf16.mxu0 %v474
        %528 = vmatmul.mubr.bf16.gmra.mrb[0].mxu0 %v471
        %v529 = vpop.f32.mrb[0].mxu0
        %v530 = vadd.f32 0.0, %v529
        %v531 = vpop.f32.mrb[0].mxu0
        %v532 = vpop.f32.mrb[0].mxu0
        %v533 = vadd.f32 0.0, %v532
        %v534 = vpop.f32.mrb[0].mxu0
        %535 = vmatprep.mubr.bf16.mxu0 %v478
        %536 = vmatmul.mubr.bf16.gmra.mrb[0].mxu0 %v476
        %v537 = vpop.f32.mrb[0].mxu0
        %v538 = vadd.f32 0.0, %v537
        %v539 = vpop.f32.mrb[0].mxu0
        %v540 = vpop.f32.mrb[0].mxu0
        %v541 = vadd.f32 0.0, %v540
        %v542 = vpop.f32.mrb[0].mxu0
        %543 = vmatprep.mubr.bf16.mxu0 %v482
        %544 = vmatmul.mubr.bf16.gmra.mrb[0].mxu0 %v480
        %v545 = vpop.f32.mrb[0].mxu0
        %v546 = vadd.f32 0.0, %v545
        %v547 = vpop.f32.mrb[0].mxu0
        %v548 = vpop.f32.mrb[0].mxu0
        %v549 = vadd.f32 0.0, %v548
        %v550 = vpop.f32.mrb[0].mxu0
        %551 = vmatprep.mubr.bf16.mxu0 %v486
        %552 = vmatmul.mubr.bf16.gmra.mrb[0].mxu0 %v484
        %v553 = vpop.f32.mrb[0].mxu0
        %v554 = vadd.f32 0.0, %v553
        %v555 = vpop.f32.mrb[0].mxu0
        %v556 = vpop.f32.mrb[0].mxu0
        %v557 = vadd.f32 0.0, %v556
        %v558 = vpop.f32.mrb[0].mxu0
        %559 = vdwg.mxu0
        %v560 = vadd.f32 %v401, %v530
        %v561 = vadd.f32 %v404, %v533
        %v562 = vadd.f32 %v409, %v538
        %v563 = vadd.f32 %v412, %v541
        %v564 = vadd.f32 %v417, %v546
        %v565 = vadd.f32 %v420, %v549
        %v566 = vadd.f32 %v425, %v554
        %v567 = vadd.f32 %v428, %v557
        %s568 = sand.u32 %s280, 3
        %s569 = smul.u32 %s568, 15
        %s570 = smul.addr %s569, 8
        %s571 = scalar_lea.vmem [#allocation2], %s570
        %v572 = vld [vmem:[%s571] sm:$0xff]
        %v573 = vld [vmem:[%s571 + $0x8] sm:$0xff]
        %v574 = vld [vmem:[%s571 + $0x18] sm:$0xff]
        %v575 = vld [vmem:[%s571 + $0x20] sm:$0xff]
        %v576 = vld [vmem:[%s571 + $0x30] sm:$0xff]
        %v577 = vld [vmem:[%s571 + $0x38] sm:$0xff]
        %v578 = vld [vmem:[%s571 + $0x48] sm:$0xff]
        %v579 = vld [vmem:[%s571 + $0x50] sm:$0xff]
        %s580 = scalar_lea.vmem [#allocation3], 256
        %v581 = vld [vmem:[%s580] sm:$0xff]
        %v582 = vld [vmem:[%s580 + $0x8] sm:$0xff]
        %v583 = vld [vmem:[%s580 + $0x10] sm:$0xff]
        %v584 = vld [vmem:[%s580 + $0x18] sm:$0xff]
        %v585 = vld [vmem:[%s580 + $0x20] sm:$0xff]
        %v586 = vld [vmem:[%s580 + $0x28] sm:$0xff]
        %v587 = vld [vmem:[%s580 + $0x30] sm:$0xff]
        %v588 = vld [vmem:[%s580 + $0x38] sm:$0xff]
        %v589 = vld [vmem:[%s580 + $0x40] sm:$0xff]
        %v590 = vld [vmem:[%s580 + $0x48] sm:$0xff]
        %v591 = vld [vmem:[%s580 + $0x50] sm:$0xff]
        %v592 = vld [vmem:[%s580 + $0x58] sm:$0xff]
        %v593 = vld [vmem:[%s580 + $0x60] sm:$0xff]
        %v594 = vld [vmem:[%s580 + $0x68] sm:$0xff]
        %v595 = vld [vmem:[%s580 + $0x70] sm:$0xff]
        %v596 = vld [vmem:[%s580 + $0x78] sm:$0xff]
        %597 = vmatprep.subr.bf16.mxu0 0
        %598 = vmatpush1.bf16.msra.mxu0 %v581
        %599 = vmatprep.subr.bf16.mxu0 0
        %600 = vmatpush1.bf16.msra.mxu0 %v582
        %601 = vmatprep.subr.bf16.mxu0 0
        %602 = vmatpush1.bf16.msra.mxu0 %v583
        %603 = vmatprep.subr.bf16.mxu0 0
        %604 = vmatpush1.bf16.msra.mxu0 %v584
        %605 = vmatprep.subr.bf16.mxu0 0
        %606 = vmatpush1.bf16.msra.mxu0 %v585
        %607 = vmatprep.subr.bf16.mxu0 0
        %608 = vmatpush1.bf16.msra.mxu0 %v586
        %609 = vmatprep.subr.bf16.mxu0 0
        %610 = vmatpush1.bf16.msra.mxu0 %v587
        %611 = vmatprep.subr.bf16.mxu0 0
        %612 = vmatpush1.bf16.msra.mxu0 %v588
        %613 = vmatprep.subr.bf16.mxu0 0
        %614 = vmatpush1.bf16.msra.mxu0 %v589
        %615 = vmatprep.subr.bf16.mxu0 0
        %616 = vmatpush1.bf16.msra.mxu0 %v590
        %617 = vmatprep.subr.bf16.mxu0 0
        %618 = vmatpush1.bf16.msra.mxu0 %v591
        %619 = vmatprep.subr.bf16.mxu0 0
        %620 = vmatpush1.bf16.msra.mxu0 %v592
        %621 = vmatprep.subr.bf16.mxu0 0
        %622 = vmatpush1.bf16.msra.mxu0 %v593
        %623 = vmatprep.subr.bf16.mxu0 0
        %624 = vmatpush1.bf16.msra.mxu0 %v594
        %625 = vmatprep.subr.bf16.mxu0 0
        %626 = vmatpush1.bf16.msra.mxu0 %v595
        %627 = vmatprep.subr.bf16.mxu0 0
        %628 = vmatpush1.bf16.msra.mxu0 %v596
        %629 = vmatprep.mubr.bf16.mxu0 %v573
        %630 = vmatmul.mubr.bf16.gmra.mrb[0].mxu0 %v572
        %v631 = vpop.f32.mrb[0].mxu0
        %v632 = vadd.f32 0.0, %v631
        %v633 = vpop.f32.mrb[0].mxu0
        %v634 = vpop.f32.mrb[0].mxu0
        %v635 = vadd.f32 0.0, %v634
        %v636 = vpop.f32.mrb[0].mxu0
        %637 = vmatprep.mubr.bf16.mxu0 %v575
        %638 = vmatmul.mubr.bf16.gmra.mrb[0].mxu0 %v574
        %v639 = vpop.f32.mrb[0].mxu0
        %v640 = vadd.f32 0.0, %v639
        %v641 = vpop.f32.mrb[0].mxu0
        %v642 = vpop.f32.mrb[0].mxu0
        %v643 = vadd.f32 0.0, %v642
        %v644 = vpop.f32.mrb[0].mxu0
        %645 = vmatprep.mubr.bf16.mxu0 %v577
        %646 = vmatmul.mubr.bf16.gmra.mrb[0].mxu0 %v576
        %v647 = vpop.f32.mrb[0].mxu0
        %v648 = vadd.f32 0.0, %v647
        %v649 = vpop.f32.mrb[0].mxu0
        %v650 = vpop.f32.mrb[0].mxu0
        %v651 = vadd.f32 0.0, %v650
        %v652 = vpop.f32.mrb[0].mxu0
        %653 = vmatprep.mubr.bf16.mxu0 %v579
        %654 = vmatmul.mubr.bf16.gmra.mrb[0].mxu0 %v578
        %v655 = vpop.f32.mrb[0].mxu0
        %v656 = vadd.f32 0.0, %v655
        %v657 = vpop.f32.mrb[0].mxu0
        %v658 = vpop.f32.mrb[0].mxu0
        %v659 = vadd.f32 0.0, %v658
        %v660 = vpop.f32.mrb[0].mxu0
        %661 = vdwg.mxu0
        %v662 = vadd.f32 %v560, %v632
        %v663 = vadd.f32 %v561, %v635
        %v664 = vadd.f32 %v562, %v640
        %v665 = vadd.f32 %v563, %v643
        %v666 = vadd.f32 %v564, %v648
        %v667 = vadd.f32 %v565, %v651
        %v668 = vadd.f32 %v566, %v656
        %v669 = vadd.f32 %v567, %v659
        %v670 = vld [vmem:[%s571] sm:$0xf0]
        %v671 = vld [vmem:[%s571 + $0x8] sm:$0xf0]
        %v672 = vld [vmem:[%s571 + $0x18] sm:$0xff]
        %v673 = vld [vmem:[%s571 + $0x20] sm:$0xff]
        %v674 = vld [vmem:[%s571 + $0x30] sm:$0xff]
        %v675 = vld [vmem:[%s571 + $0x38] sm:$0xff]
        %v676 = vld [vmem:[%s571 + $0x48] sm:$0xff]
        %v677 = vld [vmem:[%s571 + $0x50] sm:$0xff]
        %v678 = vld [vmem:[%s571 + $0x60] sm:$0xf]
        %v679 = vld [vmem:[%s571 + $0x68] sm:$0xf]
        %s680 = scalar_lea.vmem [#allocation3], 384
        %v681 = vld [vmem:[%s680] sm:$0xff]
        %v682 = vld [vmem:[%s680 + $0x8] sm:$0xff]
        %v683 = vld [vmem:[%s680 + $0x10] sm:$0xff]
        %v684 = vld [vmem:[%s680 + $0x18] sm:$0xff]
        %v685 = vld [vmem:[%s680 + $0x20] sm:$0xff]
        %v686 = vld [vmem:[%s680 + $0x28] sm:$0xff]
        %v687 = vld [vmem:[%s680 + $0x30] sm:$0xff]
        %v688 = vld [vmem:[%s680 + $0x38] sm:$0xff]
        %v689 = vld [vmem:[%s680 + $0x40] sm:$0xff]
        %v690 = vld [vmem:[%s680 + $0x48] sm:$0xff]
        %v691 = vld [vmem:[%s680 + $0x50] sm:$0xff]
        %v692 = vld [vmem:[%s680 + $0x58] sm:$0xff]
        %v693 = vld [vmem:[%s680 + $0x60] sm:$0xff]
        %v694 = vld [vmem:[%s680 + $0x68] sm:$0xff]
        %v695 = vld [vmem:[%s680 + $0x70] sm:$0xff]
        %v696 = vld [vmem:[%s680 + $0x78] sm:$0xff]
        %v707 = vrot.slane %v670, 4
        %v708 = vrot.slane %v672, 4
        %v709 = vsel %vm468, %v707, %v708
        %v710 = vrot.slane %v671, 4
        %v711 = vrot.slane %v673, 4
        %v712 = vsel %vm468, %v710, %v711
        %v713 = vrot.slane %v674, 4
        %v714 = vsel %vm468, %v708, %v713
        %v715 = vrot.slane %v675, 4
        %v716 = vsel %vm468, %v711, %v715
        %v717 = vrot.slane %v676, 4
        %v718 = vsel %vm468, %v713, %v717
        %v719 = vrot.slane %v677, 4
        %v720 = vsel %vm468, %v715, %v719
        %v721 = vrot.slane %v678, 4
        %v722 = vsel %vm468, %v717, %v721
        %v723 = vrot.slane %v679, 4
        %v724 = vsel %vm468, %v719, %v723
        %733 = vmatprep.subr.bf16.mxu0 0
        %734 = vmatpush1.bf16.msra.mxu0 %v681
        %735 = vmatprep.subr.bf16.mxu0 0
        %736 = vmatpush1.bf16.msra.mxu0 %v682
        %737 = vmatprep.subr.bf16.mxu0 0
        %738 = vmatpush1.bf16.msra.mxu0 %v683
        %739 = vmatprep.subr.bf16.mxu0 0
        %740 = vmatpush1.bf16.msra.mxu0 %v684
        %741 = vmatprep.subr.bf16.mxu0 0
        %742 = vmatpush1.bf16.msra.mxu0 %v685
        %743 = vmatprep.subr.bf16.mxu0 0
        %744 = vmatpush1.bf16.msra.mxu0 %v686
        %745 = vmatprep.subr.bf16.mxu0 0
        %746 = vmatpush1.bf16.msra.mxu0 %v687
        %747 = vmatprep.subr.bf16.mxu0 0
        %748 = vmatpush1.bf16.msra.mxu0 %v688
        %749 = vmatprep.subr.bf16.mxu0 0
        %750 = vmatpush1.bf16.msra.mxu0 %v689
        %751 = vmatprep.subr.bf16.mxu0 0
        %752 = vmatpush1.bf16.msra.mxu0 %v690
        %753 = vmatprep.subr.bf16.mxu0 0
        %754 = vmatpush1.bf16.msra.mxu0 %v691
        %755 = vmatprep.subr.bf16.mxu0 0
        %756 = vmatpush1.bf16.msra.mxu0 %v692
        %757 = vmatprep.subr.bf16.mxu0 0
        %758 = vmatpush1.bf16.msra.mxu0 %v693
        %759 = vmatprep.subr.bf16.mxu0 0
        %760 = vmatpush1.bf16.msra.mxu0 %v694
        %761 = vmatprep.subr.bf16.mxu0 0
        %762 = vmatpush1.bf16.msra.mxu0 %v695
        %763 = vmatprep.subr.bf16.mxu0 0
        %764 = vmatpush1.bf16.msra.mxu0 %v696
        %765 = vmatprep.mubr.bf16.mxu0 %v712
        %766 = vmatmul.mubr.bf16.gmra.mrb[0].mxu0 %v709
        %v767 = vpop.f32.mrb[0].mxu0
        %v768 = vadd.f32 0.0, %v767
        %v769 = vpop.f32.mrb[0].mxu0
        %v770 = vpop.f32.mrb[0].mxu0
        %v771 = vadd.f32 0.0, %v770
        %v772 = vpop.f32.mrb[0].mxu0
        %773 = vmatprep.mubr.bf16.mxu0 %v716
        %774 = vmatmul.mubr.bf16.gmra.mrb[0].mxu0 %v714
        %v775 = vpop.f32.mrb[0].mxu0
        %v776 = vadd.f32 0.0, %v775
        %v777 = vpop.f32.mrb[0].mxu0
        %v778 = vpop.f32.mrb[0].mxu0
        %v779 = vadd.f32 0.0, %v778
        %v780 = vpop.f32.mrb[0].mxu0
        %781 = vmatprep.mubr.bf16.mxu0 %v720
        %782 = vmatmul.mubr.bf16.gmra.mrb[0].mxu0 %v718
        %v783 = vpop.f32.mrb[0].mxu0
        %v784 = vadd.f32 0.0, %v783
        %v785 = vpop.f32.mrb[0].mxu0
        %v786 = vpop.f32.mrb[0].mxu0
        %v787 = vadd.f32 0.0, %v786
        %v788 = vpop.f32.mrb[0].mxu0
        %789 = vmatprep.mubr.bf16.mxu0 %v724
        %790 = vmatmul.mubr.bf16.gmra.mrb[0].mxu0 %v722
        %v791 = vpop.f32.mrb[0].mxu0
        %v792 = vadd.f32 0.0, %v791
        %v793 = vpop.f32.mrb[0].mxu0
        %v794 = vpop.f32.mrb[0].mxu0
        %v795 = vadd.f32 0.0, %v794
        %v796 = vpop.f32.mrb[0].mxu0
        %797 = vdwg.mxu0
        %v798 = vadd.f32 %v662, %v768
        %v799 = vadd.f32 %v663, %v771
        %v800 = vadd.f32 %v664, %v776
        %v801 = vadd.f32 %v665, %v779
        %v802 = vadd.f32 %v666, %v784
        %v803 = vadd.f32 %v667, %v787
        %v804 = vadd.f32 %v668, %v792
        %v805 = vadd.f32 %v669, %v795
        %v806 = vpack.c.bf16 %v799, %v798
        %v807 = vpack.c.bf16 %v801, %v800
        %v808 = vpack.c.bf16 %v803, %v802
        %v809 = vpack.c.bf16 %v805, %v804
        %v814 = vunpack.c.l.b16 %v806
        %v815 = vunpack.c.h.b16 %v806
        %v816 = vunpack.c.l.b16 %v807
        %v817 = vunpack.c.h.b16 %v807
        %v818 = vunpack.c.l.b16 %v808
        %v819 = vunpack.c.h.b16 %v808
        %v820 = vunpack.c.l.b16 %v809
        %v821 = vunpack.c.h.b16 %v809
        %v822 = vpack.c.b16 %v814, %v814
        %v823 = vpack.c.b16 %v815, %v815
        %v824 = vpack.c.b16 %v816, %v816
        %v825 = vpack.c.b16 %v817, %v817
        %v826 = vpack.c.b16 %v818, %v818
        %v827 = vpack.c.b16 %v819, %v819
        %v828 = vpack.c.b16 %v820, %v820
        %v829 = vpack.c.b16 %v821, %v821
        %838 = vst [vmem:[%s123] sm:$0xf] %v822
        %839 = vst [vmem:[%s123 + $0x4] sm:$0xf] %v823
        %840 = vst [vmem:[%s123 + $0x8] sm:$0xf] %v824
        %841 = vst [vmem:[%s123 + $0xc] sm:$0xf] %v825
        %842 = vst [vmem:[%s123 + $0x10] sm:$0xf] %v826
        %843 = vst [vmem:[%s123 + $0x14] sm:$0xf] %v827
        %844 = vst [vmem:[%s123 + $0x18] sm:$0xf] %v828
        %845 = vst [vmem:[%s123 + $0x1c] sm:$0xf] %v829
        %v846 = vld [vmem:[%s335 + $0x8] sm:$0xff]
        %v847 = vld [vmem:[%s335 + $0x10] sm:$0xff]
        %v848 = vld [vmem:[%s335 + $0x20] sm:$0xff]
        %v849 = vld [vmem:[%s335 + $0x28] sm:$0xff]
        %v850 = vld [vmem:[%s335 + $0x38] sm:$0xff]
        %v851 = vld [vmem:[%s335 + $0x40] sm:$0xff]
        %v852 = vld [vmem:[%s335 + $0x50] sm:$0xff]
        %v853 = vld [vmem:[%s335 + $0x58] sm:$0xff]
        %s854 = scalar_lea.vmem [#allocation3], 512
        %v855 = vld [vmem:[%s854] sm:$0xff]
        %v856 = vld [vmem:[%s854 + $0x8] sm:$0xff]
        %v857 = vld [vmem:[%s854 + $0x10] sm:$0xff]
        %v858 = vld [vmem:[%s854 + $0x18] sm:$0xff]
        %v859 = vld [vmem:[%s854 + $0x20] sm:$0xff]
        %v860 = vld [vmem:[%s854 + $0x28] sm:$0xff]
        %v861 = vld [vmem:[%s854 + $0x30] sm:$0xff]
        %v862 = vld [vmem:[%s854 + $0x38] sm:$0xff]
        %v863 = vld [vmem:[%s854 + $0x40] sm:$0xff]
        %v864 = vld [vmem:[%s854 + $0x48] sm:$0xff]
        %v865 = vld [vmem:[%s854 + $0x50] sm:$0xff]
        %v866 = vld [vmem:[%s854 + $0x58] sm:$0xff]
        %v867 = vld [vmem:[%s854 + $0x60] sm:$0xff]
        %v868 = vld [vmem:[%s854 + $0x68] sm:$0xff]
        %v869 = vld [vmem:[%s854 + $0x70] sm:$0xff]
        %v870 = vld [vmem:[%s854 + $0x78] sm:$0xff]
        %871 = vmatprep.subr.bf16.mxu0 0
        %872 = vmatpush1.bf16.msra.mxu0 %v855
        %873 = vmatprep.subr.bf16.mxu0 0
        %874 = vmatpush1.bf16.msra.mxu0 %v856
        %875 = vmatprep.subr.bf16.mxu0 0
        %876 = vmatpush1.bf16.msra.mxu0 %v857
        %877 = vmatprep.subr.bf16.mxu0 0
        %878 = vmatpush1.bf16.msra.mxu0 %v858
        %879 = vmatprep.subr.bf16.mxu0 0
        %880 = vmatpush1.bf16.msra.mxu0 %v859
        %881 = vmatprep.subr.bf16.mxu0 0
        %882 = vmatpush1.bf16.msra.mxu0 %v860
        %883 = vmatprep.subr.bf16.mxu0 0
        %884 = vmatpush1.bf16.msra.mxu0 %v861
        %885 = vmatprep.subr.bf16.mxu0 0
        %886 = vmatpush1.bf16.msra.mxu0 %v862
        %887 = vmatprep.subr.bf16.mxu0 0
        %888 = vmatpush1.bf16.msra.mxu0 %v863
        %889 = vmatprep.subr.bf16.mxu0 0
        %890 = vmatpush1.bf16.msra.mxu0 %v864
        %891 = vmatprep.subr.bf16.mxu0 0
        %892 = vmatpush1.bf16.msra.mxu0 %v865
        %893 = vmatprep.subr.bf16.mxu0 0
        %894 = vmatpush1.bf16.msra.mxu0 %v866
        %895 = vmatprep.subr.bf16.mxu0 0
        %896 = vmatpush1.bf16.msra.mxu0 %v867
        %897 = vmatprep.subr.bf16.mxu0 0
        %898 = vmatpush1.bf16.msra.mxu0 %v868
        %899 = vmatprep.subr.bf16.mxu0 0
        %900 = vmatpush1.bf16.msra.mxu0 %v869
        %901 = vmatprep.subr.bf16.mxu0 0
        %902 = vmatpush1.bf16.msra.mxu0 %v870
        %903 = vmatprep.mubr.bf16.mxu0 %v847
        %904 = vmatmul.mubr.bf16.gmra.mrb[0].mxu0 %v846
        %v905 = vpop.f32.mrb[0].mxu0
        %v906 = vadd.f32 %v364, %v905
        %v907 = vpop.f32.mrb[0].mxu0
        %v908 = vpop.f32.mrb[0].mxu0
        %v909 = vadd.f32 %v364, %v908
        %v910 = vpop.f32.mrb[0].mxu0
        %911 = vmatprep.mubr.bf16.mxu0 %v849
        %912 = vmatmul.mubr.bf16.gmra.mrb[0].mxu0 %v848
        %v913 = vpop.f32.mrb[0].mxu0
        %v914 = vadd.f32 %v364, %v913
        %v915 = vpop.f32.mrb[0].mxu0
        %v916 = vpop.f32.mrb[0].mxu0
        %v917 = vadd.f32 %v364, %v916
        %v918 = vpop.f32.mrb[0].mxu0
        %919 = vmatprep.mubr.bf16.mxu0 %v851
        %920 = vmatmul.mubr.bf16.gmra.mrb[0].mxu0 %v850
        %v921 = vpop.f32.mrb[0].mxu0
        %v922 = vadd.f32 %v364, %v921
        %v923 = vpop.f32.mrb[0].mxu0
        %v924 = vpop.f32.mrb[0].mxu0
        %v925 = vadd.f32 %v364, %v924
        %v926 = vpop.f32.mrb[0].mxu0
        %927 = vmatprep.mubr.bf16.mxu0 %v853
        %928 = vmatmul.mubr.bf16.gmra.mrb[0].mxu0 %v852
        %v929 = vpop.f32.mrb[0].mxu0
        %v930 = vadd.f32 %v364, %v929
        %v931 = vpop.f32.mrb[0].mxu0
        %v932 = vpop.f32.mrb[0].mxu0
        %v933 = vadd.f32 %v364, %v932
        %v934 = vpop.f32.mrb[0].mxu0
        %935 = vdwg.mxu0
        %v936 = vld [vmem:[%s335 + $0x8] sm:$0xf0]
        %v937 = vld [vmem:[%s335 + $0x10] sm:$0xf0]
        %v938 = vld [vmem:[%s335 + $0x20] sm:$0xff]
        %v939 = vld [vmem:[%s335 + $0x28] sm:$0xff]
        %v940 = vld [vmem:[%s335 + $0x38] sm:$0xff]
        %v941 = vld [vmem:[%s335 + $0x40] sm:$0xff]
        %v942 = vld [vmem:[%s335 + $0x50] sm:$0xff]
        %v943 = vld [vmem:[%s335 + $0x58] sm:$0xff]
        %v944 = vld [vmem:[%s335 + $0x68] sm:$0xf]
        %v945 = vld [vmem:[%s335 + $0x70] sm:$0xf]
        %s946 = scalar_lea.vmem [#allocation3], 640
        %v947 = vld [vmem:[%s946] sm:$0xff]
        %v948 = vld [vmem:[%s946 + $0x8] sm:$0xff]
        %v949 = vld [vmem:[%s946 + $0x10] sm:$0xff]
        %v950 = vld [vmem:[%s946 + $0x18] sm:$0xff]
        %v951 = vld [vmem:[%s946 + $0x20] sm:$0xff]
        %v952 = vld [vmem:[%s946 + $0x28] sm:$0xff]
        %v953 = vld [vmem:[%s946 + $0x30] sm:$0xff]
        %v954 = vld [vmem:[%s946 + $0x38] sm:$0xff]
        %v955 = vld [vmem:[%s946 + $0x40] sm:$0xff]
        %v956 = vld [vmem:[%s946 + $0x48] sm:$0xff]
        %v957 = vld [vmem:[%s946 + $0x50] sm:$0xff]
        %v958 = vld [vmem:[%s946 + $0x58] sm:$0xff]
        %v959 = vld [vmem:[%s946 + $0x60] sm:$0xff]
        %v960 = vld [vmem:[%s946 + $0x68] sm:$0xff]
        %v961 = vld [vmem:[%s946 + $0x70] sm:$0xff]
        %v962 = vld [vmem:[%s946 + $0x78] sm:$0xff]
        %v973 = vrot.slane %v936, 4
        %v974 = vrot.slane %v938, 4
        %v975 = vsel %vm468, %v973, %v974
        %v976 = vrot.slane %v937, 4
        %v977 = vrot.slane %v939, 4
        %v978 = vsel %vm468, %v976, %v977
        %v979 = vrot.slane %v940, 4
        %v980 = vsel %vm468, %v974, %v979
        %v981 = vrot.slane %v941, 4
        %v982 = vsel %vm468, %v977, %v981
        %v983 = vrot.slane %v942, 4
        %v984 = vsel %vm468, %v979, %v983
        %v985 = vrot.slane %v943, 4
        %v986 = vsel %vm468, %v981, %v985
        %v987 = vrot.slane %v944, 4
        %v988 = vsel %vm468, %v983, %v987
        %v989 = vrot.slane %v945, 4
        %v990 = vsel %vm468, %v985, %v989
        %999 = vmatprep.subr.bf16.mxu0 0
        %1000 = vmatpush1.bf16.msra.mxu0 %v947
        %1001 = vmatprep.subr.bf16.mxu0 0
        %1002 = vmatpush1.bf16.msra.mxu0 %v948
        %1003 = vmatprep.subr.bf16.mxu0 0
        %1004 = vmatpush1.bf16.msra.mxu0 %v949
        %1005 = vmatprep.subr.bf16.mxu0 0
        %1006 = vmatpush1.bf16.msra.mxu0 %v950
        %1007 = vmatprep.subr.bf16.mxu0 0
        %1008 = vmatpush1.bf16.msra.mxu0 %v951
        %1009 = vmatprep.subr.bf16.mxu0 0
        %1010 = vmatpush1.bf16.msra.mxu0 %v952
        %1011 = vmatprep.subr.bf16.mxu0 0
        %1012 = vmatpush1.bf16.msra.mxu0 %v953
        %1013 = vmatprep.subr.bf16.mxu0 0
        %1014 = vmatpush1.bf16.msra.mxu0 %v954
        %1015 = vmatprep.subr.bf16.mxu0 0
        %1016 = vmatpush1.bf16.msra.mxu0 %v955
        %1017 = vmatprep.subr.bf16.mxu0 0
        %1018 = vmatpush1.bf16.msra.mxu0 %v956
        %1019 = vmatprep.subr.bf16.mxu0 0
        %1020 = vmatpush1.bf16.msra.mxu0 %v957
        %1021 = vmatprep.subr.bf16.mxu0 0
        %1022 = vmatpush1.bf16.msra.mxu0 %v958
        %1023 = vmatprep.subr.bf16.mxu0 0
        %1024 = vmatpush1.bf16.msra.mxu0 %v959
        %1025 = vmatprep.subr.bf16.mxu0 0
        %1026 = vmatpush1.bf16.msra.mxu0 %v960
        %1027 = vmatprep.subr.bf16.mxu0 0
        %1028 = vmatpush1.bf16.msra.mxu0 %v961
        %1029 = vmatprep.subr.bf16.mxu0 0
        %1030 = vmatpush1.bf16.msra.mxu0 %v962
        %1031 = vmatprep.mubr.bf16.mxu0 %v978
        %1032 = vmatmul.mubr.bf16.gmra.mrb[0].mxu0 %v975
        %v1033 = vpop.f32.mrb[0].mxu0
        %v1034 = vadd.f32 0.0, %v1033
        %v1035 = vpop.f32.mrb[0].mxu0
        %v1036 = vpop.f32.mrb[0].mxu0
        %v1037 = vadd.f32 0.0, %v1036
        %v1038 = vpop.f32.mrb[0].mxu0
        %1039 = vmatprep.mubr.bf16.mxu0 %v982
        %1040 = vmatmul.mubr.bf16.gmra.mrb[0].mxu0 %v980
        %v1041 = vpop.f32.mrb[0].mxu0
        %v1042 = vadd.f32 0.0, %v1041
        %v1043 = vpop.f32.mrb[0].mxu0
        %v1044 = vpop.f32.mrb[0].mxu0
        %v1045 = vadd.f32 0.0, %v1044
        %v1046 = vpop.f32.mrb[0].mxu0
        %1047 = vmatprep.mubr.bf16.mxu0 %v986
        %1048 = vmatmul.mubr.bf16.gmra.mrb[0].mxu0 %v984
        %v1049 = vpop.f32.mrb[0].mxu0
        %v1050 = vadd.f32 0.0, %v1049
        %v1051 = vpop.f32.mrb[0].mxu0
        %v1052 = vpop.f32.mrb[0].mxu0
        %v1053 = vadd.f32 0.0, %v1052
        %v1054 = vpop.f32.mrb[0].mxu0
        %1055 = vmatprep.mubr.bf16.mxu0 %v990
        %1056 = vmatmul.mubr.bf16.gmra.mrb[0].mxu0 %v988
        %v1057 = vpop.f32.mrb[0].mxu0
        %v1058 = vadd.f32 0.0, %v1057
        %v1059 = vpop.f32.mrb[0].mxu0
        %v1060 = vpop.f32.mrb[0].mxu0
        %v1061 = vadd.f32 0.0, %v1060
        %v1062 = vpop.f32.mrb[0].mxu0
        %1063 = vdwg.mxu0
        %v1064 = vadd.f32 %v906, %v1034
        %v1065 = vadd.f32 %v909, %v1037
        %v1066 = vadd.f32 %v914, %v1042
        %v1067 = vadd.f32 %v917, %v1045
        %v1068 = vadd.f32 %v922, %v1050
        %v1069 = vadd.f32 %v925, %v1053
        %v1070 = vadd.f32 %v930, %v1058
        %v1071 = vadd.f32 %v933, %v1061
        %v1072 = vld [vmem:[%s571 + $0x8] sm:$0xff]
        %v1073 = vld [vmem:[%s571 + $0x10] sm:$0xff]
        %v1074 = vld [vmem:[%s571 + $0x20] sm:$0xff]
        %v1075 = vld [vmem:[%s571 + $0x28] sm:$0xff]
        %v1076 = vld [vmem:[%s571 + $0x38] sm:$0xff]
        %v1077 = vld [vmem:[%s571 + $0x40] sm:$0xff]
        %v1078 = vld [vmem:[%s571 + $0x50] sm:$0xff]
        %v1079 = vld [vmem:[%s571 + $0x58] sm:$0xff]
        %s1080 = scalar_lea.vmem [#allocation3], 768
        %v1081 = vld [vmem:[%s1080] sm:$0xff]
        %v1082 = vld [vmem:[%s1080 + $0x8] sm:$0xff]
        %v1083 = vld [vmem:[%s1080 + $0x10] sm:$0xff]
        %v1084 = vld [vmem:[%s1080 + $0x18] sm:$0xff]
        %v1085 = vld [vmem:[%s1080 + $0x20] sm:$0xff]
        %v1086 = vld [vmem:[%s1080 + $0x28] sm:$0xff]
        %v1087 = vld [vmem:[%s1080 + $0x30] sm:$0xff]
        %v1088 = vld [vmem:[%s1080 + $0x38] sm:$0xff]
        %v1089 = vld [vmem:[%s1080 + $0x40] sm:$0xff]
        %v1090 = vld [vmem:[%s1080 + $0x48] sm:$0xff]
        %v1091 = vld [vmem:[%s1080 + $0x50] sm:$0xff]
        %v1092 = vld [vmem:[%s1080 + $0x58] sm:$0xff]
        %v1093 = vld [vmem:[%s1080 + $0x60] sm:$0xff]
        %v1094 = vld [vmem:[%s1080 + $0x68] sm:$0xff]
        %v1095 = vld [vmem:[%s1080 + $0x70] sm:$0xff]
        %v1096 = vld [vmem:[%s1080 + $0x78] sm:$0xff]
        %1097 = vmatprep.subr.bf16.mxu0 0
        %1098 = vmatpush1.bf16.msra.mxu0 %v1081
        %1099 = vmatprep.subr.bf16.mxu0 0
        %1100 = vmatpush1.bf16.msra.mxu0 %v1082
        %1101 = vmatprep.subr.bf16.mxu0 0
        %1102 = vmatpush1.bf16.msra.mxu0 %v1083
        %1103 = vmatprep.subr.bf16.mxu0 0
        %1104 = vmatpush1.bf16.msra.mxu0 %v1084
        %1105 = vmatprep.subr.bf16.mxu0 0
        %1106 = vmatpush1.bf16.msra.mxu0 %v1085
        %1107 = vmatprep.subr.bf16.mxu0 0
        %1108 = vmatpush1.bf16.msra.mxu0 %v1086
        %1109 = vmatprep.subr.bf16.mxu0 0
        %1110 = vmatpush1.bf16.msra.mxu0 %v1087
        %1111 = vmatprep.subr.bf16.mxu0 0
        %1112 = vmatpush1.bf16.msra.mxu0 %v1088
        %1113 = vmatprep.subr.bf16.mxu0 0
        %1114 = vmatpush1.bf16.msra.mxu0 %v1089
        %1115 = vmatprep.subr.bf16.mxu0 0
        %1116 = vmatpush1.bf16.msra.mxu0 %v1090
        %1117 = vmatprep.subr.bf16.mxu0 0
        %1118 = vmatpush1.bf16.msra.mxu0 %v1091
        %1119 = vmatprep.subr.bf16.mxu0 0
        %1120 = vmatpush1.bf16.msra.mxu0 %v1092
        %1121 = vmatprep.subr.bf16.mxu0 0
        %1122 = vmatpush1.bf16.msra.mxu0 %v1093
        %1123 = vmatprep.subr.bf16.mxu0 0
        %1124 = vmatpush1.bf16.msra.mxu0 %v1094
        %1125 = vmatprep.subr.bf16.mxu0 0
        %1126 = vmatpush1.bf16.msra.mxu0 %v1095
        %1127 = vmatprep.subr.bf16.mxu0 0
        %1128 = vmatpush1.bf16.msra.mxu0 %v1096
        %1129 = vmatprep.mubr.bf16.mxu0 %v1073
        %1130 = vmatmul.mubr.bf16.gmra.mrb[0].mxu0 %v1072
        %v1131 = vpop.f32.mrb[0].mxu0
        %v1132 = vadd.f32 0.0, %v1131
        %v1133 = vpop.f32.mrb[0].mxu0
        %v1134 = vpop.f32.mrb[0].mxu0
        %v1135 = vadd.f32 0.0, %v1134
        %v1136 = vpop.f32.mrb[0].mxu0
        %1137 = vmatprep.mubr.bf16.mxu0 %v1075
        %1138 = vmatmul.mubr.bf16.gmra.mrb[0].mxu0 %v1074
        %v1139 = vpop.f32.mrb[0].mxu0
        %v1140 = vadd.f32 0.0, %v1139
        %v1141 = vpop.f32.mrb[0].mxu0
        %v1142 = vpop.f32.mrb[0].mxu0
        %v1143 = vadd.f32 0.0, %v1142
        %v1144 = vpop.f32.mrb[0].mxu0
        %1145 = vmatprep.mubr.bf16.mxu0 %v1077
        %1146 = vmatmul.mubr.bf16.gmra.mrb[0].mxu0 %v1076
        %v1147 = vpop.f32.mrb[0].mxu0
        %v1148 = vadd.f32 0.0, %v1147
        %v1149 = vpop.f32.mrb[0].mxu0
        %v1150 = vpop.f32.mrb[0].mxu0
        %v1151 = vadd.f32 0.0, %v1150
        %v1152 = vpop.f32.mrb[0].mxu0
        %1153 = vmatprep.mubr.bf16.mxu0 %v1079
        %1154 = vmatmul.mubr.bf16.gmra.mrb[0].mxu0 %v1078
        %v1155 = vpop.f32.mrb[0].mxu0
        %v1156 = vadd.f32 0.0, %v1155
        %v1157 = vpop.f32.mrb[0].mxu0
        %v1158 = vpop.f32.mrb[0].mxu0
        %v1159 = vadd.f32 0.0, %v1158
        %v1160 = vpop.f32.mrb[0].mxu0
        %1161 = vdwg.mxu0
        %v1162 = vadd.f32 %v1064, %v1132
        %v1163 = vadd.f32 %v1065, %v1135
        %v1164 = vadd.f32 %v1066, %v1140
        %v1165 = vadd.f32 %v1067, %v1143
        %v1166 = vadd.f32 %v1068, %v1148
        %v1167 = vadd.f32 %v1069, %v1151
        %v1168 = vadd.f32 %v1070, %v1156
        %v1169 = vadd.f32 %v1071, %v1159
        %v1170 = vld [vmem:[%s571 + $0x8] sm:$0xf0]
        %v1171 = vld [vmem:[%s571 + $0x10] sm:$0xf0]
        %v1172 = vld [vmem:[%s571 + $0x20] sm:$0xff]
        %v1173 = vld [vmem:[%s571 + $0x28] sm:$0xff]
        %v1174 = vld [vmem:[%s571 + $0x38] sm:$0xff]
        %v1175 = vld [vmem:[%s571 + $0x40] sm:$0xff]
        %v1176 = vld [vmem:[%s571 + $0x50] sm:$0xff]
        %v1177 = vld [vmem:[%s571 + $0x58] sm:$0xff]
        %v1178 = vld [vmem:[%s571 + $0x68] sm:$0xf]
        %v1179 = vld [vmem:[%s571 + $0x70] sm:$0xf]
        %s1180 = scalar_lea.vmem [#allocation3], 896
        %v1181 = vld [vmem:[%s1180] sm:$0xff]
        %v1182 = vld [vmem:[%s1180 + $0x8] sm:$0xff]
        %v1183 = vld [vmem:[%s1180 + $0x10] sm:$0xff]
        %v1184 = vld [vmem:[%s1180 + $0x18] sm:$0xff]
        %v1185 = vld [vmem:[%s1180 + $0x20] sm:$0xff]
        %v1186 = vld [vmem:[%s1180 + $0x28] sm:$0xff]
        %v1187 = vld [vmem:[%s1180 + $0x30] sm:$0xff]
        %v1188 = vld [vmem:[%s1180 + $0x38] sm:$0xff]
        %v1189 = vld [vmem:[%s1180 + $0x40] sm:$0xff]
        %v1190 = vld [vmem:[%s1180 + $0x48] sm:$0xff]
        %v1191 = vld [vmem:[%s1180 + $0x50] sm:$0xff]
        %v1192 = vld [vmem:[%s1180 + $0x58] sm:$0xff]
        %v1193 = vld [vmem:[%s1180 + $0x60] sm:$0xff]
        %v1194 = vld [vmem:[%s1180 + $0x68] sm:$0xff]
        %v1195 = vld [vmem:[%s1180 + $0x70] sm:$0xff]
        %v1196 = vld [vmem:[%s1180 + $0x78] sm:$0xff]
        %v1207 = vrot.slane %v1170, 4
        %v1208 = vrot.slane %v1172, 4
        %v1209 = vsel %vm468, %v1207, %v1208
        %v1210 = vrot.slane %v1171, 4
        %v1211 = vrot.slane %v1173, 4
        %v1212 = vsel %vm468, %v1210, %v1211
        %v1213 = vrot.slane %v1174, 4
        %v1214 = vsel %vm468, %v1208, %v1213
        %v1215 = vrot.slane %v1175, 4
        %v1216 = vsel %vm468, %v1211, %v1215
        %v1217 = vrot.slane %v1176, 4
        %v1218 = vsel %vm468, %v1213, %v1217
        %v1219 = vrot.slane %v1177, 4
        %v1220 = vsel %vm468, %v1215, %v1219
        %v1221 = vrot.slane %v1178, 4
        %v1222 = vsel %vm468, %v1217, %v1221
        %v1223 = vrot.slane %v1179, 4
        %v1224 = vsel %vm468, %v1219, %v1223
        %1233 = vmatprep.subr.bf16.mxu0 0
        %1234 = vmatpush1.bf16.msra.mxu0 %v1181
        %1235 = vmatprep.subr.bf16.mxu0 0
        %1236 = vmatpush1.bf16.msra.mxu0 %v1182
        %1237 = vmatprep.subr.bf16.mxu0 0
        %1238 = vmatpush1.bf16.msra.mxu0 %v1183
        %1239 = vmatprep.subr.bf16.mxu0 0
        %1240 = vmatpush1.bf16.msra.mxu0 %v1184
        %1241 = vmatprep.subr.bf16.mxu0 0
        %1242 = vmatpush1.bf16.msra.mxu0 %v1185
        %1243 = vmatprep.subr.bf16.mxu0 0
        %1244 = vmatpush1.bf16.msra.mxu0 %v1186
        %1245 = vmatprep.subr.bf16.mxu0 0
        %1246 = vmatpush1.bf16.msra.mxu0 %v1187
        %1247 = vmatprep.subr.bf16.mxu0 0
        %1248 = vmatpush1.bf16.msra.mxu0 %v1188
        %1249 = vmatprep.subr.bf16.mxu0 0
        %1250 = vmatpush1.bf16.msra.mxu0 %v1189
        %1251 = vmatprep.subr.bf16.mxu0 0
        %1252 = vmatpush1.bf16.msra.mxu0 %v1190
        %1253 = vmatprep.subr.bf16.mxu0 0
        %1254 = vmatpush1.bf16.msra.mxu0 %v1191
        %1255 = vmatprep.subr.bf16.mxu0 0
        %1256 = vmatpush1.bf16.msra.mxu0 %v1192
        %1257 = vmatprep.subr.bf16.mxu0 0
        %1258 = vmatpush1.bf16.msra.mxu0 %v1193
        %1259 = vmatprep.subr.bf16.mxu0 0
        %1260 = vmatpush1.bf16.msra.mxu0 %v1194
        %1261 = vmatprep.subr.bf16.mxu0 0
        %1262 = vmatpush1.bf16.msra.mxu0 %v1195
        %1263 = vmatprep.subr.bf16.mxu0 0
        %1264 = vmatpush1.bf16.msra.mxu0 %v1196
        %1265 = vmatprep.mubr.bf16.mxu0 %v1212
        %1266 = vmatmul.mubr.bf16.gmra.mrb[0].mxu0 %v1209
        %v1267 = vpop.f32.mrb[0].mxu0
        %v1268 = vadd.f32 0.0, %v1267
        %v1269 = vpop.f32.mrb[0].mxu0
        %v1270 = vpop.f32.mrb[0].mxu0
        %v1271 = vadd.f32 0.0, %v1270
        %v1272 = vpop.f32.mrb[0].mxu0
        %1273 = vmatprep.mubr.bf16.mxu0 %v1216
        %1274 = vmatmul.mubr.bf16.gmra.mrb[0].mxu0 %v1214
        %v1275 = vpop.f32.mrb[0].mxu0
        %v1276 = vadd.f32 0.0, %v1275
        %v1277 = vpop.f32.mrb[0].mxu0
        %v1278 = vpop.f32.mrb[0].mxu0
        %v1279 = vadd.f32 0.0, %v1278
        %v1280 = vpop.f32.mrb[0].mxu0
        %1281 = vmatprep.mubr.bf16.mxu0 %v1220
        %1282 = vmatmul.mubr.bf16.gmra.mrb[0].mxu0 %v1218
        %v1283 = vpop.f32.mrb[0].mxu0
        %v1284 = vadd.f32 0.0, %v1283
        %v1285 = vpop.f32.mrb[0].mxu0
        %v1286 = vpop.f32.mrb[0].mxu0
        %v1287 = vadd.f32 0.0, %v1286
        %v1288 = vpop.f32.mrb[0].mxu0
        %1289 = vmatprep.mubr.bf16.mxu0 %v1224
        %1290 = vmatmul.mubr.bf16.gmra.mrb[0].mxu0 %v1222
        %v1291 = vpop.f32.mrb[0].mxu0
        %v1292 = vadd.f32 0.0, %v1291
        %v1293 = vpop.f32.mrb[0].mxu0
        %v1294 = vpop.f32.mrb[0].mxu0
        %v1295 = vadd.f32 0.0, %v1294
        %v1296 = vpop.f32.mrb[0].mxu0
        %1297 = vdwg.mxu0
        %v1298 = vadd.f32 %v1162, %v1268
        %v1299 = vadd.f32 %v1163, %v1271
        %v1300 = vadd.f32 %v1164, %v1276
        %v1301 = vadd.f32 %v1165, %v1279
        %v1302 = vadd.f32 %v1166, %v1284
        %v1303 = vadd.f32 %v1167, %v1287
        %v1304 = vadd.f32 %v1168, %v1292
        %v1305 = vadd.f32 %v1169, %v1295
        %v1306 = vpack.c.bf16 %v1299, %v1298
        %v1307 = vpack.c.bf16 %v1301, %v1300
        %v1308 = vpack.c.bf16 %v1303, %v1302
        %v1309 = vpack.c.bf16 %v1305, %v1304
        %v1314 = vunpack.c.l.b16 %v1306
        %v1315 = vunpack.c.h.b16 %v1306
        %v1316 = vunpack.c.l.b16 %v1307
        %v1317 = vunpack.c.h.b16 %v1307
        %v1318 = vunpack.c.l.b16 %v1308
        %v1319 = vunpack.c.h.b16 %v1308
        %v1320 = vunpack.c.l.b16 %v1309
        %v1321 = vunpack.c.h.b16 %v1309
        %v1322 = vpack.c.b16 %v1314, %v1314
        %v1323 = vpack.c.b16 %v1315, %v1315
        %v1324 = vpack.c.b16 %v1316, %v1316
        %v1325 = vpack.c.b16 %v1317, %v1317
        %v1326 = vpack.c.b16 %v1318, %v1318
        %v1327 = vpack.c.b16 %v1319, %v1319
        %v1328 = vpack.c.b16 %v1320, %v1320
        %v1329 = vpack.c.b16 %v1321, %v1321
        %s1338 = scalar_lea.vmem %s123, 32 [#allocation8]
        %1339 = vst [vmem:[%s1338] sm:$0xf] %v1322
        %1340 = vst [vmem:[%s1338 + $0x4] sm:$0xf] %v1323
        %1341 = vst [vmem:[%s1338 + $0x8] sm:$0xf] %v1324
        %1342 = vst [vmem:[%s1338 + $0xc] sm:$0xf] %v1325
        %1343 = vst [vmem:[%s1338 + $0x10] sm:$0xf] %v1326
        %1344 = vst [vmem:[%s1338 + $0x14] sm:$0xf] %v1327
        %1345 = vst [vmem:[%s1338 + $0x18] sm:$0xf] %v1328
        %1346 = vst [vmem:[%s1338 + $0x1c] sm:$0xf] %v1329
        %v1347 = vld [vmem:[%s335] sm:$0xf0]
        %v1348 = vld [vmem:[%s335 + $0x8] sm:$0xf0]
        %v1349 = vld [vmem:[%s335 + $0x18] sm:$0xff]
        %v1350 = vld [vmem:[%s335 + $0x20] sm:$0xff]
        %v1351 = vld [vmem:[%s335 + $0x30] sm:$0xff]
        %v1352 = vld [vmem:[%s335 + $0x38] sm:$0xff]
        %v1353 = vld [vmem:[%s335 + $0x48] sm:$0xff]
        %v1354 = vld [vmem:[%s335 + $0x50] sm:$0xff]
        %v1355 = vld [vmem:[%s335 + $0x60] sm:$0xf]
        %v1356 = vld [vmem:[%s335 + $0x68] sm:$0xf]
        %s1357 = scalar_lea.vmem [#allocation3], 1024
        %v1358 = vld [vmem:[%s1357] sm:$0xff]
        %v1359 = vld [vmem:[%s1357 + $0x8] sm:$0xff]
        %v1360 = vld [vmem:[%s1357 + $0x10] sm:$0xff]
        %v1361 = vld [vmem:[%s1357 + $0x18] sm:$0xff]
        %v1362 = vld [vmem:[%s1357 + $0x20] sm:$0xff]
        %v1363 = vld [vmem:[%s1357 + $0x28] sm:$0xff]
        %v1364 = vld [vmem:[%s1357 + $0x30] sm:$0xff]
        %v1365 = vld [vmem:[%s1357 + $0x38] sm:$0xff]
        %v1366 = vld [vmem:[%s1357 + $0x40] sm:$0xff]
        %v1367 = vld [vmem:[%s1357 + $0x48] sm:$0xff]
        %v1368 = vld [vmem:[%s1357 + $0x50] sm:$0xff]
        %v1369 = vld [vmem:[%s1357 + $0x58] sm:$0xff]
        %v1370 = vld [vmem:[%s1357 + $0x60] sm:$0xff]
        %v1371 = vld [vmem:[%s1357 + $0x68] sm:$0xff]
        %v1372 = vld [vmem:[%s1357 + $0x70] sm:$0xff]
        %v1373 = vld [vmem:[%s1357 + $0x78] sm:$0xff]
        %v1384 = vrot.slane %v1347, 4
        %v1385 = vrot.slane %v1349, 4
        %v1386 = vsel %vm468, %v1384, %v1385
        %v1387 = vrot.slane %v1348, 4
        %v1388 = vrot.slane %v1350, 4
        %v1389 = vsel %vm468, %v1387, %v1388
        %v1390 = vrot.slane %v1351, 4
        %v1391 = vsel %vm468, %v1385, %v1390
        %v1392 = vrot.slane %v1352, 4
        %v1393 = vsel %vm468, %v1388, %v1392
        %v1394 = vrot.slane %v1353, 4
        %v1395 = vsel %vm468, %v1390, %v1394
        %v1396 = vrot.slane %v1354, 4
        %v1397 = vsel %vm468, %v1392, %v1396
        %v1398 = vrot.slane %v1355, 4
        %v1399 = vsel %vm468, %v1394, %v1398
        %v1400 = vrot.slane %v1356, 4
        %v1401 = vsel %vm468, %v1396, %v1400
        %1410 = vmatprep.subr.bf16.mxu0 0
        %1411 = vmatpush1.bf16.msra.mxu0 %v1358
        %1412 = vmatprep.subr.bf16.mxu0 0
        %1413 = vmatpush1.bf16.msra.mxu0 %v1359
        %1414 = vmatprep.subr.bf16.mxu0 0
        %1415 = vmatpush1.bf16.msra.mxu0 %v1360
        %1416 = vmatprep.subr.bf16.mxu0 0
        %1417 = vmatpush1.bf16.msra.mxu0 %v1361
        %1418 = vmatprep.subr.bf16.mxu0 0
        %1419 = vmatpush1.bf16.msra.mxu0 %v1362
        %1420 = vmatprep.subr.bf16.mxu0 0
        %1421 = vmatpush1.bf16.msra.mxu0 %v1363
        %1422 = vmatprep.subr.bf16.mxu0 0
        %1423 = vmatpush1.bf16.msra.mxu0 %v1364
        %1424 = vmatprep.subr.bf16.mxu0 0
        %1425 = vmatpush1.bf16.msra.mxu0 %v1365
        %1426 = vmatprep.subr.bf16.mxu0 0
        %1427 = vmatpush1.bf16.msra.mxu0 %v1366
        %1428 = vmatprep.subr.bf16.mxu0 0
        %1429 = vmatpush1.bf16.msra.mxu0 %v1367
        %1430 = vmatprep.subr.bf16.mxu0 0
        %1431 = vmatpush1.bf16.msra.mxu0 %v1368
        %1432 = vmatprep.subr.bf16.mxu0 0
        %1433 = vmatpush1.bf16.msra.mxu0 %v1369
        %1434 = vmatprep.subr.bf16.mxu0 0
        %1435 = vmatpush1.bf16.msra.mxu0 %v1370
        %1436 = vmatprep.subr.bf16.mxu0 0
        %1437 = vmatpush1.bf16.msra.mxu0 %v1371
        %1438 = vmatprep.subr.bf16.mxu0 0
        %1439 = vmatpush1.bf16.msra.mxu0 %v1372
        %1440 = vmatprep.subr.bf16.mxu0 0
        %1441 = vmatpush1.bf16.msra.mxu0 %v1373
        %1442 = vmatprep.mubr.bf16.mxu0 %v1389
        %1443 = vmatmul.mubr.bf16.gmra.mrb[0].mxu0 %v1386
        %v1444 = vpop.f32.mrb[0].mxu0
        %v1445 = vadd.f32 %v364, %v1444
        %v1446 = vpop.f32.mrb[0].mxu0
        %v1447 = vpop.f32.mrb[0].mxu0
        %v1448 = vadd.f32 %v364, %v1447
        %v1449 = vpop.f32.mrb[0].mxu0
        %1450 = vmatprep.mubr.bf16.mxu0 %v1393
        %1451 = vmatmul.mubr.bf16.gmra.mrb[0].mxu0 %v1391
        %v1452 = vpop.f32.mrb[0].mxu0
        %v1453 = vadd.f32 %v364, %v1452
        %v1454 = vpop.f32.mrb[0].mxu0
        %v1455 = vpop.f32.mrb[0].mxu0
        %v1456 = vadd.f32 %v364, %v1455
        %v1457 = vpop.f32.mrb[0].mxu0
        %1458 = vmatprep.mubr.bf16.mxu0 %v1397
        %1459 = vmatmul.mubr.bf16.gmra.mrb[0].mxu0 %v1395
        %v1460 = vpop.f32.mrb[0].mxu0
        %v1461 = vadd.f32 %v364, %v1460
        %v1462 = vpop.f32.mrb[0].mxu0
        %v1463 = vpop.f32.mrb[0].mxu0
        %v1464 = vadd.f32 %v364, %v1463
        %v1465 = vpop.f32.mrb[0].mxu0
        %1466 = vmatprep.mubr.bf16.mxu0 %v1401
        %1467 = vmatmul.mubr.bf16.gmra.mrb[0].mxu0 %v1399
        %v1468 = vpop.f32.mrb[0].mxu0
        %v1469 = vadd.f32 %v364, %v1468
        %v1470 = vpop.f32.mrb[0].mxu0
        %v1471 = vpop.f32.mrb[0].mxu0
        %v1472 = vadd.f32 %v364, %v1471
        %v1473 = vpop.f32.mrb[0].mxu0
        %1474 = vdwg.mxu0
        %v1475 = vld [vmem:[%s335 + $0x60] sm:$0xff]
        %v1476 = vld [vmem:[%s335 + $0x68] sm:$0xff]
        %s1477 = scalar_lea.vmem [#allocation3], 1152
        %v1478 = vld [vmem:[%s1477] sm:$0xff]
        %v1479 = vld [vmem:[%s1477 + $0x8] sm:$0xff]
        %v1480 = vld [vmem:[%s1477 + $0x10] sm:$0xff]
        %v1481 = vld [vmem:[%s1477 + $0x18] sm:$0xff]
        %v1482 = vld [vmem:[%s1477 + $0x20] sm:$0xff]
        %v1483 = vld [vmem:[%s1477 + $0x28] sm:$0xff]
        %v1484 = vld [vmem:[%s1477 + $0x30] sm:$0xff]
        %v1485 = vld [vmem:[%s1477 + $0x38] sm:$0xff]
        %v1486 = vld [vmem:[%s1477 + $0x40] sm:$0xff]
        %v1487 = vld [vmem:[%s1477 + $0x48] sm:$0xff]
        %v1488 = vld [vmem:[%s1477 + $0x50] sm:$0xff]
        %v1489 = vld [vmem:[%s1477 + $0x58] sm:$0xff]
        %v1490 = vld [vmem:[%s1477 + $0x60] sm:$0xff]
        %v1491 = vld [vmem:[%s1477 + $0x68] sm:$0xff]
        %v1492 = vld [vmem:[%s1477 + $0x70] sm:$0xff]
        %v1493 = vld [vmem:[%s1477 + $0x78] sm:$0xff]
        %1494 = vmatprep.subr.bf16.mxu0 0
        %1495 = vmatpush1.bf16.msra.mxu0 %v1478
        %1496 = vmatprep.subr.bf16.mxu0 0
        %1497 = vmatpush1.bf16.msra.mxu0 %v1479
        %1498 = vmatprep.subr.bf16.mxu0 0
        %1499 = vmatpush1.bf16.msra.mxu0 %v1480
        %1500 = vmatprep.subr.bf16.mxu0 0
        %1501 = vmatpush1.bf16.msra.mxu0 %v1481
        %1502 = vmatprep.subr.bf16.mxu0 0
        %1503 = vmatpush1.bf16.msra.mxu0 %v1482
        %1504 = vmatprep.subr.bf16.mxu0 0
        %1505 = vmatpush1.bf16.msra.mxu0 %v1483
        %1506 = vmatprep.subr.bf16.mxu0 0
        %1507 = vmatpush1.bf16.msra.mxu0 %v1484
        %1508 = vmatprep.subr.bf16.mxu0 0
        %1509 = vmatpush1.bf16.msra.mxu0 %v1485
        %1510 = vmatprep.subr.bf16.mxu0 0
        %1511 = vmatpush1.bf16.msra.mxu0 %v1486
        %1512 = vmatprep.subr.bf16.mxu0 0
        %1513 = vmatpush1.bf16.msra.mxu0 %v1487
        %1514 = vmatprep.subr.bf16.mxu0 0
        %1515 = vmatpush1.bf16.msra.mxu0 %v1488
        %1516 = vmatprep.subr.bf16.mxu0 0
        %1517 = vmatpush1.bf16.msra.mxu0 %v1489
        %1518 = vmatprep.subr.bf16.mxu0 0
        %1519 = vmatpush1.bf16.msra.mxu0 %v1490
        %1520 = vmatprep.subr.bf16.mxu0 0
        %1521 = vmatpush1.bf16.msra.mxu0 %v1491
        %1522 = vmatprep.subr.bf16.mxu0 0
        %1523 = vmatpush1.bf16.msra.mxu0 %v1492
        %1524 = vmatprep.subr.bf16.mxu0 0
        %1525 = vmatpush1.bf16.msra.mxu0 %v1493
        %1526 = vmatprep.mubr.bf16.mxu0 %v1350
        %1527 = vmatmul.mubr.bf16.gmra.mrb[0].mxu0 %v1349
        %v1528 = vpop.f32.mrb[0].mxu0
        %v1529 = vadd.f32 0.0, %v1528
        %v1530 = vpop.f32.mrb[0].mxu0
        %v1531 = vpop.f32.mrb[0].mxu0
        %v1532 = vadd.f32 0.0, %v1531
        %v1533 = vpop.f32.mrb[0].mxu0
        %1534 = vmatprep.mubr.bf16.mxu0 %v1352
        %1535 = vmatmul.mubr.bf16.gmra.mrb[0].mxu0 %v1351
        %v1536 = vpop.f32.mrb[0].mxu0
        %v1537 = vadd.f32 0.0, %v1536
        %v1538 = vpop.f32.mrb[0].mxu0
        %v1539 = vpop.f32.mrb[0].mxu0
        %v1540 = vadd.f32 0.0, %v1539
        %v1541 = vpop.f32.mrb[0].mxu0
        %1542 = vmatprep.mubr.bf16.mxu0 %v1354
        %1543 = vmatmul.mubr.bf16.gmra.mrb[0].mxu0 %v1353
        %v1544 = vpop.f32.mrb[0].mxu0
        %v1545 = vadd.f32 0.0, %v1544
        %v1546 = vpop.f32.mrb[0].mxu0
        %v1547 = vpop.f32.mrb[0].mxu0
        %v1548 = vadd.f32 0.0, %v1547
        %v1549 = vpop.f32.mrb[0].mxu0
        %1550 = vmatprep.mubr.bf16.mxu0 %v1476
        %1551 = vmatmul.mubr.bf16.gmra.mrb[0].mxu0 %v1475
        %v1552 = vpop.f32.mrb[0].mxu0
        %v1553 = vadd.f32 0.0, %v1552
        %v1554 = vpop.f32.mrb[0].mxu0
        %v1555 = vpop.f32.mrb[0].mxu0
        %v1556 = vadd.f32 0.0, %v1555
        %v1557 = vpop.f32.mrb[0].mxu0
        %1558 = vdwg.mxu0
        %v1559 = vadd.f32 %v1445, %v1529
        %v1560 = vadd.f32 %v1448, %v1532
        %v1561 = vadd.f32 %v1453, %v1537
        %v1562 = vadd.f32 %v1456, %v1540
        %v1563 = vadd.f32 %v1461, %v1545
        %v1564 = vadd.f32 %v1464, %v1548
        %v1565 = vadd.f32 %v1469, %v1553
        %v1566 = vadd.f32 %v1472, %v1556
        %v1567 = vld [vmem:[%s571] sm:$0xf0]
        %v1568 = vld [vmem:[%s571 + $0x8] sm:$0xf0]
        %v1569 = vld [vmem:[%s571 + $0x18] sm:$0xff]
        %v1570 = vld [vmem:[%s571 + $0x20] sm:$0xff]
        %v1571 = vld [vmem:[%s571 + $0x30] sm:$0xff]
        %v1572 = vld [vmem:[%s571 + $0x38] sm:$0xff]
        %v1573 = vld [vmem:[%s571 + $0x48] sm:$0xff]
        %v1574 = vld [vmem:[%s571 + $0x50] sm:$0xff]
        %v1575 = vld [vmem:[%s571 + $0x60] sm:$0xf]
        %v1576 = vld [vmem:[%s571 + $0x68] sm:$0xf]
        %s1577 = scalar_lea.vmem [#allocation3], 1280
        %v1578 = vld [vmem:[%s1577] sm:$0xff]
        %v1579 = vld [vmem:[%s1577 + $0x8] sm:$0xff]
        %v1580 = vld [vmem:[%s1577 + $0x10] sm:$0xff]
        %v1581 = vld [vmem:[%s1577 + $0x18] sm:$0xff]
        %v1582 = vld [vmem:[%s1577 + $0x20] sm:$0xff]
        %v1583 = vld [vmem:[%s1577 + $0x28] sm:$0xff]
        %v1584 = vld [vmem:[%s1577 + $0x30] sm:$0xff]
        %v1585 = vld [vmem:[%s1577 + $0x38] sm:$0xff]
        %v1586 = vld [vmem:[%s1577 + $0x40] sm:$0xff]
        %v1587 = vld [vmem:[%s1577 + $0x48] sm:$0xff]
        %v1588 = vld [vmem:[%s1577 + $0x50] sm:$0xff]
        %v1589 = vld [vmem:[%s1577 + $0x58] sm:$0xff]
        %v1590 = vld [vmem:[%s1577 + $0x60] sm:$0xff]
        %v1591 = vld [vmem:[%s1577 + $0x68] sm:$0xff]
        %v1592 = vld [vmem:[%s1577 + $0x70] sm:$0xff]
        %v1593 = vld [vmem:[%s1577 + $0x78] sm:$0xff]
        %v1604 = vrot.slane %v1567, 4
        %v1605 = vrot.slane %v1569, 4
        %v1606 = vsel %vm468, %v1604, %v1605
        %v1607 = vrot.slane %v1568, 4
        %v1608 = vrot.slane %v1570, 4
        %v1609 = vsel %vm468, %v1607, %v1608
        %v1610 = vrot.slane %v1571, 4
        %v1611 = vsel %vm468, %v1605, %v1610
        %v1612 = vrot.slane %v1572, 4
        %v1613 = vsel %vm468, %v1608, %v1612
        %v1614 = vrot.slane %v1573, 4
        %v1615 = vsel %vm468, %v1610, %v1614
        %v1616 = vrot.slane %v1574, 4
        %v1617 = vsel %vm468, %v1612, %v1616
        %v1618 = vrot.slane %v1575, 4
        %v1619 = vsel %vm468, %v1614, %v1618
        %v1620 = vrot.slane %v1576, 4
        %v1621 = vsel %vm468, %v1616, %v1620
        %1630 = vmatprep.subr.bf16.mxu0 0
        %1631 = vmatpush1.bf16.msra.mxu0 %v1578
        %1632 = vmatprep.subr.bf16.mxu0 0
        %1633 = vmatpush1.bf16.msra.mxu0 %v1579
        %1634 = vmatprep.subr.bf16.mxu0 0
        %1635 = vmatpush1.bf16.msra.mxu0 %v1580
        %1636 = vmatprep.subr.bf16.mxu0 0
        %1637 = vmatpush1.bf16.msra.mxu0 %v1581
        %1638 = vmatprep.subr.bf16.mxu0 0
        %1639 = vmatpush1.bf16.msra.mxu0 %v1582
        %1640 = vmatprep.subr.bf16.mxu0 0
        %1641 = vmatpush1.bf16.msra.mxu0 %v1583
        %1642 = vmatprep.subr.bf16.mxu0 0
        %1643 = vmatpush1.bf16.msra.mxu0 %v1584
        %1644 = vmatprep.subr.bf16.mxu0 0
        %1645 = vmatpush1.bf16.msra.mxu0 %v1585
        %1646 = vmatprep.subr.bf16.mxu0 0
        %1647 = vmatpush1.bf16.msra.mxu0 %v1586
        %1648 = vmatprep.subr.bf16.mxu0 0
        %1649 = vmatpush1.bf16.msra.mxu0 %v1587
        %1650 = vmatprep.subr.bf16.mxu0 0
        %1651 = vmatpush1.bf16.msra.mxu0 %v1588
        %1652 = vmatprep.subr.bf16.mxu0 0
        %1653 = vmatpush1.bf16.msra.mxu0 %v1589
        %1654 = vmatprep.subr.bf16.mxu0 0
        %1655 = vmatpush1.bf16.msra.mxu0 %v1590
        %1656 = vmatprep.subr.bf16.mxu0 0
        %1657 = vmatpush1.bf16.msra.mxu0 %v1591
        %1658 = vmatprep.subr.bf16.mxu0 0
        %1659 = vmatpush1.bf16.msra.mxu0 %v1592
        %1660 = vmatprep.subr.bf16.mxu0 0
        %1661 = vmatpush1.bf16.msra.mxu0 %v1593
        %1662 = vmatprep.mubr.bf16.mxu0 %v1609
        %1663 = vmatmul.mubr.bf16.gmra.mrb[0].mxu0 %v1606
        %v1664 = vpop.f32.mrb[0].mxu0
        %v1665 = vadd.f32 0.0, %v1664
        %v1666 = vpop.f32.mrb[0].mxu0
        %v1667 = vpop.f32.mrb[0].mxu0
        %v1668 = vadd.f32 0.0, %v1667
        %v1669 = vpop.f32.mrb[0].mxu0
        %1670 = vmatprep.mubr.bf16.mxu0 %v1613
        %1671 = vmatmul.mubr.bf16.gmra.mrb[0].mxu0 %v1611
        %v1672 = vpop.f32.mrb[0].mxu0
        %v1673 = vadd.f32 0.0, %v1672
        %v1674 = vpop.f32.mrb[0].mxu0
        %v1675 = vpop.f32.mrb[0].mxu0
        %v1676 = vadd.f32 0.0, %v1675
        %v1677 = vpop.f32.mrb[0].mxu0
        %1678 = vmatprep.mubr.bf16.mxu0 %v1617
        %1679 = vmatmul.mubr.bf16.gmra.mrb[0].mxu0 %v1615
        %v1680 = vpop.f32.mrb[0].mxu0
        %v1681 = vadd.f32 0.0, %v1680
        %v1682 = vpop.f32.mrb[0].mxu0
        %v1683 = vpop.f32.mrb[0].mxu0
        %v1684 = vadd.f32 0.0, %v1683
        %v1685 = vpop.f32.mrb[0].mxu0
        %1686 = vmatprep.mubr.bf16.mxu0 %v1621
        %1687 = vmatmul.mubr.bf16.gmra.mrb[0].mxu0 %v1619
        %v1688 = vpop.f32.mrb[0].mxu0
        %v1689 = vadd.f32 0.0, %v1688
        %v1690 = vpop.f32.mrb[0].mxu0
        %v1691 = vpop.f32.mrb[0].mxu0
        %v1692 = vadd.f32 0.0, %v1691
        %v1693 = vpop.f32.mrb[0].mxu0
        %1694 = vdwg.mxu0
        %v1695 = vadd.f32 %v1559, %v1665
        %v1696 = vadd.f32 %v1560, %v1668
        %v1697 = vadd.f32 %v1561, %v1673
        %v1698 = vadd.f32 %v1562, %v1676
        %v1699 = vadd.f32 %v1563, %v1681
        %v1700 = vadd.f32 %v1564, %v1684
        %v1701 = vadd.f32 %v1565, %v1689
        %v1702 = vadd.f32 %v1566, %v1692
        %v1703 = vld [vmem:[%s571 + $0x60] sm:$0xff]
        %v1704 = vld [vmem:[%s571 + $0x68] sm:$0xff]
        %s1705 = scalar_lea.vmem [#allocation3], 1408
        %v1706 = vld [vmem:[%s1705] sm:$0xff]
        %v1707 = vld [vmem:[%s1705 + $0x8] sm:$0xff]
        %v1708 = vld [vmem:[%s1705 + $0x10] sm:$0xff]
        %v1709 = vld [vmem:[%s1705 + $0x18] sm:$0xff]
        %v1710 = vld [vmem:[%s1705 + $0x20] sm:$0xff]
        %v1711 = vld [vmem:[%s1705 + $0x28] sm:$0xff]
        %v1712 = vld [vmem:[%s1705 + $0x30] sm:$0xff]
        %v1713 = vld [vmem:[%s1705 + $0x38] sm:$0xff]
        %v1714 = vld [vmem:[%s1705 + $0x40] sm:$0xff]
        %v1715 = vld [vmem:[%s1705 + $0x48] sm:$0xff]
        %v1716 = vld [vmem:[%s1705 + $0x50] sm:$0xff]
        %v1717 = vld [vmem:[%s1705 + $0x58] sm:$0xff]
        %v1718 = vld [vmem:[%s1705 + $0x60] sm:$0xff]
        %v1719 = vld [vmem:[%s1705 + $0x68] sm:$0xff]
        %v1720 = vld [vmem:[%s1705 + $0x70] sm:$0xff]
        %v1721 = vld [vmem:[%s1705 + $0x78] sm:$0xff]
        %1722 = vmatprep.subr.bf16.mxu0 0
        %1723 = vmatpush1.bf16.msra.mxu0 %v1706
        %1724 = vmatprep.subr.bf16.mxu0 0
        %1725 = vmatpush1.bf16.msra.mxu0 %v1707
        %1726 = vmatprep.subr.bf16.mxu0 0
        %1727 = vmatpush1.bf16.msra.mxu0 %v1708
        %1728 = vmatprep.subr.bf16.mxu0 0
        %1729 = vmatpush1.bf16.msra.mxu0 %v1709
        %1730 = vmatprep.subr.bf16.mxu0 0
        %1731 = vmatpush1.bf16.msra.mxu0 %v1710
        %1732 = vmatprep.subr.bf16.mxu0 0
        %1733 = vmatpush1.bf16.msra.mxu0 %v1711
        %1734 = vmatprep.subr.bf16.mxu0 0
        %1735 = vmatpush1.bf16.msra.mxu0 %v1712
        %1736 = vmatprep.subr.bf16.mxu0 0
        %1737 = vmatpush1.bf16.msra.mxu0 %v1713
        %1738 = vmatprep.subr.bf16.mxu0 0
        %1739 = vmatpush1.bf16.msra.mxu0 %v1714
        %1740 = vmatprep.subr.bf16.mxu0 0
        %1741 = vmatpush1.bf16.msra.mxu0 %v1715
        %1742 = vmatprep.subr.bf16.mxu0 0
        %1743 = vmatpush1.bf16.msra.mxu0 %v1716
        %1744 = vmatprep.subr.bf16.mxu0 0
        %1745 = vmatpush1.bf16.msra.mxu0 %v1717
        %1746 = vmatprep.subr.bf16.mxu0 0
        %1747 = vmatpush1.bf16.msra.mxu0 %v1718
        %1748 = vmatprep.subr.bf16.mxu0 0
        %1749 = vmatpush1.bf16.msra.mxu0 %v1719
        %1750 = vmatprep.subr.bf16.mxu0 0
        %1751 = vmatpush1.bf16.msra.mxu0 %v1720
        %1752 = vmatprep.subr.bf16.mxu0 0
        %1753 = vmatpush1.bf16.msra.mxu0 %v1721
        %1754 = vmatprep.mubr.bf16.mxu0 %v1570
        %1755 = vmatmul.mubr.bf16.gmra.mrb[0].mxu0 %v1569
        %v1756 = vpop.f32.mrb[0].mxu0
        %v1757 = vadd.f32 0.0, %v1756
        %v1758 = vpop.f32.mrb[0].mxu0
        %v1759 = vpop.f32.mrb[0].mxu0
        %v1760 = vadd.f32 0.0, %v1759
        %v1761 = vpop.f32.mrb[0].mxu0
        %1762 = vmatprep.mubr.bf16.mxu0 %v1572
        %1763 = vmatmul.mubr.bf16.gmra.mrb[0].mxu0 %v1571
        %v1764 = vpop.f32.mrb[0].mxu0
        %v1765 = vadd.f32 0.0, %v1764
        %v1766 = vpop.f32.mrb[0].mxu0
        %v1767 = vpop.f32.mrb[0].mxu0
        %v1768 = vadd.f32 0.0, %v1767
        %v1769 = vpop.f32.mrb[0].mxu0
        %1770 = vmatprep.mubr.bf16.mxu0 %v1574
        %1771 = vmatmul.mubr.bf16.gmra.mrb[0].mxu0 %v1573
        %v1772 = vpop.f32.mrb[0].mxu0
        %v1773 = vadd.f32 0.0, %v1772
        %v1774 = vpop.f32.mrb[0].mxu0
        %v1775 = vpop.f32.mrb[0].mxu0
        %v1776 = vadd.f32 0.0, %v1775
        %v1777 = vpop.f32.mrb[0].mxu0
        %1778 = vmatprep.mubr.bf16.mxu0 %v1704
        %1779 = vmatmul.mubr.bf16.gmra.mrb[0].mxu0 %v1703
        %v1780 = vpop.f32.mrb[0].mxu0
        %v1781 = vadd.f32 0.0, %v1780
        %v1782 = vpop.f32.mrb[0].mxu0
        %v1783 = vpop.f32.mrb[0].mxu0
        %v1784 = vadd.f32 0.0, %v1783
        %v1785 = vpop.f32.mrb[0].mxu0
        %1786 = vdwg.mxu0
        %v1787 = vadd.f32 %v1695, %v1757
        %v1788 = vadd.f32 %v1696, %v1760
        %v1789 = vadd.f32 %v1697, %v1765
        %v1790 = vadd.f32 %v1698, %v1768
        %v1791 = vadd.f32 %v1699, %v1773
        %v1792 = vadd.f32 %v1700, %v1776
        %v1793 = vadd.f32 %v1701, %v1781
        %v1794 = vadd.f32 %v1702, %v1784
        %v1795 = vpack.c.bf16 %v1788, %v1787
        %v1796 = vpack.c.bf16 %v1790, %v1789
        %v1797 = vpack.c.bf16 %v1792, %v1791
        %v1798 = vpack.c.bf16 %v1794, %v1793
        %v1803 = vunpack.c.l.b16 %v1795
        %v1804 = vunpack.c.h.b16 %v1795
        %v1805 = vunpack.c.l.b16 %v1796
        %v1806 = vunpack.c.h.b16 %v1796
        %v1807 = vunpack.c.l.b16 %v1797
        %v1808 = vunpack.c.h.b16 %v1797
        %v1809 = vunpack.c.l.b16 %v1798
        %v1810 = vunpack.c.h.b16 %v1798
        %v1811 = vpack.c.b16 %v1803, %v1803
        %v1812 = vpack.c.b16 %v1804, %v1804
        %v1813 = vpack.c.b16 %v1805, %v1805
        %v1814 = vpack.c.b16 %v1806, %v1806
        %v1815 = vpack.c.b16 %v1807, %v1807
        %v1816 = vpack.c.b16 %v1808, %v1808
        %v1817 = vpack.c.b16 %v1809, %v1809
        %v1818 = vpack.c.b16 %v1810, %v1810
        %s1827 = scalar_lea.vmem %s123, 64 [#allocation8]
        %1828 = vst [vmem:[%s1827] sm:$0xf] %v1811
        %1829 = vst [vmem:[%s1827 + $0x4] sm:$0xf] %v1812
        %1830 = vst [vmem:[%s1827 + $0x8] sm:$0xf] %v1813
        %1831 = vst [vmem:[%s1827 + $0xc] sm:$0xf] %v1814
        %1832 = vst [vmem:[%s1827 + $0x10] sm:$0xf] %v1815
        %1833 = vst [vmem:[%s1827 + $0x14] sm:$0xf] %v1816
        %1834 = vst [vmem:[%s1827 + $0x18] sm:$0xf] %v1817
        %1835 = vst [vmem:[%s1827 + $0x1c] sm:$0xf] %v1818
        %v1836 = vld [vmem:[%s335 + $0x8] sm:$0xf0]
        %v1837 = vld [vmem:[%s335 + $0x10] sm:$0xf0]
        %v1838 = vld [vmem:[%s335 + $0x20] sm:$0xff]
        %v1839 = vld [vmem:[%s335 + $0x28] sm:$0xff]
        %v1840 = vld [vmem:[%s335 + $0x38] sm:$0xff]
        %v1841 = vld [vmem:[%s335 + $0x40] sm:$0xff]
        %v1842 = vld [vmem:[%s335 + $0x50] sm:$0xff]
        %v1843 = vld [vmem:[%s335 + $0x58] sm:$0xff]
        %v1844 = vld [vmem:[%s335 + $0x68] sm:$0xf]
        %v1845 = vld [vmem:[%s335 + $0x70] sm:$0xf]
        %s1846 = scalar_lea.vmem [#allocation3], 1536
        %v1847 = vld [vmem:[%s1846] sm:$0xff]
        %v1848 = vld [vmem:[%s1846 + $0x8] sm:$0xff]
        %v1849 = vld [vmem:[%s1846 + $0x10] sm:$0xff]
        %v1850 = vld [vmem:[%s1846 + $0x18] sm:$0xff]
        %v1851 = vld [vmem:[%s1846 + $0x20] sm:$0xff]
        %v1852 = vld [vmem:[%s1846 + $0x28] sm:$0xff]
        %v1853 = vld [vmem:[%s1846 + $0x30] sm:$0xff]
        %v1854 = vld [vmem:[%s1846 + $0x38] sm:$0xff]
        %v1855 = vld [vmem:[%s1846 + $0x40] sm:$0xff]
        %v1856 = vld [vmem:[%s1846 + $0x48] sm:$0xff]
        %v1857 = vld [vmem:[%s1846 + $0x50] sm:$0xff]
        %v1858 = vld [vmem:[%s1846 + $0x58] sm:$0xff]
        %v1859 = vld [vmem:[%s1846 + $0x60] sm:$0xff]
        %v1860 = vld [vmem:[%s1846 + $0x68] sm:$0xff]
        %v1861 = vld [vmem:[%s1846 + $0x70] sm:$0xff]
        %v1862 = vld [vmem:[%s1846 + $0x78] sm:$0xff]
        %v1873 = vrot.slane %v1836, 4
        %v1874 = vrot.slane %v1838, 4
        %v1875 = vsel %vm468, %v1873, %v1874
        %v1876 = vrot.slane %v1837, 4
        %v1877 = vrot.slane %v1839, 4
        %v1878 = vsel %vm468, %v1876, %v1877
        %v1879 = vrot.slane %v1840, 4
        %v1880 = vsel %vm468, %v1874, %v1879
        %v1881 = vrot.slane %v1841, 4
        %v1882 = vsel %vm468, %v1877, %v1881
        %v1883 = vrot.slane %v1842, 4
        %v1884 = vsel %vm468, %v1879, %v1883
        %v1885 = vrot.slane %v1843, 4
        %v1886 = vsel %vm468, %v1881, %v1885
        %v1887 = vrot.slane %v1844, 4
        %v1888 = vsel %vm468, %v1883, %v1887
        %v1889 = vrot.slane %v1845, 4
        %v1890 = vsel %vm468, %v1885, %v1889
        %1899 = vmatprep.subr.bf16.mxu0 0
        %1900 = vmatpush1.bf16.msra.mxu0 %v1847
        %1901 = vmatprep.subr.bf16.mxu0 0
        %1902 = vmatpush1.bf16.msra.mxu0 %v1848
        %1903 = vmatprep.subr.bf16.mxu0 0
        %1904 = vmatpush1.bf16.msra.mxu0 %v1849
        %1905 = vmatprep.subr.bf16.mxu0 0
        %1906 = vmatpush1.bf16.msra.mxu0 %v1850
        %1907 = vmatprep.subr.bf16.mxu0 0
        %1908 = vmatpush1.bf16.msra.mxu0 %v1851
        %1909 = vmatprep.subr.bf16.mxu0 0
        %1910 = vmatpush1.bf16.msra.mxu0 %v1852
        %1911 = vmatprep.subr.bf16.mxu0 0
        %1912 = vmatpush1.bf16.msra.mxu0 %v1853
        %1913 = vmatprep.subr.bf16.mxu0 0
        %1914 = vmatpush1.bf16.msra.mxu0 %v1854
        %1915 = vmatprep.subr.bf16.mxu0 0
        %1916 = vmatpush1.bf16.msra.mxu0 %v1855
        %1917 = vmatprep.subr.bf16.mxu0 0
        %1918 = vmatpush1.bf16.msra.mxu0 %v1856
        %1919 = vmatprep.subr.bf16.mxu0 0
        %1920 = vmatpush1.bf16.msra.mxu0 %v1857
        %1921 = vmatprep.subr.bf16.mxu0 0
        %1922 = vmatpush1.bf16.msra.mxu0 %v1858
        %1923 = vmatprep.subr.bf16.mxu0 0
        %1924 = vmatpush1.bf16.msra.mxu0 %v1859
        %1925 = vmatprep.subr.bf16.mxu0 0
        %1926 = vmatpush1.bf16.msra.mxu0 %v1860
        %1927 = vmatprep.subr.bf16.mxu0 0
        %1928 = vmatpush1.bf16.msra.mxu0 %v1861
        %1929 = vmatprep.subr.bf16.mxu0 0
        %1930 = vmatpush1.bf16.msra.mxu0 %v1862
        %1931 = vmatprep.mubr.bf16.mxu0 %v1878
        %1932 = vmatmul.mubr.bf16.gmra.mrb[0].mxu0 %v1875
        %v1933 = vpop.f32.mrb[0].mxu0
        %v1934 = vadd.f32 %v364, %v1933
        %v1935 = vpop.f32.mrb[0].mxu0
        %v1936 = vpop.f32.mrb[0].mxu0
        %v1937 = vadd.f32 %v364, %v1936
        %v1938 = vpop.f32.mrb[0].mxu0
        %1939 = vmatprep.mubr.bf16.mxu0 %v1882
        %1940 = vmatmul.mubr.bf16.gmra.mrb[0].mxu0 %v1880
        %v1941 = vpop.f32.mrb[0].mxu0
        %v1942 = vadd.f32 %v364, %v1941
        %v1943 = vpop.f32.mrb[0].mxu0
        %v1944 = vpop.f32.mrb[0].mxu0
        %v1945 = vadd.f32 %v364, %v1944
        %v1946 = vpop.f32.mrb[0].mxu0
        %1947 = vmatprep.mubr.bf16.mxu0 %v1886
        %1948 = vmatmul.mubr.bf16.gmra.mrb[0].mxu0 %v1884
        %v1949 = vpop.f32.mrb[0].mxu0
        %v1950 = vadd.f32 %v364, %v1949
        %v1951 = vpop.f32.mrb[0].mxu0
        %v1952 = vpop.f32.mrb[0].mxu0
        %v1953 = vadd.f32 %v364, %v1952
        %v1954 = vpop.f32.mrb[0].mxu0
        %1955 = vmatprep.mubr.bf16.mxu0 %v1890
        %1956 = vmatmul.mubr.bf16.gmra.mrb[0].mxu0 %v1888
        %v1957 = vpop.f32.mrb[0].mxu0
        %v1958 = vadd.f32 %v364, %v1957
        %v1959 = vpop.f32.mrb[0].mxu0
        %v1960 = vpop.f32.mrb[0].mxu0
        %v1961 = vadd.f32 %v364, %v1960
        %v1962 = vpop.f32.mrb[0].mxu0
        %1963 = vdwg.mxu0
        %v1964 = vld [vmem:[%s335 + $0x68] sm:$0xff]
        %v1965 = vld [vmem:[%s335 + $0x70] sm:$0xff]
        %s1966 = scalar_lea.vmem [#allocation3], 1664
        %v1967 = vld [vmem:[%s1966] sm:$0xff]
        %v1968 = vld [vmem:[%s1966 + $0x8] sm:$0xff]
        %v1969 = vld [vmem:[%s1966 + $0x10] sm:$0xff]
        %v1970 = vld [vmem:[%s1966 + $0x18] sm:$0xff]
        %v1971 = vld [vmem:[%s1966 + $0x20] sm:$0xff]
        %v1972 = vld [vmem:[%s1966 + $0x28] sm:$0xff]
        %v1973 = vld [vmem:[%s1966 + $0x30] sm:$0xff]
        %v1974 = vld [vmem:[%s1966 + $0x38] sm:$0xff]
        %v1975 = vld [vmem:[%s1966 + $0x40] sm:$0xff]
        %v1976 = vld [vmem:[%s1966 + $0x48] sm:$0xff]
        %v1977 = vld [vmem:[%s1966 + $0x50] sm:$0xff]
        %v1978 = vld [vmem:[%s1966 + $0x58] sm:$0xff]
        %v1979 = vld [vmem:[%s1966 + $0x60] sm:$0xff]
        %v1980 = vld [vmem:[%s1966 + $0x68] sm:$0xff]
        %v1981 = vld [vmem:[%s1966 + $0x70] sm:$0xff]
        %v1982 = vld [vmem:[%s1966 + $0x78] sm:$0xff]
        %1983 = vmatprep.subr.bf16.mxu0 0
        %1984 = vmatpush1.bf16.msra.mxu0 %v1967
        %1985 = vmatprep.subr.bf16.mxu0 0
        %1986 = vmatpush1.bf16.msra.mxu0 %v1968
        %1987 = vmatprep.subr.bf16.mxu0 0
        %1988 = vmatpush1.bf16.msra.mxu0 %v1969
        %1989 = vmatprep.subr.bf16.mxu0 0
        %1990 = vmatpush1.bf16.msra.mxu0 %v1970
        %1991 = vmatprep.subr.bf16.mxu0 0
        %1992 = vmatpush1.bf16.msra.mxu0 %v1971
        %1993 = vmatprep.subr.bf16.mxu0 0
        %1994 = vmatpush1.bf16.msra.mxu0 %v1972
        %1995 = vmatprep.subr.bf16.mxu0 0
        %1996 = vmatpush1.bf16.msra.mxu0 %v1973
        %1997 = vmatprep.subr.bf16.mxu0 0
        %1998 = vmatpush1.bf16.msra.mxu0 %v1974
        %1999 = vmatprep.subr.bf16.mxu0 0
        %2000 = vmatpush1.bf16.msra.mxu0 %v1975
        %2001 = vmatprep.subr.bf16.mxu0 0
        %2002 = vmatpush1.bf16.msra.mxu0 %v1976
        %2003 = vmatprep.subr.bf16.mxu0 0
        %2004 = vmatpush1.bf16.msra.mxu0 %v1977
        %2005 = vmatprep.subr.bf16.mxu0 0
        %2006 = vmatpush1.bf16.msra.mxu0 %v1978
        %2007 = vmatprep.subr.bf16.mxu0 0
        %2008 = vmatpush1.bf16.msra.mxu0 %v1979
        %2009 = vmatprep.subr.bf16.mxu0 0
        %2010 = vmatpush1.bf16.msra.mxu0 %v1980
        %2011 = vmatprep.subr.bf16.mxu0 0
        %2012 = vmatpush1.bf16.msra.mxu0 %v1981
        %2013 = vmatprep.subr.bf16.mxu0 0
        %2014 = vmatpush1.bf16.msra.mxu0 %v1982
        %2015 = vmatprep.mubr.bf16.mxu0 %v1839
        %2016 = vmatmul.mubr.bf16.gmra.mrb[0].mxu0 %v1838
        %v2017 = vpop.f32.mrb[0].mxu0
        %v2018 = vadd.f32 0.0, %v2017
        %v2019 = vpop.f32.mrb[0].mxu0
        %v2020 = vpop.f32.mrb[0].mxu0
        %v2021 = vadd.f32 0.0, %v2020
        %v2022 = vpop.f32.mrb[0].mxu0
        %2023 = vmatprep.mubr.bf16.mxu0 %v1841
        %2024 = vmatmul.mubr.bf16.gmra.mrb[0].mxu0 %v1840
        %v2025 = vpop.f32.mrb[0].mxu0
        %v2026 = vadd.f32 0.0, %v2025
        %v2027 = vpop.f32.mrb[0].mxu0
        %v2028 = vpop.f32.mrb[0].mxu0
        %v2029 = vadd.f32 0.0, %v2028
        %v2030 = vpop.f32.mrb[0].mxu0
        %2031 = vmatprep.mubr.bf16.mxu0 %v1843
        %2032 = vmatmul.mubr.bf16.gmra.mrb[0].mxu0 %v1842
        %v2033 = vpop.f32.mrb[0].mxu0
        %v2034 = vadd.f32 0.0, %v2033
        %v2035 = vpop.f32.mrb[0].mxu0
        %v2036 = vpop.f32.mrb[0].mxu0
        %v2037 = vadd.f32 0.0, %v2036
        %v2038 = vpop.f32.mrb[0].mxu0
        %2039 = vmatprep.mubr.bf16.mxu0 %v1965
        %2040 = vmatmul.mubr.bf16.gmra.mrb[0].mxu0 %v1964
        %v2041 = vpop.f32.mrb[0].mxu0
        %v2042 = vadd.f32 0.0, %v2041
        %v2043 = vpop.f32.mrb[0].mxu0
        %v2044 = vpop.f32.mrb[0].mxu0
        %v2045 = vadd.f32 0.0, %v2044
        %v2046 = vpop.f32.mrb[0].mxu0
        %2047 = vdwg.mxu0
        %v2048 = vadd.f32 %v1934, %v2018
        %v2049 = vadd.f32 %v1937, %v2021
        %v2050 = vadd.f32 %v1942, %v2026
        %v2051 = vadd.f32 %v1945, %v2029
        %v2052 = vadd.f32 %v1950, %v2034
        %v2053 = vadd.f32 %v1953, %v2037
        %v2054 = vadd.f32 %v1958, %v2042
        %v2055 = vadd.f32 %v1961, %v2045
        %v2056 = vld [vmem:[%s571 + $0x8] sm:$0xf0]
        %v2057 = vld [vmem:[%s571 + $0x10] sm:$0xf0]
        %v2058 = vld [vmem:[%s571 + $0x20] sm:$0xff]
        %v2059 = vld [vmem:[%s571 + $0x28] sm:$0xff]
        %v2060 = vld [vmem:[%s571 + $0x38] sm:$0xff]
        %v2061 = vld [vmem:[%s571 + $0x40] sm:$0xff]
        %v2062 = vld [vmem:[%s571 + $0x50] sm:$0xff]
        %v2063 = vld [vmem:[%s571 + $0x58] sm:$0xff]
        %v2064 = vld [vmem:[%s571 + $0x68] sm:$0xf]
        %v2065 = vld [vmem:[%s571 + $0x70] sm:$0xf]
        %s2066 = scalar_lea.vmem [#allocation3], 1792
        %v2067 = vld [vmem:[%s2066] sm:$0xff]
        %v2068 = vld [vmem:[%s2066 + $0x8] sm:$0xff]
        %v2069 = vld [vmem:[%s2066 + $0x10] sm:$0xff]
        %v2070 = vld [vmem:[%s2066 + $0x18] sm:$0xff]
        %v2071 = vld [vmem:[%s2066 + $0x20] sm:$0xff]
        %v2072 = vld [vmem:[%s2066 + $0x28] sm:$0xff]
        %v2073 = vld [vmem:[%s2066 + $0x30] sm:$0xff]
        %v2074 = vld [vmem:[%s2066 + $0x38] sm:$0xff]
        %v2075 = vld [vmem:[%s2066 + $0x40] sm:$0xff]
        %v2076 = vld [vmem:[%s2066 + $0x48] sm:$0xff]
        %v2077 = vld [vmem:[%s2066 + $0x50] sm:$0xff]
        %v2078 = vld [vmem:[%s2066 + $0x58] sm:$0xff]
        %v2079 = vld [vmem:[%s2066 + $0x60] sm:$0xff]
        %v2080 = vld [vmem:[%s2066 + $0x68] sm:$0xff]
        %v2081 = vld [vmem:[%s2066 + $0x70] sm:$0xff]
        %v2082 = vld [vmem:[%s2066 + $0x78] sm:$0xff]
        %v2093 = vrot.slane %v2056, 4
        %v2094 = vrot.slane %v2058, 4
        %v2095 = vsel %vm468, %v2093, %v2094
        %v2096 = vrot.slane %v2057, 4
        %v2097 = vrot.slane %v2059, 4
        %v2098 = vsel %vm468, %v2096, %v2097
        %v2099 = vrot.slane %v2060, 4
        %v2100 = vsel %vm468, %v2094, %v2099
        %v2101 = vrot.slane %v2061, 4
        %v2102 = vsel %vm468, %v2097, %v2101
        %v2103 = vrot.slane %v2062, 4
        %v2104 = vsel %vm468, %v2099, %v2103
        %v2105 = vrot.slane %v2063, 4
        %v2106 = vsel %vm468, %v2101, %v2105
        %v2107 = vrot.slane %v2064, 4
        %v2108 = vsel %vm468, %v2103, %v2107
        %v2109 = vrot.slane %v2065, 4
        %v2110 = vsel %vm468, %v2105, %v2109
        %2119 = vmatprep.subr.bf16.mxu0 0
        %2120 = vmatpush1.bf16.msra.mxu0 %v2067
        %2121 = vmatprep.subr.bf16.mxu0 0
        %2122 = vmatpush1.bf16.msra.mxu0 %v2068
        %2123 = vmatprep.subr.bf16.mxu0 0
        %2124 = vmatpush1.bf16.msra.mxu0 %v2069
        %2125 = vmatprep.subr.bf16.mxu0 0
        %2126 = vmatpush1.bf16.msra.mxu0 %v2070
        %2127 = vmatprep.subr.bf16.mxu0 0
        %2128 = vmatpush1.bf16.msra.mxu0 %v2071
        %2129 = vmatprep.subr.bf16.mxu0 0
        %2130 = vmatpush1.bf16.msra.mxu0 %v2072
        %2131 = vmatprep.subr.bf16.mxu0 0
        %2132 = vmatpush1.bf16.msra.mxu0 %v2073
        %2133 = vmatprep.subr.bf16.mxu0 0
        %2134 = vmatpush1.bf16.msra.mxu0 %v2074
        %2135 = vmatprep.subr.bf16.mxu0 0
        %2136 = vmatpush1.bf16.msra.mxu0 %v2075
        %2137 = vmatprep.subr.bf16.mxu0 0
        %2138 = vmatpush1.bf16.msra.mxu0 %v2076
        %2139 = vmatprep.subr.bf16.mxu0 0
        %2140 = vmatpush1.bf16.msra.mxu0 %v2077
        %2141 = vmatprep.subr.bf16.mxu0 0
        %2142 = vmatpush1.bf16.msra.mxu0 %v2078
        %2143 = vmatprep.subr.bf16.mxu0 0
        %2144 = vmatpush1.bf16.msra.mxu0 %v2079
        %2145 = vmatprep.subr.bf16.mxu0 0
        %2146 = vmatpush1.bf16.msra.mxu0 %v2080
        %2147 = vmatprep.subr.bf16.mxu0 0
        %2148 = vmatpush1.bf16.msra.mxu0 %v2081
        %2149 = vmatprep.subr.bf16.mxu0 0
        %2150 = vmatpush1.bf16.msra.mxu0 %v2082
        %2151 = vmatprep.mubr.bf16.mxu0 %v2098
        %2152 = vmatmul.mubr.bf16.gmra.mrb[0].mxu0 %v2095
        %v2153 = vpop.f32.mrb[0].mxu0
        %v2154 = vadd.f32 0.0, %v2153
        %v2155 = vpop.f32.mrb[0].mxu0
        %v2156 = vpop.f32.mrb[0].mxu0
        %v2157 = vadd.f32 0.0, %v2156
        %v2158 = vpop.f32.mrb[0].mxu0
        %2159 = vmatprep.mubr.bf16.mxu0 %v2102
        %2160 = vmatmul.mubr.bf16.gmra.mrb[0].mxu0 %v2100
        %v2161 = vpop.f32.mrb[0].mxu0
        %v2162 = vadd.f32 0.0, %v2161
        %v2163 = vpop.f32.mrb[0].mxu0
        %v2164 = vpop.f32.mrb[0].mxu0
        %v2165 = vadd.f32 0.0, %v2164
        %v2166 = vpop.f32.mrb[0].mxu0
        %2167 = vmatprep.mubr.bf16.mxu0 %v2106
        %2168 = vmatmul.mubr.bf16.gmra.mrb[0].mxu0 %v2104
        %v2169 = vpop.f32.mrb[0].mxu0
        %v2170 = vadd.f32 0.0, %v2169
        %v2171 = vpop.f32.mrb[0].mxu0
        %v2172 = vpop.f32.mrb[0].mxu0
        %v2173 = vadd.f32 0.0, %v2172
        %v2174 = vpop.f32.mrb[0].mxu0
        %2175 = vmatprep.mubr.bf16.mxu0 %v2110
        %2176 = vmatmul.mubr.bf16.gmra.mrb[0].mxu0 %v2108
        %v2177 = vpop.f32.mrb[0].mxu0
        %v2178 = vadd.f32 0.0, %v2177
        %v2179 = vpop.f32.mrb[0].mxu0
        %v2180 = vpop.f32.mrb[0].mxu0
        %v2181 = vadd.f32 0.0, %v2180
        %v2182 = vpop.f32.mrb[0].mxu0
        %2183 = vdwg.mxu0
        %v2184 = vadd.f32 %v2048, %v2154
        %v2185 = vadd.f32 %v2049, %v2157
        %v2186 = vadd.f32 %v2050, %v2162
        %v2187 = vadd.f32 %v2051, %v2165
        %v2188 = vadd.f32 %v2052, %v2170
        %v2189 = vadd.f32 %v2053, %v2173
        %v2190 = vadd.f32 %v2054, %v2178
        %v2191 = vadd.f32 %v2055, %v2181
        %v2192 = vld [vmem:[%s571 + $0x68] sm:$0xff]
        %v2193 = vld [vmem:[%s571 + $0x70] sm:$0xff]
        %s2194 = scalar_lea.vmem [#allocation3], 1920
        %v2195 = vld [vmem:[%s2194] sm:$0xff]
        %v2196 = vld [vmem:[%s2194 + $0x8] sm:$0xff]
        %v2197 = vld [vmem:[%s2194 + $0x10] sm:$0xff]
        %v2198 = vld [vmem:[%s2194 + $0x18] sm:$0xff]
        %v2199 = vld [vmem:[%s2194 + $0x20] sm:$0xff]
        %v2200 = vld [vmem:[%s2194 + $0x28] sm:$0xff]
        %v2201 = vld [vmem:[%s2194 + $0x30] sm:$0xff]
        %v2202 = vld [vmem:[%s2194 + $0x38] sm:$0xff]
        %v2203 = vld [vmem:[%s2194 + $0x40] sm:$0xff]
        %v2204 = vld [vmem:[%s2194 + $0x48] sm:$0xff]
        %v2205 = vld [vmem:[%s2194 + $0x50] sm:$0xff]
        %v2206 = vld [vmem:[%s2194 + $0x58] sm:$0xff]
        %v2207 = vld [vmem:[%s2194 + $0x60] sm:$0xff]
        %v2208 = vld [vmem:[%s2194 + $0x68] sm:$0xff]
        %v2209 = vld [vmem:[%s2194 + $0x70] sm:$0xff]
        %v2210 = vld [vmem:[%s2194 + $0x78] sm:$0xff]
        %2211 = vmatprep.subr.bf16.mxu0 0
        %2212 = vmatpush1.bf16.msra.mxu0 %v2195
        %2213 = vmatprep.subr.bf16.mxu0 0
        %2214 = vmatpush1.bf16.msra.mxu0 %v2196
        %2215 = vmatprep.subr.bf16.mxu0 0
        %2216 = vmatpush1.bf16.msra.mxu0 %v2197
        %2217 = vmatprep.subr.bf16.mxu0 0
        %2218 = vmatpush1.bf16.msra.mxu0 %v2198
        %2219 = vmatprep.subr.bf16.mxu0 0
        %2220 = vmatpush1.bf16.msra.mxu0 %v2199
        %2221 = vmatprep.subr.bf16.mxu0 0
        %2222 = vmatpush1.bf16.msra.mxu0 %v2200
        %2223 = vmatprep.subr.bf16.mxu0 0
        %2224 = vmatpush1.bf16.msra.mxu0 %v2201
        %2225 = vmatprep.subr.bf16.mxu0 0
        %2226 = vmatpush1.bf16.msra.mxu0 %v2202
        %2227 = vmatprep.subr.bf16.mxu0 0
        %2228 = vmatpush1.bf16.msra.mxu0 %v2203
        %2229 = vmatprep.subr.bf16.mxu0 0
        %2230 = vmatpush1.bf16.msra.mxu0 %v2204
        %2231 = vmatprep.subr.bf16.mxu0 0
        %2232 = vmatpush1.bf16.msra.mxu0 %v2205
        %2233 = vmatprep.subr.bf16.mxu0 0
        %2234 = vmatpush1.bf16.msra.mxu0 %v2206
        %2235 = vmatprep.subr.bf16.mxu0 0
        %2236 = vmatpush1.bf16.msra.mxu0 %v2207
        %2237 = vmatprep.subr.bf16.mxu0 0
        %2238 = vmatpush1.bf16.msra.mxu0 %v2208
        %2239 = vmatprep.subr.bf16.mxu0 0
        %2240 = vmatpush1.bf16.msra.mxu0 %v2209
        %2241 = vmatprep.subr.bf16.mxu0 0
        %2242 = vmatpush1.bf16.msra.mxu0 %v2210
        %2243 = vmatprep.mubr.bf16.mxu0 %v2059
        %2244 = vmatmul.mubr.bf16.gmra.mrb[0].mxu0 %v2058
        %v2245 = vpop.f32.mrb[0].mxu0
        %v2246 = vadd.f32 0.0, %v2245
        %v2247 = vpop.f32.mrb[0].mxu0
        %v2248 = vpop.f32.mrb[0].mxu0
        %v2249 = vadd.f32 0.0, %v2248
        %v2250 = vpop.f32.mrb[0].mxu0
        %2251 = vmatprep.mubr.bf16.mxu0 %v2061
        %2252 = vmatmul.mubr.bf16.gmra.mrb[0].mxu0 %v2060
        %v2253 = vpop.f32.mrb[0].mxu0
        %v2254 = vadd.f32 0.0, %v2253
        %v2255 = vpop.f32.mrb[0].mxu0
        %v2256 = vpop.f32.mrb[0].mxu0
        %v2257 = vadd.f32 0.0, %v2256
        %v2258 = vpop.f32.mrb[0].mxu0
        %2259 = vmatprep.mubr.bf16.mxu0 %v2063
        %2260 = vmatmul.mubr.bf16.gmra.mrb[0].mxu0 %v2062
        %v2261 = vpop.f32.mrb[0].mxu0
        %v2262 = vadd.f32 0.0, %v2261
        %v2263 = vpop.f32.mrb[0].mxu0
        %v2264 = vpop.f32.mrb[0].mxu0
        %v2265 = vadd.f32 0.0, %v2264
        %v2266 = vpop.f32.mrb[0].mxu0
        %2267 = vmatprep.mubr.bf16.mxu0 %v2193
        %2268 = vmatmul.mubr.bf16.gmra.mrb[0].mxu0 %v2192
        %v2269 = vpop.f32.mrb[0].mxu0
        %v2270 = vadd.f32 0.0, %v2269
        %v2271 = vpop.f32.mrb[0].mxu0
        %v2272 = vpop.f32.mrb[0].mxu0
        %v2273 = vadd.f32 0.0, %v2272
        %v2274 = vpop.f32.mrb[0].mxu0
        %2275 = vdwg.mxu0
        %v2276 = vadd.f32 %v2184, %v2246
        %v2277 = vadd.f32 %v2185, %v2249
        %v2278 = vadd.f32 %v2186, %v2254
        %v2279 = vadd.f32 %v2187, %v2257
        %v2280 = vadd.f32 %v2188, %v2262
        %v2281 = vadd.f32 %v2189, %v2265
        %v2282 = vadd.f32 %v2190, %v2270
        %v2283 = vadd.f32 %v2191, %v2273
        %v2284 = vpack.c.bf16 %v2277, %v2276
        %v2285 = vpack.c.bf16 %v2279, %v2278
        %v2286 = vpack.c.bf16 %v2281, %v2280
        %v2287 = vpack.c.bf16 %v2283, %v2282
        %v2292 = vunpack.c.l.b16 %v2284
        %v2293 = vunpack.c.h.b16 %v2284
        %v2294 = vunpack.c.l.b16 %v2285
        %v2295 = vunpack.c.h.b16 %v2285
        %v2296 = vunpack.c.l.b16 %v2286
        %v2297 = vunpack.c.h.b16 %v2286
        %v2298 = vunpack.c.l.b16 %v2287
        %v2299 = vunpack.c.h.b16 %v2287
        %v2300 = vpack.c.b16 %v2292, %v2292
        %v2301 = vpack.c.b16 %v2293, %v2293
        %v2302 = vpack.c.b16 %v2294, %v2294
        %v2303 = vpack.c.b16 %v2295, %v2295
        %v2304 = vpack.c.b16 %v2296, %v2296
        %v2305 = vpack.c.b16 %v2297, %v2297
        %v2306 = vpack.c.b16 %v2298, %v2298
        %v2307 = vpack.c.b16 %v2299, %v2299
        %s2316 = scalar_lea.vmem %s123, 96 [#allocation8]
        %2317 = vst [vmem:[%s2316] sm:$0xf] %v2300
        %2318 = vst [vmem:[%s2316 + $0x4] sm:$0xf] %v2301
        %2319 = vst [vmem:[%s2316 + $0x8] sm:$0xf] %v2302
        %2320 = vst [vmem:[%s2316 + $0xc] sm:$0xf] %v2303
        %2321 = vst [vmem:[%s2316 + $0x10] sm:$0xf] %v2304
        %2322 = vst [vmem:[%s2316 + $0x14] sm:$0xf] %v2305
        %2323 = vst [vmem:[%s2316 + $0x18] sm:$0xf] %v2306
        %2324 = vst [vmem:[%s2316 + $0x1c] sm:$0xf] %v2307
        %v2325 = vld [vmem:[%s571] sm:$0xff]
        %v2326 = vld [vmem:[%s571 + $0x8] sm:$0xff]
        %v2327 = vld [vmem:[%s571 + $0x18] sm:$0xff]
        %v2328 = vld [vmem:[%s571 + $0x20] sm:$0xff]
        %v2329 = vld [vmem:[%s571 + $0x30] sm:$0xff]
        %v2330 = vld [vmem:[%s571 + $0x38] sm:$0xff]
        %v2331 = vld [vmem:[%s571 + $0x48] sm:$0xff]
        %v2332 = vld [vmem:[%s571 + $0x50] sm:$0xff]
        %s2333 = scalar_lea.vmem [#allocation3], 2048
        %v2334 = vld [vmem:[%s2333] sm:$0xff]
        %v2335 = vld [vmem:[%s2333 + $0x8] sm:$0xff]
        %v2336 = vld [vmem:[%s2333 + $0x10] sm:$0xff]
        %v2337 = vld [vmem:[%s2333 + $0x18] sm:$0xff]
        %v2338 = vld [vmem:[%s2333 + $0x20] sm:$0xff]
        %v2339 = vld [vmem:[%s2333 + $0x28] sm:$0xff]
        %v2340 = vld [vmem:[%s2333 + $0x30] sm:$0xff]
        %v2341 = vld [vmem:[%s2333 + $0x38] sm:$0xff]
        %v2342 = vld [vmem:[%s2333 + $0x40] sm:$0xff]
        %v2343 = vld [vmem:[%s2333 + $0x48] sm:$0xff]
        %v2344 = vld [vmem:[%s2333 + $0x50] sm:$0xff]
        %v2345 = vld [vmem:[%s2333 + $0x58] sm:$0xff]
        %v2346 = vld [vmem:[%s2333 + $0x60] sm:$0xff]
        %v2347 = vld [vmem:[%s2333 + $0x68] sm:$0xff]
        %v2348 = vld [vmem:[%s2333 + $0x70] sm:$0xff]
        %v2349 = vld [vmem:[%s2333 + $0x78] sm:$0xff]
        %2350 = vmatprep.subr.bf16.mxu0 0
        %2351 = vmatpush1.bf16.msra.mxu0 %v2334
        %2352 = vmatprep.subr.bf16.mxu0 0
        %2353 = vmatpush1.bf16.msra.mxu0 %v2335
        %2354 = vmatprep.subr.bf16.mxu0 0
        %2355 = vmatpush1.bf16.msra.mxu0 %v2336
        %2356 = vmatprep.subr.bf16.mxu0 0
        %2357 = vmatpush1.bf16.msra.mxu0 %v2337
        %2358 = vmatprep.subr.bf16.mxu0 0
        %2359 = vmatpush1.bf16.msra.mxu0 %v2338
        %2360 = vmatprep.subr.bf16.mxu0 0
        %2361 = vmatpush1.bf16.msra.mxu0 %v2339
        %2362 = vmatprep.subr.bf16.mxu0 0
        %2363 = vmatpush1.bf16.msra.mxu0 %v2340
        %2364 = vmatprep.subr.bf16.mxu0 0
        %2365 = vmatpush1.bf16.msra.mxu0 %v2341
        %2366 = vmatprep.subr.bf16.mxu0 0
        %2367 = vmatpush1.bf16.msra.mxu0 %v2342
        %2368 = vmatprep.subr.bf16.mxu0 0
        %2369 = vmatpush1.bf16.msra.mxu0 %v2343
        %2370 = vmatprep.subr.bf16.mxu0 0
        %2371 = vmatpush1.bf16.msra.mxu0 %v2344
        %2372 = vmatprep.subr.bf16.mxu0 0
        %2373 = vmatpush1.bf16.msra.mxu0 %v2345
        %2374 = vmatprep.subr.bf16.mxu0 0
        %2375 = vmatpush1.bf16.msra.mxu0 %v2346
        %2376 = vmatprep.subr.bf16.mxu0 0
        %2377 = vmatpush1.bf16.msra.mxu0 %v2347
        %2378 = vmatprep.subr.bf16.mxu0 0
        %2379 = vmatpush1.bf16.msra.mxu0 %v2348
        %2380 = vmatprep.subr.bf16.mxu0 0
        %2381 = vmatpush1.bf16.msra.mxu0 %v2349
        %2382 = vmatprep.mubr.bf16.mxu0 %v2326
        %2383 = vmatmul.mubr.bf16.gmra.mrb[0].mxu0 %v2325
        %v2384 = vpop.f32.mrb[0].mxu0
        %v2385 = vadd.f32 %v364, %v2384
        %v2386 = vpop.f32.mrb[0].mxu0
        %v2387 = vpop.f32.mrb[0].mxu0
        %v2388 = vadd.f32 %v364, %v2387
        %v2389 = vpop.f32.mrb[0].mxu0
        %2390 = vmatprep.mubr.bf16.mxu0 %v2328
        %2391 = vmatmul.mubr.bf16.gmra.mrb[0].mxu0 %v2327
        %v2392 = vpop.f32.mrb[0].mxu0
        %v2393 = vadd.f32 %v364, %v2392
        %v2394 = vpop.f32.mrb[0].mxu0
        %v2395 = vpop.f32.mrb[0].mxu0
        %v2396 = vadd.f32 %v364, %v2395
        %v2397 = vpop.f32.mrb[0].mxu0
        %2398 = vmatprep.mubr.bf16.mxu0 %v2330
        %2399 = vmatmul.mubr.bf16.gmra.mrb[0].mxu0 %v2329
        %v2400 = vpop.f32.mrb[0].mxu0
        %v2401 = vadd.f32 %v364, %v2400
        %v2402 = vpop.f32.mrb[0].mxu0
        %v2403 = vpop.f32.mrb[0].mxu0
        %v2404 = vadd.f32 %v364, %v2403
        %v2405 = vpop.f32.mrb[0].mxu0
        %2406 = vmatprep.mubr.bf16.mxu0 %v2332
        %2407 = vmatmul.mubr.bf16.gmra.mrb[0].mxu0 %v2331
        %v2408 = vpop.f32.mrb[0].mxu0
        %v2409 = vadd.f32 %v364, %v2408
        %v2410 = vpop.f32.mrb[0].mxu0
        %v2411 = vpop.f32.mrb[0].mxu0
        %v2412 = vadd.f32 %v364, %v2411
        %v2413 = vpop.f32.mrb[0].mxu0
        %2414 = vdwg.mxu0
        %v2415 = vld [vmem:[%s571] sm:$0xf0]
        %v2416 = vld [vmem:[%s571 + $0x8] sm:$0xf0]
        %v2417 = vld [vmem:[%s571 + $0x18] sm:$0xff]
        %v2418 = vld [vmem:[%s571 + $0x20] sm:$0xff]
        %v2419 = vld [vmem:[%s571 + $0x30] sm:$0xff]
        %v2420 = vld [vmem:[%s571 + $0x38] sm:$0xff]
        %v2421 = vld [vmem:[%s571 + $0x48] sm:$0xff]
        %v2422 = vld [vmem:[%s571 + $0x50] sm:$0xff]
        %v2423 = vld [vmem:[%s571 + $0x60] sm:$0xf]
        %v2424 = vld [vmem:[%s571 + $0x68] sm:$0xf]
        %s2425 = scalar_lea.vmem [#allocation3], 2176
        %v2426 = vld [vmem:[%s2425] sm:$0xff]
        %v2427 = vld [vmem:[%s2425 + $0x8] sm:$0xff]
        %v2428 = vld [vmem:[%s2425 + $0x10] sm:$0xff]
        %v2429 = vld [vmem:[%s2425 + $0x18] sm:$0xff]
        %v2430 = vld [vmem:[%s2425 + $0x20] sm:$0xff]
        %v2431 = vld [vmem:[%s2425 + $0x28] sm:$0xff]
        %v2432 = vld [vmem:[%s2425 + $0x30] sm:$0xff]
        %v2433 = vld [vmem:[%s2425 + $0x38] sm:$0xff]
        %v2434 = vld [vmem:[%s2425 + $0x40] sm:$0xff]
        %v2435 = vld [vmem:[%s2425 + $0x48] sm:$0xff]
        %v2436 = vld [vmem:[%s2425 + $0x50] sm:$0xff]
        %v2437 = vld [vmem:[%s2425 + $0x58] sm:$0xff]
        %v2438 = vld [vmem:[%s2425 + $0x60] sm:$0xff]
        %v2439 = vld [vmem:[%s2425 + $0x68] sm:$0xff]
        %v2440 = vld [vmem:[%s2425 + $0x70] sm:$0xff]
        %v2441 = vld [vmem:[%s2425 + $0x78] sm:$0xff]
        %v2452 = vrot.slane %v2415, 4
        %v2453 = vrot.slane %v2417, 4
        %v2454 = vsel %vm468, %v2452, %v2453
        %v2455 = vrot.slane %v2416, 4
        %v2456 = vrot.slane %v2418, 4
        %v2457 = vsel %vm468, %v2455, %v2456
        %v2458 = vrot.slane %v2419, 4
        %v2459 = vsel %vm468, %v2453, %v2458
        %v2460 = vrot.slane %v2420, 4
        %v2461 = vsel %vm468, %v2456, %v2460
        %v2462 = vrot.slane %v2421, 4
        %v2463 = vsel %vm468, %v2458, %v2462
        %v2464 = vrot.slane %v2422, 4
        %v2465 = vsel %vm468, %v2460, %v2464
        %v2466 = vrot.slane %v2423, 4
        %v2467 = vsel %vm468, %v2462, %v2466
        %v2468 = vrot.slane %v2424, 4
        %v2469 = vsel %vm468, %v2464, %v2468
        %2478 = vmatprep.subr.bf16.mxu0 0
        %2479 = vmatpush1.bf16.msra.mxu0 %v2426
        %2480 = vmatprep.subr.bf16.mxu0 0
        %2481 = vmatpush1.bf16.msra.mxu0 %v2427
        %2482 = vmatprep.subr.bf16.mxu0 0
        %2483 = vmatpush1.bf16.msra.mxu0 %v2428
        %2484 = vmatprep.subr.bf16.mxu0 0
        %2485 = vmatpush1.bf16.msra.mxu0 %v2429
        %2486 = vmatprep.subr.bf16.mxu0 0
        %2487 = vmatpush1.bf16.msra.mxu0 %v2430
        %2488 = vmatprep.subr.bf16.mxu0 0
        %2489 = vmatpush1.bf16.msra.mxu0 %v2431
        %2490 = vmatprep.subr.bf16.mxu0 0
        %2491 = vmatpush1.bf16.msra.mxu0 %v2432
        %2492 = vmatprep.subr.bf16.mxu0 0
        %2493 = vmatpush1.bf16.msra.mxu0 %v2433
        %2494 = vmatprep.subr.bf16.mxu0 0
        %2495 = vmatpush1.bf16.msra.mxu0 %v2434
        %2496 = vmatprep.subr.bf16.mxu0 0
        %2497 = vmatpush1.bf16.msra.mxu0 %v2435
        %2498 = vmatprep.subr.bf16.mxu0 0
        %2499 = vmatpush1.bf16.msra.mxu0 %v2436
        %2500 = vmatprep.subr.bf16.mxu0 0
        %2501 = vmatpush1.bf16.msra.mxu0 %v2437
        %2502 = vmatprep.subr.bf16.mxu0 0
        %2503 = vmatpush1.bf16.msra.mxu0 %v2438
        %2504 = vmatprep.subr.bf16.mxu0 0
        %2505 = vmatpush1.bf16.msra.mxu0 %v2439
        %2506 = vmatprep.subr.bf16.mxu0 0
        %2507 = vmatpush1.bf16.msra.mxu0 %v2440
        %2508 = vmatprep.subr.bf16.mxu0 0
        %2509 = vmatpush1.bf16.msra.mxu0 %v2441
        %2510 = vmatprep.mubr.bf16.mxu0 %v2457
        %2511 = vmatmul.mubr.bf16.gmra.mrb[0].mxu0 %v2454
        %v2512 = vpop.f32.mrb[0].mxu0
        %v2513 = vadd.f32 0.0, %v2512
        %v2514 = vpop.f32.mrb[0].mxu0
        %v2515 = vpop.f32.mrb[0].mxu0
        %v2516 = vadd.f32 0.0, %v2515
        %v2517 = vpop.f32.mrb[0].mxu0
        %2518 = vmatprep.mubr.bf16.mxu0 %v2461
        %2519 = vmatmul.mubr.bf16.gmra.mrb[0].mxu0 %v2459
        %v2520 = vpop.f32.mrb[0].mxu0
        %v2521 = vadd.f32 0.0, %v2520
        %v2522 = vpop.f32.mrb[0].mxu0
        %v2523 = vpop.f32.mrb[0].mxu0
        %v2524 = vadd.f32 0.0, %v2523
        %v2525 = vpop.f32.mrb[0].mxu0
        %2526 = vmatprep.mubr.bf16.mxu0 %v2465
        %2527 = vmatmul.mubr.bf16.gmra.mrb[0].mxu0 %v2463
        %v2528 = vpop.f32.mrb[0].mxu0
        %v2529 = vadd.f32 0.0, %v2528
        %v2530 = vpop.f32.mrb[0].mxu0
        %v2531 = vpop.f32.mrb[0].mxu0
        %v2532 = vadd.f32 0.0, %v2531
        %v2533 = vpop.f32.mrb[0].mxu0
        %2534 = vmatprep.mubr.bf16.mxu0 %v2469
        %2535 = vmatmul.mubr.bf16.gmra.mrb[0].mxu0 %v2467
        %v2536 = vpop.f32.mrb[0].mxu0
        %v2537 = vadd.f32 0.0, %v2536
        %v2538 = vpop.f32.mrb[0].mxu0
        %v2539 = vpop.f32.mrb[0].mxu0
        %v2540 = vadd.f32 0.0, %v2539
        %v2541 = vpop.f32.mrb[0].mxu0
        %2542 = vdwg.mxu0
        %v2543 = vadd.f32 %v2385, %v2513
        %v2544 = vadd.f32 %v2388, %v2516
        %v2545 = vadd.f32 %v2393, %v2521
        %v2546 = vadd.f32 %v2396, %v2524
        %v2547 = vadd.f32 %v2401, %v2529
        %v2548 = vadd.f32 %v2404, %v2532
        %v2549 = vadd.f32 %v2409, %v2537
        %v2550 = vadd.f32 %v2412, %v2540
        %v2551 = vld [vmem:[%s274] sm:$0xff]
        %v2552 = vld [vmem:[%s274 + $0x8] sm:$0xff]
        %v2553 = vld [vmem:[%s274 + $0x18] sm:$0xff]
        %v2554 = vld [vmem:[%s274 + $0x20] sm:$0xff]
        %v2555 = vld [vmem:[%s274 + $0x30] sm:$0xff]
        %v2556 = vld [vmem:[%s274 + $0x38] sm:$0xff]
        %v2557 = vld [vmem:[%s274 + $0x48] sm:$0xff]
        %v2558 = vld [vmem:[%s274 + $0x50] sm:$0xff]
        %s2559 = scalar_lea.vmem [#allocation3], 2304
        %v2560 = vld [vmem:[%s2559] sm:$0xff]
        %v2561 = vld [vmem:[%s2559 + $0x8] sm:$0xff]
        %v2562 = vld [vmem:[%s2559 + $0x10] sm:$0xff]
        %v2563 = vld [vmem:[%s2559 + $0x18] sm:$0xff]
        %v2564 = vld [vmem:[%s2559 + $0x20] sm:$0xff]
        %v2565 = vld [vmem:[%s2559 + $0x28] sm:$0xff]
        %v2566 = vld [vmem:[%s2559 + $0x30] sm:$0xff]
        %v2567 = vld [vmem:[%s2559 + $0x38] sm:$0xff]
        %v2568 = vld [vmem:[%s2559 + $0x40] sm:$0xff]
        %v2569 = vld [vmem:[%s2559 + $0x48] sm:$0xff]
        %v2570 = vld [vmem:[%s2559 + $0x50] sm:$0xff]
        %v2571 = vld [vmem:[%s2559 + $0x58] sm:$0xff]
        %v2572 = vld [vmem:[%s2559 + $0x60] sm:$0xff]
        %v2573 = vld [vmem:[%s2559 + $0x68] sm:$0xff]
        %v2574 = vld [vmem:[%s2559 + $0x70] sm:$0xff]
        %v2575 = vld [vmem:[%s2559 + $0x78] sm:$0xff]
        %2576 = vmatprep.subr.bf16.mxu0 0
        %2577 = vmatpush1.bf16.msra.mxu0 %v2560
        %2578 = vmatprep.subr.bf16.mxu0 0
        %2579 = vmatpush1.bf16.msra.mxu0 %v2561
        %2580 = vmatprep.subr.bf16.mxu0 0
        %2581 = vmatpush1.bf16.msra.mxu0 %v2562
        %2582 = vmatprep.subr.bf16.mxu0 0
        %2583 = vmatpush1.bf16.msra.mxu0 %v2563
        %2584 = vmatprep.subr.bf16.mxu0 0
        %2585 = vmatpush1.bf16.msra.mxu0 %v2564
        %2586 = vmatprep.subr.bf16.mxu0 0
        %2587 = vmatpush1.bf16.msra.mxu0 %v2565
        %2588 = vmatprep.subr.bf16.mxu0 0
        %2589 = vmatpush1.bf16.msra.mxu0 %v2566
        %2590 = vmatprep.subr.bf16.mxu0 0
        %2591 = vmatpush1.bf16.msra.mxu0 %v2567
        %2592 = vmatprep.subr.bf16.mxu0 0
        %2593 = vmatpush1.bf16.msra.mxu0 %v2568
        %2594 = vmatprep.subr.bf16.mxu0 0
        %2595 = vmatpush1.bf16.msra.mxu0 %v2569
        %2596 = vmatprep.subr.bf16.mxu0 0
        %2597 = vmatpush1.bf16.msra.mxu0 %v2570
        %2598 = vmatprep.subr.bf16.mxu0 0
        %2599 = vmatpush1.bf16.msra.mxu0 %v2571
        %2600 = vmatprep.subr.bf16.mxu0 0
        %2601 = vmatpush1.bf16.msra.mxu0 %v2572
        %2602 = vmatprep.subr.bf16.mxu0 0
        %2603 = vmatpush1.bf16.msra.mxu0 %v2573
        %2604 = vmatprep.subr.bf16.mxu0 0
        %2605 = vmatpush1.bf16.msra.mxu0 %v2574
        %2606 = vmatprep.subr.bf16.mxu0 0
        %2607 = vmatpush1.bf16.msra.mxu0 %v2575
        %2608 = vmatprep.mubr.bf16.mxu0 %v2552
        %2609 = vmatmul.mubr.bf16.gmra.mrb[0].mxu0 %v2551
        %v2610 = vpop.f32.mrb[0].mxu0
        %v2611 = vadd.f32 0.0, %v2610
        %v2612 = vpop.f32.mrb[0].mxu0
        %v2613 = vpop.f32.mrb[0].mxu0
        %v2614 = vadd.f32 0.0, %v2613
        %v2615 = vpop.f32.mrb[0].mxu0
        %2616 = vmatprep.mubr.bf16.mxu0 %v2554
        %2617 = vmatmul.mubr.bf16.gmra.mrb[0].mxu0 %v2553
        %v2618 = vpop.f32.mrb[0].mxu0
        %v2619 = vadd.f32 0.0, %v2618
        %v2620 = vpop.f32.mrb[0].mxu0
        %v2621 = vpop.f32.mrb[0].mxu0
        %v2622 = vadd.f32 0.0, %v2621
        %v2623 = vpop.f32.mrb[0].mxu0
        %2624 = vmatprep.mubr.bf16.mxu0 %v2556
        %2625 = vmatmul.mubr.bf16.gmra.mrb[0].mxu0 %v2555
        %v2626 = vpop.f32.mrb[0].mxu0
        %v2627 = vadd.f32 0.0, %v2626
        %v2628 = vpop.f32.mrb[0].mxu0
        %v2629 = vpop.f32.mrb[0].mxu0
        %v2630 = vadd.f32 0.0, %v2629
        %v2631 = vpop.f32.mrb[0].mxu0
        %2632 = vmatprep.mubr.bf16.mxu0 %v2558
        %2633 = vmatmul.mubr.bf16.gmra.mrb[0].mxu0 %v2557
        %v2634 = vpop.f32.mrb[0].mxu0
        %v2635 = vadd.f32 0.0, %v2634
        %v2636 = vpop.f32.mrb[0].mxu0
        %v2637 = vpop.f32.mrb[0].mxu0
        %v2638 = vadd.f32 0.0, %v2637
        %v2639 = vpop.f32.mrb[0].mxu0
        %2640 = vdwg.mxu0
        %v2641 = vadd.f32 %v2543, %v2611
        %v2642 = vadd.f32 %v2544, %v2614
        %v2643 = vadd.f32 %v2545, %v2619
        %v2644 = vadd.f32 %v2546, %v2622
        %v2645 = vadd.f32 %v2547, %v2627
        %v2646 = vadd.f32 %v2548, %v2630
        %v2647 = vadd.f32 %v2549, %v2635
        %v2648 = vadd.f32 %v2550, %v2638
        %v2649 = vld [vmem:[%s274] sm:$0xf0]
        %v2650 = vld [vmem:[%s274 + $0x8] sm:$0xf0]
        %v2651 = vld [vmem:[%s274 + $0x18] sm:$0xff]
        %v2652 = vld [vmem:[%s274 + $0x20] sm:$0xff]
        %v2653 = vld [vmem:[%s274 + $0x30] sm:$0xff]
        %v2654 = vld [vmem:[%s274 + $0x38] sm:$0xff]
        %v2655 = vld [vmem:[%s274 + $0x48] sm:$0xff]
        %v2656 = vld [vmem:[%s274 + $0x50] sm:$0xff]
        %v2657 = vld [vmem:[%s274 + $0x60] sm:$0xf]
        %v2658 = vld [vmem:[%s274 + $0x68] sm:$0xf]
        %s2659 = scalar_lea.vmem [#allocation3], 2432
        %v2660 = vld [vmem:[%s2659] sm:$0xff]
        %v2661 = vld [vmem:[%s2659 + $0x8] sm:$0xff]
        %v2662 = vld [vmem:[%s2659 + $0x10] sm:$0xff]
        %v2663 = vld [vmem:[%s2659 + $0x18] sm:$0xff]
        %v2664 = vld [vmem:[%s2659 + $0x20] sm:$0xff]
        %v2665 = vld [vmem:[%s2659 + $0x28] sm:$0xff]
        %v2666 = vld [vmem:[%s2659 + $0x30] sm:$0xff]
        %v2667 = vld [vmem:[%s2659 + $0x38] sm:$0xff]
        %v2668 = vld [vmem:[%s2659 + $0x40] sm:$0xff]
        %v2669 = vld [vmem:[%s2659 + $0x48] sm:$0xff]
        %v2670 = vld [vmem:[%s2659 + $0x50] sm:$0xff]
        %v2671 = vld [vmem:[%s2659 + $0x58] sm:$0xff]
        %v2672 = vld [vmem:[%s2659 + $0x60] sm:$0xff]
        %v2673 = vld [vmem:[%s2659 + $0x68] sm:$0xff]
        %v2674 = vld [vmem:[%s2659 + $0x70] sm:$0xff]
        %v2675 = vld [vmem:[%s2659 + $0x78] sm:$0xff]
        %v2686 = vrot.slane %v2649, 4
        %v2687 = vrot.slane %v2651, 4
        %v2688 = vsel %vm468, %v2686, %v2687
        %v2689 = vrot.slane %v2650, 4
        %v2690 = vrot.slane %v2652, 4
        %v2691 = vsel %vm468, %v2689, %v2690
        %v2692 = vrot.slane %v2653, 4
        %v2693 = vsel %vm468, %v2687, %v2692
        %v2694 = vrot.slane %v2654, 4
        %v2695 = vsel %vm468, %v2690, %v2694
        %v2696 = vrot.slane %v2655, 4
        %v2697 = vsel %vm468, %v2692, %v2696
        %v2698 = vrot.slane %v2656, 4
        %v2699 = vsel %vm468, %v2694, %v2698
        %v2700 = vrot.slane %v2657, 4
        %v2701 = vsel %vm468, %v2696, %v2700
        %v2702 = vrot.slane %v2658, 4
        %v2703 = vsel %vm468, %v2698, %v2702
        %2712 = vmatprep.subr.bf16.mxu0 0
        %2713 = vmatpush1.bf16.msra.mxu0 %v2660
        %2714 = vmatprep.subr.bf16.mxu0 0
        %2715 = vmatpush1.bf16.msra.mxu0 %v2661
        %2716 = vmatprep.subr.bf16.mxu0 0
        %2717 = vmatpush1.bf16.msra.mxu0 %v2662
        %2718 = vmatprep.subr.bf16.mxu0 0
        %2719 = vmatpush1.bf16.msra.mxu0 %v2663
        %2720 = vmatprep.subr.bf16.mxu0 0
        %2721 = vmatpush1.bf16.msra.mxu0 %v2664
        %2722 = vmatprep.subr.bf16.mxu0 0
        %2723 = vmatpush1.bf16.msra.mxu0 %v2665
        %2724 = vmatprep.subr.bf16.mxu0 0
        %2725 = vmatpush1.bf16.msra.mxu0 %v2666
        %2726 = vmatprep.subr.bf16.mxu0 0
        %2727 = vmatpush1.bf16.msra.mxu0 %v2667
        %2728 = vmatprep.subr.bf16.mxu0 0
        %2729 = vmatpush1.bf16.msra.mxu0 %v2668
        %2730 = vmatprep.subr.bf16.mxu0 0
        %2731 = vmatpush1.bf16.msra.mxu0 %v2669
        %2732 = vmatprep.subr.bf16.mxu0 0
        %2733 = vmatpush1.bf16.msra.mxu0 %v2670
        %2734 = vmatprep.subr.bf16.mxu0 0
        %2735 = vmatpush1.bf16.msra.mxu0 %v2671
        %2736 = vmatprep.subr.bf16.mxu0 0
        %2737 = vmatpush1.bf16.msra.mxu0 %v2672
        %2738 = vmatprep.subr.bf16.mxu0 0
        %2739 = vmatpush1.bf16.msra.mxu0 %v2673
        %2740 = vmatprep.subr.bf16.mxu0 0
        %2741 = vmatpush1.bf16.msra.mxu0 %v2674
        %2742 = vmatprep.subr.bf16.mxu0 0
        %2743 = vmatpush1.bf16.msra.mxu0 %v2675
        %2744 = vmatprep.mubr.bf16.mxu0 %v2691
        %2745 = vmatmul.mubr.bf16.gmra.mrb[0].mxu0 %v2688
        %v2746 = vpop.f32.mrb[0].mxu0
        %v2747 = vadd.f32 0.0, %v2746
        %v2748 = vpop.f32.mrb[0].mxu0
        %v2749 = vpop.f32.mrb[0].mxu0
        %v2750 = vadd.f32 0.0, %v2749
        %v2751 = vpop.f32.mrb[0].mxu0
        %2752 = vmatprep.mubr.bf16.mxu0 %v2695
        %2753 = vmatmul.mubr.bf16.gmra.mrb[0].mxu0 %v2693
        %v2754 = vpop.f32.mrb[0].mxu0
        %v2755 = vadd.f32 0.0, %v2754
        %v2756 = vpop.f32.mrb[0].mxu0
        %v2757 = vpop.f32.mrb[0].mxu0
        %v2758 = vadd.f32 0.0, %v2757
        %v2759 = vpop.f32.mrb[0].mxu0
        %2760 = vmatprep.mubr.bf16.mxu0 %v2699
        %2761 = vmatmul.mubr.bf16.gmra.mrb[0].mxu0 %v2697
        %v2762 = vpop.f32.mrb[0].mxu0
        %v2763 = vadd.f32 0.0, %v2762
        %v2764 = vpop.f32.mrb[0].mxu0
        %v2765 = vpop.f32.mrb[0].mxu0
        %v2766 = vadd.f32 0.0, %v2765
        %v2767 = vpop.f32.mrb[0].mxu0
        %2768 = vmatprep.mubr.bf16.mxu0 %v2703
        %2769 = vmatmul.mubr.bf16.gmra.mrb[0].mxu0 %v2701
        %v2770 = vpop.f32.mrb[0].mxu0
        %v2771 = vadd.f32 0.0, %v2770
        %v2772 = vpop.f32.mrb[0].mxu0
        %v2773 = vpop.f32.mrb[0].mxu0
        %v2774 = vadd.f32 0.0, %v2773
        %v2775 = vpop.f32.mrb[0].mxu0
        %2776 = vdwg.mxu0
        %v2777 = vadd.f32 %v2641, %v2747
        %v2778 = vadd.f32 %v2642, %v2750
        %v2779 = vadd.f32 %v2643, %v2755
        %v2780 = vadd.f32 %v2644, %v2758
        %v2781 = vadd.f32 %v2645, %v2763
        %v2782 = vadd.f32 %v2646, %v2766
        %v2783 = vadd.f32 %v2647, %v2771
        %v2784 = vadd.f32 %v2648, %v2774
        %v2785 = vpack.c.bf16 %v2778, %v2777
        %v2786 = vpack.c.bf16 %v2780, %v2779
        %v2787 = vpack.c.bf16 %v2782, %v2781
        %v2788 = vpack.c.bf16 %v2784, %v2783
        %v2793 = vunpack.c.l.b16 %v2785
        %v2794 = vunpack.c.h.b16 %v2785
        %v2795 = vunpack.c.l.b16 %v2786
        %v2796 = vunpack.c.h.b16 %v2786
        %v2797 = vunpack.c.l.b16 %v2787
        %v2798 = vunpack.c.h.b16 %v2787
        %v2799 = vunpack.c.l.b16 %v2788
        %v2800 = vunpack.c.h.b16 %v2788
        %v2801 = vpack.c.b16 %v2793, %v2793
        %v2802 = vpack.c.b16 %v2794, %v2794
        %v2803 = vpack.c.b16 %v2795, %v2795
        %v2804 = vpack.c.b16 %v2796, %v2796
        %v2805 = vpack.c.b16 %v2797, %v2797
        %v2806 = vpack.c.b16 %v2798, %v2798
        %v2807 = vpack.c.b16 %v2799, %v2799
        %v2808 = vpack.c.b16 %v2800, %v2800
        %s2817 = scalar_lea.vmem %s123, 128 [#allocation8]
        %2818 = vst [vmem:[%s2817] sm:$0xf] %v2801
        %2819 = vst [vmem:[%s2817 + $0x4] sm:$0xf] %v2802
        %2820 = vst [vmem:[%s2817 + $0x8] sm:$0xf] %v2803
        %2821 = vst [vmem:[%s2817 + $0xc] sm:$0xf] %v2804
        %2822 = vst [vmem:[%s2817 + $0x10] sm:$0xf] %v2805
        %2823 = vst [vmem:[%s2817 + $0x14] sm:$0xf] %v2806
        %2824 = vst [vmem:[%s2817 + $0x18] sm:$0xf] %v2807
        %2825 = vst [vmem:[%s2817 + $0x1c] sm:$0xf] %v2808
        %v2826 = vld [vmem:[%s571 + $0x8] sm:$0xff]
        %v2827 = vld [vmem:[%s571 + $0x10] sm:$0xff]
        %v2828 = vld [vmem:[%s571 + $0x20] sm:$0xff]
        %v2829 = vld [vmem:[%s571 + $0x28] sm:$0xff]
        %v2830 = vld [vmem:[%s571 + $0x38] sm:$0xff]
        %v2831 = vld [vmem:[%s571 + $0x40] sm:$0xff]
        %v2832 = vld [vmem:[%s571 + $0x50] sm:$0xff]
        %v2833 = vld [vmem:[%s571 + $0x58] sm:$0xff]
        %s2834 = scalar_lea.vmem [#allocation3], 2560
        %v2835 = vld [vmem:[%s2834] sm:$0xff]
        %v2836 = vld [vmem:[%s2834 + $0x8] sm:$0xff]
        %v2837 = vld [vmem:[%s2834 + $0x10] sm:$0xff]
        %v2838 = vld [vmem:[%s2834 + $0x18] sm:$0xff]
        %v2839 = vld [vmem:[%s2834 + $0x20] sm:$0xff]
        %v2840 = vld [vmem:[%s2834 + $0x28] sm:$0xff]
        %v2841 = vld [vmem:[%s2834 + $0x30] sm:$0xff]
        %v2842 = vld [vmem:[%s2834 + $0x38] sm:$0xff]
        %v2843 = vld [vmem:[%s2834 + $0x40] sm:$0xff]
        %v2844 = vld [vmem:[%s2834 + $0x48] sm:$0xff]
        %v2845 = vld [vmem:[%s2834 + $0x50] sm:$0xff]
        %v2846 = vld [vmem:[%s2834 + $0x58] sm:$0xff]
        %v2847 = vld [vmem:[%s2834 + $0x60] sm:$0xff]
        %v2848 = vld [vmem:[%s2834 + $0x68] sm:$0xff]
        %v2849 = vld [vmem:[%s2834 + $0x70] sm:$0xff]
        %v2850 = vld [vmem:[%s2834 + $0x78] sm:$0xff]
        %2851 = vmatprep.subr.bf16.mxu0 0
        %2852 = vmatpush1.bf16.msra.mxu0 %v2835
        %2853 = vmatprep.subr.bf16.mxu0 0
        %2854 = vmatpush1.bf16.msra.mxu0 %v2836
        %2855 = vmatprep.subr.bf16.mxu0 0
        %2856 = vmatpush1.bf16.msra.mxu0 %v2837
        %2857 = vmatprep.subr.bf16.mxu0 0
        %2858 = vmatpush1.bf16.msra.mxu0 %v2838
        %2859 = vmatprep.subr.bf16.mxu0 0
        %2860 = vmatpush1.bf16.msra.mxu0 %v2839
        %2861 = vmatprep.subr.bf16.mxu0 0
        %2862 = vmatpush1.bf16.msra.mxu0 %v2840
        %2863 = vmatprep.subr.bf16.mxu0 0
        %2864 = vmatpush1.bf16.msra.mxu0 %v2841
        %2865 = vmatprep.subr.bf16.mxu0 0
        %2866 = vmatpush1.bf16.msra.mxu0 %v2842
        %2867 = vmatprep.subr.bf16.mxu0 0
        %2868 = vmatpush1.bf16.msra.mxu0 %v2843
        %2869 = vmatprep.subr.bf16.mxu0 0
        %2870 = vmatpush1.bf16.msra.mxu0 %v2844
        %2871 = vmatprep.subr.bf16.mxu0 0
        %2872 = vmatpush1.bf16.msra.mxu0 %v2845
        %2873 = vmatprep.subr.bf16.mxu0 0
        %2874 = vmatpush1.bf16.msra.mxu0 %v2846
        %2875 = vmatprep.subr.bf16.mxu0 0
        %2876 = vmatpush1.bf16.msra.mxu0 %v2847
        %2877 = vmatprep.subr.bf16.mxu0 0
        %2878 = vmatpush1.bf16.msra.mxu0 %v2848
        %2879 = vmatprep.subr.bf16.mxu0 0
        %2880 = vmatpush1.bf16.msra.mxu0 %v2849
        %2881 = vmatprep.subr.bf16.mxu0 0
        %2882 = vmatpush1.bf16.msra.mxu0 %v2850
        %2883 = vmatprep.mubr.bf16.mxu0 %v2827
        %2884 = vmatmul.mubr.bf16.gmra.mrb[0].mxu0 %v2826
        %v2885 = vpop.f32.mrb[0].mxu0
        %v2886 = vadd.f32 %v364, %v2885
        %v2887 = vpop.f32.mrb[0].mxu0
        %v2888 = vpop.f32.mrb[0].mxu0
        %v2889 = vadd.f32 %v364, %v2888
        %v2890 = vpop.f32.mrb[0].mxu0
        %2891 = vmatprep.mubr.bf16.mxu0 %v2829
        %2892 = vmatmul.mubr.bf16.gmra.mrb[0].mxu0 %v2828
        %v2893 = vpop.f32.mrb[0].mxu0
        %v2894 = vadd.f32 %v364, %v2893
        %v2895 = vpop.f32.mrb[0].mxu0
        %v2896 = vpop.f32.mrb[0].mxu0
        %v2897 = vadd.f32 %v364, %v2896
        %v2898 = vpop.f32.mrb[0].mxu0
        %2899 = vmatprep.mubr.bf16.mxu0 %v2831
        %2900 = vmatmul.mubr.bf16.gmra.mrb[0].mxu0 %v2830
        %v2901 = vpop.f32.mrb[0].mxu0
        %v2902 = vadd.f32 %v364, %v2901
        %v2903 = vpop.f32.mrb[0].mxu0
        %v2904 = vpop.f32.mrb[0].mxu0
        %v2905 = vadd.f32 %v364, %v2904
        %v2906 = vpop.f32.mrb[0].mxu0
        %2907 = vmatprep.mubr.bf16.mxu0 %v2833
        %2908 = vmatmul.mubr.bf16.gmra.mrb[0].mxu0 %v2832
        %v2909 = vpop.f32.mrb[0].mxu0
        %v2910 = vadd.f32 %v364, %v2909
        %v2911 = vpop.f32.mrb[0].mxu0
        %v2912 = vpop.f32.mrb[0].mxu0
        %v2913 = vadd.f32 %v364, %v2912
        %v2914 = vpop.f32.mrb[0].mxu0
        %2915 = vdwg.mxu0
        %v2916 = vld [vmem:[%s571 + $0x8] sm:$0xf0]
        %v2917 = vld [vmem:[%s571 + $0x10] sm:$0xf0]
        %v2918 = vld [vmem:[%s571 + $0x20] sm:$0xff]
        %v2919 = vld [vmem:[%s571 + $0x28] sm:$0xff]
        %v2920 = vld [vmem:[%s571 + $0x38] sm:$0xff]
        %v2921 = vld [vmem:[%s571 + $0x40] sm:$0xff]
        %v2922 = vld [vmem:[%s571 + $0x50] sm:$0xff]
        %v2923 = vld [vmem:[%s571 + $0x58] sm:$0xff]
        %v2924 = vld [vmem:[%s571 + $0x68] sm:$0xf]
        %v2925 = vld [vmem:[%s571 + $0x70] sm:$0xf]
        %s2926 = scalar_lea.vmem [#allocation3], 2688
        %v2927 = vld [vmem:[%s2926] sm:$0xff]
        %v2928 = vld [vmem:[%s2926 + $0x8] sm:$0xff]
        %v2929 = vld [vmem:[%s2926 + $0x10] sm:$0xff]
        %v2930 = vld [vmem:[%s2926 + $0x18] sm:$0xff]
        %v2931 = vld [vmem:[%s2926 + $0x20] sm:$0xff]
        %v2932 = vld [vmem:[%s2926 + $0x28] sm:$0xff]
        %v2933 = vld [vmem:[%s2926 + $0x30] sm:$0xff]
        %v2934 = vld [vmem:[%s2926 + $0x38] sm:$0xff]
        %v2935 = vld [vmem:[%s2926 + $0x40] sm:$0xff]
        %v2936 = vld [vmem:[%s2926 + $0x48] sm:$0xff]
        %v2937 = vld [vmem:[%s2926 + $0x50] sm:$0xff]
        %v2938 = vld [vmem:[%s2926 + $0x58] sm:$0xff]
        %v2939 = vld [vmem:[%s2926 + $0x60] sm:$0xff]
        %v2940 = vld [vmem:[%s2926 + $0x68] sm:$0xff]
        %v2941 = vld [vmem:[%s2926 + $0x70] sm:$0xff]
        %v2942 = vld [vmem:[%s2926 + $0x78] sm:$0xff]
        %v2953 = vrot.slane %v2916, 4
        %v2954 = vrot.slane %v2918, 4
        %v2955 = vsel %vm468, %v2953, %v2954
        %v2956 = vrot.slane %v2917, 4
        %v2957 = vrot.slane %v2919, 4
        %v2958 = vsel %vm468, %v2956, %v2957
        %v2959 = vrot.slane %v2920, 4
        %v2960 = vsel %vm468, %v2954, %v2959
        %v2961 = vrot.slane %v2921, 4
        %v2962 = vsel %vm468, %v2957, %v2961
        %v2963 = vrot.slane %v2922, 4
        %v2964 = vsel %vm468, %v2959, %v2963
        %v2965 = vrot.slane %v2923, 4
        %v2966 = vsel %vm468, %v2961, %v2965
        %v2967 = vrot.slane %v2924, 4
        %v2968 = vsel %vm468, %v2963, %v2967
        %v2969 = vrot.slane %v2925, 4
        %v2970 = vsel %vm468, %v2965, %v2969
        %2979 = vmatprep.subr.bf16.mxu0 0
        %2980 = vmatpush1.bf16.msra.mxu0 %v2927
        %2981 = vmatprep.subr.bf16.mxu0 0
        %2982 = vmatpush1.bf16.msra.mxu0 %v2928
        %2983 = vmatprep.subr.bf16.mxu0 0
        %2984 = vmatpush1.bf16.msra.mxu0 %v2929
        %2985 = vmatprep.subr.bf16.mxu0 0
        %2986 = vmatpush1.bf16.msra.mxu0 %v2930
        %2987 = vmatprep.subr.bf16.mxu0 0
        %2988 = vmatpush1.bf16.msra.mxu0 %v2931
        %2989 = vmatprep.subr.bf16.mxu0 0
        %2990 = vmatpush1.bf16.msra.mxu0 %v2932
        %2991 = vmatprep.subr.bf16.mxu0 0
        %2992 = vmatpush1.bf16.msra.mxu0 %v2933
        %2993 = vmatprep.subr.bf16.mxu0 0
        %2994 = vmatpush1.bf16.msra.mxu0 %v2934
        %2995 = vmatprep.subr.bf16.mxu0 0
        %2996 = vmatpush1.bf16.msra.mxu0 %v2935
        %2997 = vmatprep.subr.bf16.mxu0 0
        %2998 = vmatpush1.bf16.msra.mxu0 %v2936
        %2999 = vmatprep.subr.bf16.mxu0 0
        %3000 = vmatpush1.bf16.msra.mxu0 %v2937
        %3001 = vmatprep.subr.bf16.mxu0 0
        %3002 = vmatpush1.bf16.msra.mxu0 %v2938
        %3003 = vmatprep.subr.bf16.mxu0 0
        %3004 = vmatpush1.bf16.msra.mxu0 %v2939
        %3005 = vmatprep.subr.bf16.mxu0 0
        %3006 = vmatpush1.bf16.msra.mxu0 %v2940
        %3007 = vmatprep.subr.bf16.mxu0 0
        %3008 = vmatpush1.bf16.msra.mxu0 %v2941
        %3009 = vmatprep.subr.bf16.mxu0 0
        %3010 = vmatpush1.bf16.msra.mxu0 %v2942
        %3011 = vmatprep.mubr.bf16.mxu0 %v2958
        %3012 = vmatmul.mubr.bf16.gmra.mrb[0].mxu0 %v2955
        %v3013 = vpop.f32.mrb[0].mxu0
        %v3014 = vadd.f32 0.0, %v3013
        %v3015 = vpop.f32.mrb[0].mxu0
        %v3016 = vpop.f32.mrb[0].mxu0
        %v3017 = vadd.f32 0.0, %v3016
        %v3018 = vpop.f32.mrb[0].mxu0
        %3019 = vmatprep.mubr.bf16.mxu0 %v2962
        %3020 = vmatmul.mubr.bf16.gmra.mrb[0].mxu0 %v2960
        %v3021 = vpop.f32.mrb[0].mxu0
        %v3022 = vadd.f32 0.0, %v3021
        %v3023 = vpop.f32.mrb[0].mxu0
        %v3024 = vpop.f32.mrb[0].mxu0
        %v3025 = vadd.f32 0.0, %v3024
        %v3026 = vpop.f32.mrb[0].mxu0
        %3027 = vmatprep.mubr.bf16.mxu0 %v2966
        %3028 = vmatmul.mubr.bf16.gmra.mrb[0].mxu0 %v2964
        %v3029 = vpop.f32.mrb[0].mxu0
        %v3030 = vadd.f32 0.0, %v3029
        %v3031 = vpop.f32.mrb[0].mxu0
        %v3032 = vpop.f32.mrb[0].mxu0
        %v3033 = vadd.f32 0.0, %v3032
        %v3034 = vpop.f32.mrb[0].mxu0
        %3035 = vmatprep.mubr.bf16.mxu0 %v2970
        %3036 = vmatmul.mubr.bf16.gmra.mrb[0].mxu0 %v2968
        %v3037 = vpop.f32.mrb[0].mxu0
        %v3038 = vadd.f32 0.0, %v3037
        %v3039 = vpop.f32.mrb[0].mxu0
        %v3040 = vpop.f32.mrb[0].mxu0
        %v3041 = vadd.f32 0.0, %v3040
        %v3042 = vpop.f32.mrb[0].mxu0
        %3043 = vdwg.mxu0
        %v3044 = vadd.f32 %v2886, %v3014
        %v3045 = vadd.f32 %v2889, %v3017
        %v3046 = vadd.f32 %v2894, %v3022
        %v3047 = vadd.f32 %v2897, %v3025
        %v3048 = vadd.f32 %v2902, %v3030
        %v3049 = vadd.f32 %v2905, %v3033
        %v3050 = vadd.f32 %v2910, %v3038
        %v3051 = vadd.f32 %v2913, %v3041
        %v3052 = vld [vmem:[%s274 + $0x8] sm:$0xff]
        %v3053 = vld [vmem:[%s274 + $0x10] sm:$0xff]
        %v3054 = vld [vmem:[%s274 + $0x20] sm:$0xff]
        %v3055 = vld [vmem:[%s274 + $0x28] sm:$0xff]
        %v3056 = vld [vmem:[%s274 + $0x38] sm:$0xff]
        %v3057 = vld [vmem:[%s274 + $0x40] sm:$0xff]
        %v3058 = vld [vmem:[%s274 + $0x50] sm:$0xff]
        %v3059 = vld [vmem:[%s274 + $0x58] sm:$0xff]
        %s3060 = scalar_lea.vmem [#allocation3], 2816
        %v3061 = vld [vmem:[%s3060] sm:$0xff]
        %v3062 = vld [vmem:[%s3060 + $0x8] sm:$0xff]
        %v3063 = vld [vmem:[%s3060 + $0x10] sm:$0xff]
        %v3064 = vld [vmem:[%s3060 + $0x18] sm:$0xff]
        %v3065 = vld [vmem:[%s3060 + $0x20] sm:$0xff]
        %v3066 = vld [vmem:[%s3060 + $0x28] sm:$0xff]
        %v3067 = vld [vmem:[%s3060 + $0x30] sm:$0xff]
        %v3068 = vld [vmem:[%s3060 + $0x38] sm:$0xff]
        %v3069 = vld [vmem:[%s3060 + $0x40] sm:$0xff]
        %v3070 = vld [vmem:[%s3060 + $0x48] sm:$0xff]
        %v3071 = vld [vmem:[%s3060 + $0x50] sm:$0xff]
        %v3072 = vld [vmem:[%s3060 + $0x58] sm:$0xff]
        %v3073 = vld [vmem:[%s3060 + $0x60] sm:$0xff]
        %v3074 = vld [vmem:[%s3060 + $0x68] sm:$0xff]
        %v3075 = vld [vmem:[%s3060 + $0x70] sm:$0xff]
        %v3076 = vld [vmem:[%s3060 + $0x78] sm:$0xff]
        %3077 = vmatprep.subr.bf16.mxu0 0
        %3078 = vmatpush1.bf16.msra.mxu0 %v3061
        %3079 = vmatprep.subr.bf16.mxu0 0
        %3080 = vmatpush1.bf16.msra.mxu0 %v3062
        %3081 = vmatprep.subr.bf16.mxu0 0
        %3082 = vmatpush1.bf16.msra.mxu0 %v3063
        %3083 = vmatprep.subr.bf16.mxu0 0
        %3084 = vmatpush1.bf16.msra.mxu0 %v3064
        %3085 = vmatprep.subr.bf16.mxu0 0
        %3086 = vmatpush1.bf16.msra.mxu0 %v3065
        %3087 = vmatprep.subr.bf16.mxu0 0
        %3088 = vmatpush1.bf16.msra.mxu0 %v3066
        %3089 = vmatprep.subr.bf16.mxu0 0
        %3090 = vmatpush1.bf16.msra.mxu0 %v3067
        %3091 = vmatprep.subr.bf16.mxu0 0
        %3092 = vmatpush1.bf16.msra.mxu0 %v3068
        %3093 = vmatprep.subr.bf16.mxu0 0
        %3094 = vmatpush1.bf16.msra.mxu0 %v3069
        %3095 = vmatprep.subr.bf16.mxu0 0
        %3096 = vmatpush1.bf16.msra.mxu0 %v3070
        %3097 = vmatprep.subr.bf16.mxu0 0
        %3098 = vmatpush1.bf16.msra.mxu0 %v3071
        %3099 = vmatprep.subr.bf16.mxu0 0
        %3100 = vmatpush1.bf16.msra.mxu0 %v3072
        %3101 = vmatprep.subr.bf16.mxu0 0
        %3102 = vmatpush1.bf16.msra.mxu0 %v3073
        %3103 = vmatprep.subr.bf16.mxu0 0
        %3104 = vmatpush1.bf16.msra.mxu0 %v3074
        %3105 = vmatprep.subr.bf16.mxu0 0
        %3106 = vmatpush1.bf16.msra.mxu0 %v3075
        %3107 = vmatprep.subr.bf16.mxu0 0
        %3108 = vmatpush1.bf16.msra.mxu0 %v3076
        %3109 = vmatprep.mubr.bf16.mxu0 %v3053
        %3110 = vmatmul.mubr.bf16.gmra.mrb[0].mxu0 %v3052
        %v3111 = vpop.f32.mrb[0].mxu0
        %v3112 = vadd.f32 0.0, %v3111
        %v3113 = vpop.f32.mrb[0].mxu0
        %v3114 = vpop.f32.mrb[0].mxu0
        %v3115 = vadd.f32 0.0, %v3114
        %v3116 = vpop.f32.mrb[0].mxu0
        %3117 = vmatprep.mubr.bf16.mxu0 %v3055
        %3118 = vmatmul.mubr.bf16.gmra.mrb[0].mxu0 %v3054
        %v3119 = vpop.f32.mrb[0].mxu0
        %v3120 = vadd.f32 0.0, %v3119
        %v3121 = vpop.f32.mrb[0].mxu0
        %v3122 = vpop.f32.mrb[0].mxu0
        %v3123 = vadd.f32 0.0, %v3122
        %v3124 = vpop.f32.mrb[0].mxu0
        %3125 = vmatprep.mubr.bf16.mxu0 %v3057
        %3126 = vmatmul.mubr.bf16.gmra.mrb[0].mxu0 %v3056
        %v3127 = vpop.f32.mrb[0].mxu0
        %v3128 = vadd.f32 0.0, %v3127
        %v3129 = vpop.f32.mrb[0].mxu0
        %v3130 = vpop.f32.mrb[0].mxu0
        %v3131 = vadd.f32 0.0, %v3130
        %v3132 = vpop.f32.mrb[0].mxu0
        %3133 = vmatprep.mubr.bf16.mxu0 %v3059
        %3134 = vmatmul.mubr.bf16.gmra.mrb[0].mxu0 %v3058
        %v3135 = vpop.f32.mrb[0].mxu0
        %v3136 = vadd.f32 0.0, %v3135
        %v3137 = vpop.f32.mrb[0].mxu0
        %v3138 = vpop.f32.mrb[0].mxu0
        %v3139 = vadd.f32 0.0, %v3138
        %v3140 = vpop.f32.mrb[0].mxu0
        %3141 = vdwg.mxu0
        %v3142 = vadd.f32 %v3044, %v3112
        %v3143 = vadd.f32 %v3045, %v3115
        %v3144 = vadd.f32 %v3046, %v3120
        %v3145 = vadd.f32 %v3047, %v3123
        %v3146 = vadd.f32 %v3048, %v3128
        %v3147 = vadd.f32 %v3049, %v3131
        %v3148 = vadd.f32 %v3050, %v3136
        %v3149 = vadd.f32 %v3051, %v3139
        %v3150 = vld [vmem:[%s274 + $0x8] sm:$0xf0]
        %v3151 = vld [vmem:[%s274 + $0x10] sm:$0xf0]
        %v3152 = vld [vmem:[%s274 + $0x20] sm:$0xff]
        %v3153 = vld [vmem:[%s274 + $0x28] sm:$0xff]
        %v3154 = vld [vmem:[%s274 + $0x38] sm:$0xff]
        %v3155 = vld [vmem:[%s274 + $0x40] sm:$0xff]
        %v3156 = vld [vmem:[%s274 + $0x50] sm:$0xff]
        %v3157 = vld [vmem:[%s274 + $0x58] sm:$0xff]
        %v3158 = vld [vmem:[%s274 + $0x68] sm:$0xf]
        %v3159 = vld [vmem:[%s274 + $0x70] sm:$0xf]
        %s3160 = scalar_lea.vmem [#allocation3], 2944
        %v3161 = vld [vmem:[%s3160] sm:$0xff]
        %v3162 = vld [vmem:[%s3160 + $0x8] sm:$0xff]
        %v3163 = vld [vmem:[%s3160 + $0x10] sm:$0xff]
        %v3164 = vld [vmem:[%s3160 + $0x18] sm:$0xff]
        %v3165 = vld [vmem:[%s3160 + $0x20] sm:$0xff]
        %v3166 = vld [vmem:[%s3160 + $0x28] sm:$0xff]
        %v3167 = vld [vmem:[%s3160 + $0x30] sm:$0xff]
        %v3168 = vld [vmem:[%s3160 + $0x38] sm:$0xff]
        %v3169 = vld [vmem:[%s3160 + $0x40] sm:$0xff]
        %v3170 = vld [vmem:[%s3160 + $0x48] sm:$0xff]
        %v3171 = vld [vmem:[%s3160 + $0x50] sm:$0xff]
        %v3172 = vld [vmem:[%s3160 + $0x58] sm:$0xff]
        %v3173 = vld [vmem:[%s3160 + $0x60] sm:$0xff]
        %v3174 = vld [vmem:[%s3160 + $0x68] sm:$0xff]
        %v3175 = vld [vmem:[%s3160 + $0x70] sm:$0xff]
        %v3176 = vld [vmem:[%s3160 + $0x78] sm:$0xff]
        %v3187 = vrot.slane %v3150, 4
        %v3188 = vrot.slane %v3152, 4
        %v3189 = vsel %vm468, %v3187, %v3188
        %v3190 = vrot.slane %v3151, 4
        %v3191 = vrot.slane %v3153, 4
        %v3192 = vsel %vm468, %v3190, %v3191
        %v3193 = vrot.slane %v3154, 4
        %v3194 = vsel %vm468, %v3188, %v3193
        %v3195 = vrot.slane %v3155, 4
        %v3196 = vsel %vm468, %v3191, %v3195
        %v3197 = vrot.slane %v3156, 4
        %v3198 = vsel %vm468, %v3193, %v3197
        %v3199 = vrot.slane %v3157, 4
        %v3200 = vsel %vm468, %v3195, %v3199
        %v3201 = vrot.slane %v3158, 4
        %v3202 = vsel %vm468, %v3197, %v3201
        %v3203 = vrot.slane %v3159, 4
        %v3204 = vsel %vm468, %v3199, %v3203
        %3213 = vmatprep.subr.bf16.mxu0 0
        %3214 = vmatpush1.bf16.msra.mxu0 %v3161
        %3215 = vmatprep.subr.bf16.mxu0 0
        %3216 = vmatpush1.bf16.msra.mxu0 %v3162
        %3217 = vmatprep.subr.bf16.mxu0 0
        %3218 = vmatpush1.bf16.msra.mxu0 %v3163
        %3219 = vmatprep.subr.bf16.mxu0 0
        %3220 = vmatpush1.bf16.msra.mxu0 %v3164
        %3221 = vmatprep.subr.bf16.mxu0 0
        %3222 = vmatpush1.bf16.msra.mxu0 %v3165
        %3223 = vmatprep.subr.bf16.mxu0 0
        %3224 = vmatpush1.bf16.msra.mxu0 %v3166
        %3225 = vmatprep.subr.bf16.mxu0 0
        %3226 = vmatpush1.bf16.msra.mxu0 %v3167
        %3227 = vmatprep.subr.bf16.mxu0 0
        %3228 = vmatpush1.bf16.msra.mxu0 %v3168
        %3229 = vmatprep.subr.bf16.mxu0 0
        %3230 = vmatpush1.bf16.msra.mxu0 %v3169
        %3231 = vmatprep.subr.bf16.mxu0 0
        %3232 = vmatpush1.bf16.msra.mxu0 %v3170
        %3233 = vmatprep.subr.bf16.mxu0 0
        %3234 = vmatpush1.bf16.msra.mxu0 %v3171
        %3235 = vmatprep.subr.bf16.mxu0 0
        %3236 = vmatpush1.bf16.msra.mxu0 %v3172
        %3237 = vmatprep.subr.bf16.mxu0 0
        %3238 = vmatpush1.bf16.msra.mxu0 %v3173
        %3239 = vmatprep.subr.bf16.mxu0 0
        %3240 = vmatpush1.bf16.msra.mxu0 %v3174
        %3241 = vmatprep.subr.bf16.mxu0 0
        %3242 = vmatpush1.bf16.msra.mxu0 %v3175
        %3243 = vmatprep.subr.bf16.mxu0 0
        %3244 = vmatpush1.bf16.msra.mxu0 %v3176
        %3245 = vmatprep.mubr.bf16.mxu0 %v3192
        %3246 = vmatmul.mubr.bf16.gmra.mrb[0].mxu0 %v3189
        %v3247 = vpop.f32.mrb[0].mxu0
        %v3248 = vadd.f32 0.0, %v3247
        %v3249 = vpop.f32.mrb[0].mxu0
        %v3250 = vpop.f32.mrb[0].mxu0
        %v3251 = vadd.f32 0.0, %v3250
        %v3252 = vpop.f32.mrb[0].mxu0
        %3253 = vmatprep.mubr.bf16.mxu0 %v3196
        %3254 = vmatmul.mubr.bf16.gmra.mrb[0].mxu0 %v3194
        %v3255 = vpop.f32.mrb[0].mxu0
        %v3256 = vadd.f32 0.0, %v3255
        %v3257 = vpop.f32.mrb[0].mxu0
        %v3258 = vpop.f32.mrb[0].mxu0
        %v3259 = vadd.f32 0.0, %v3258
        %v3260 = vpop.f32.mrb[0].mxu0
        %3261 = vmatprep.mubr.bf16.mxu0 %v3200
        %3262 = vmatmul.mubr.bf16.gmra.mrb[0].mxu0 %v3198
        %v3263 = vpop.f32.mrb[0].mxu0
        %v3264 = vadd.f32 0.0, %v3263
        %v3265 = vpop.f32.mrb[0].mxu0
        %v3266 = vpop.f32.mrb[0].mxu0
        %v3267 = vadd.f32 0.0, %v3266
        %v3268 = vpop.f32.mrb[0].mxu0
        %3269 = vmatprep.mubr.bf16.mxu0 %v3204
        %3270 = vmatmul.mubr.bf16.gmra.mrb[0].mxu0 %v3202
        %v3271 = vpop.f32.mrb[0].mxu0
        %v3272 = vadd.f32 0.0, %v3271
        %v3273 = vpop.f32.mrb[0].mxu0
        %v3274 = vpop.f32.mrb[0].mxu0
        %v3275 = vadd.f32 0.0, %v3274
        %v3276 = vpop.f32.mrb[0].mxu0
        %3277 = vdwg.mxu0
        %v3278 = vadd.f32 %v3142, %v3248
        %v3279 = vadd.f32 %v3143, %v3251
        %v3280 = vadd.f32 %v3144, %v3256
        %v3281 = vadd.f32 %v3145, %v3259
        %v3282 = vadd.f32 %v3146, %v3264
        %v3283 = vadd.f32 %v3147, %v3267
        %v3284 = vadd.f32 %v3148, %v3272
        %v3285 = vadd.f32 %v3149, %v3275
        %v3286 = vpack.c.bf16 %v3279, %v3278
        %v3287 = vpack.c.bf16 %v3281, %v3280
        %v3288 = vpack.c.bf16 %v3283, %v3282
        %v3289 = vpack.c.bf16 %v3285, %v3284
        %v3294 = vunpack.c.l.b16 %v3286
        %v3295 = vunpack.c.h.b16 %v3286
        %v3296 = vunpack.c.l.b16 %v3287
        %v3297 = vunpack.c.h.b16 %v3287
        %v3298 = vunpack.c.l.b16 %v3288
        %v3299 = vunpack.c.h.b16 %v3288
        %v3300 = vunpack.c.l.b16 %v3289
        %v3301 = vunpack.c.h.b16 %v3289
        %v3302 = vpack.c.b16 %v3294, %v3294
        %v3303 = vpack.c.b16 %v3295, %v3295
        %v3304 = vpack.c.b16 %v3296, %v3296
        %v3305 = vpack.c.b16 %v3297, %v3297
        %v3306 = vpack.c.b16 %v3298, %v3298
        %v3307 = vpack.c.b16 %v3299, %v3299
        %v3308 = vpack.c.b16 %v3300, %v3300
        %v3309 = vpack.c.b16 %v3301, %v3301
        %s3318 = scalar_lea.vmem %s123, 160 [#allocation8]
        %3319 = vst [vmem:[%s3318] sm:$0xf] %v3302
        %3320 = vst [vmem:[%s3318 + $0x4] sm:$0xf] %v3303
        %3321 = vst [vmem:[%s3318 + $0x8] sm:$0xf] %v3304
        %3322 = vst [vmem:[%s3318 + $0xc] sm:$0xf] %v3305
        %3323 = vst [vmem:[%s3318 + $0x10] sm:$0xf] %v3306
        %3324 = vst [vmem:[%s3318 + $0x14] sm:$0xf] %v3307
        %3325 = vst [vmem:[%s3318 + $0x18] sm:$0xf] %v3308
        %3326 = vst [vmem:[%s3318 + $0x1c] sm:$0xf] %v3309
        %v3327 = vld [vmem:[%s571] sm:$0xf0]
        %v3328 = vld [vmem:[%s571 + $0x8] sm:$0xf0]
        %v3329 = vld [vmem:[%s571 + $0x18] sm:$0xff]
        %v3330 = vld [vmem:[%s571 + $0x20] sm:$0xff]
        %v3331 = vld [vmem:[%s571 + $0x30] sm:$0xff]
        %v3332 = vld [vmem:[%s571 + $0x38] sm:$0xff]
        %v3333 = vld [vmem:[%s571 + $0x48] sm:$0xff]
        %v3334 = vld [vmem:[%s571 + $0x50] sm:$0xff]
        %v3335 = vld [vmem:[%s571 + $0x60] sm:$0xf]
        %v3336 = vld [vmem:[%s571 + $0x68] sm:$0xf]
        %s3337 = scalar_lea.vmem [#allocation3], 3072
        %v3338 = vld [vmem:[%s3337] sm:$0xff]
        %v3339 = vld [vmem:[%s3337 + $0x8] sm:$0xff]
        %v3340 = vld [vmem:[%s3337 + $0x10] sm:$0xff]
        %v3341 = vld [vmem:[%s3337 + $0x18] sm:$0xff]
        %v3342 = vld [vmem:[%s3337 + $0x20] sm:$0xff]
        %v3343 = vld [vmem:[%s3337 + $0x28] sm:$0xff]
        %v3344 = vld [vmem:[%s3337 + $0x30] sm:$0xff]
        %v3345 = vld [vmem:[%s3337 + $0x38] sm:$0xff]
        %v3346 = vld [vmem:[%s3337 + $0x40] sm:$0xff]
        %v3347 = vld [vmem:[%s3337 + $0x48] sm:$0xff]
        %v3348 = vld [vmem:[%s3337 + $0x50] sm:$0xff]
        %v3349 = vld [vmem:[%s3337 + $0x58] sm:$0xff]
        %v3350 = vld [vmem:[%s3337 + $0x60] sm:$0xff]
        %v3351 = vld [vmem:[%s3337 + $0x68] sm:$0xff]
        %v3352 = vld [vmem:[%s3337 + $0x70] sm:$0xff]
        %v3353 = vld [vmem:[%s3337 + $0x78] sm:$0xff]
        %v3364 = vrot.slane %v3327, 4
        %v3365 = vrot.slane %v3329, 4
        %v3366 = vsel %vm468, %v3364, %v3365
        %v3367 = vrot.slane %v3328, 4
        %v3368 = vrot.slane %v3330, 4
        %v3369 = vsel %vm468, %v3367, %v3368
        %v3370 = vrot.slane %v3331, 4
        %v3371 = vsel %vm468, %v3365, %v3370
        %v3372 = vrot.slane %v3332, 4
        %v3373 = vsel %vm468, %v3368, %v3372
        %v3374 = vrot.slane %v3333, 4
        %v3375 = vsel %vm468, %v3370, %v3374
        %v3376 = vrot.slane %v3334, 4
        %v3377 = vsel %vm468, %v3372, %v3376
        %v3378 = vrot.slane %v3335, 4
        %v3379 = vsel %vm468, %v3374, %v3378
        %v3380 = vrot.slane %v3336, 4
        %v3381 = vsel %vm468, %v3376, %v3380
        %3390 = vmatprep.subr.bf16.mxu0 0
        %3391 = vmatpush1.bf16.msra.mxu0 %v3338
        %3392 = vmatprep.subr.bf16.mxu0 0
        %3393 = vmatpush1.bf16.msra.mxu0 %v3339
        %3394 = vmatprep.subr.bf16.mxu0 0
        %3395 = vmatpush1.bf16.msra.mxu0 %v3340
        %3396 = vmatprep.subr.bf16.mxu0 0
        %3397 = vmatpush1.bf16.msra.mxu0 %v3341
        %3398 = vmatprep.subr.bf16.mxu0 0
        %3399 = vmatpush1.bf16.msra.mxu0 %v3342
        %3400 = vmatprep.subr.bf16.mxu0 0
        %3401 = vmatpush1.bf16.msra.mxu0 %v3343
        %3402 = vmatprep.subr.bf16.mxu0 0
        %3403 = vmatpush1.bf16.msra.mxu0 %v3344
        %3404 = vmatprep.subr.bf16.mxu0 0
        %3405 = vmatpush1.bf16.msra.mxu0 %v3345
        %3406 = vmatprep.subr.bf16.mxu0 0
        %3407 = vmatpush1.bf16.msra.mxu0 %v3346
        %3408 = vmatprep.subr.bf16.mxu0 0
        %3409 = vmatpush1.bf16.msra.mxu0 %v3347
        %3410 = vmatprep.subr.bf16.mxu0 0
        %3411 = vmatpush1.bf16.msra.mxu0 %v3348
        %3412 = vmatprep.subr.bf16.mxu0 0
        %3413 = vmatpush1.bf16.msra.mxu0 %v3349
        %3414 = vmatprep.subr.bf16.mxu0 0
        %3415 = vmatpush1.bf16.msra.mxu0 %v3350
        %3416 = vmatprep.subr.bf16.mxu0 0
        %3417 = vmatpush1.bf16.msra.mxu0 %v3351
        %3418 = vmatprep.subr.bf16.mxu0 0
        %3419 = vmatpush1.bf16.msra.mxu0 %v3352
        %3420 = vmatprep.subr.bf16.mxu0 0
        %3421 = vmatpush1.bf16.msra.mxu0 %v3353
        %3422 = vmatprep.mubr.bf16.mxu0 %v3369
        %3423 = vmatmul.mubr.bf16.gmra.mrb[0].mxu0 %v3366
        %v3424 = vpop.f32.mrb[0].mxu0
        %v3425 = vadd.f32 %v364, %v3424
        %v3426 = vpop.f32.mrb[0].mxu0
        %v3427 = vpop.f32.mrb[0].mxu0
        %v3428 = vadd.f32 %v364, %v3427
        %v3429 = vpop.f32.mrb[0].mxu0
        %3430 = vmatprep.mubr.bf16.mxu0 %v3373
        %3431 = vmatmul.mubr.bf16.gmra.mrb[0].mxu0 %v3371
        %v3432 = vpop.f32.mrb[0].mxu0
        %v3433 = vadd.f32 %v364, %v3432
        %v3434 = vpop.f32.mrb[0].mxu0
        %v3435 = vpop.f32.mrb[0].mxu0
        %v3436 = vadd.f32 %v364, %v3435
        %v3437 = vpop.f32.mrb[0].mxu0
        %3438 = vmatprep.mubr.bf16.mxu0 %v3377
        %3439 = vmatmul.mubr.bf16.gmra.mrb[0].mxu0 %v3375
        %v3440 = vpop.f32.mrb[0].mxu0
        %v3441 = vadd.f32 %v364, %v3440
        %v3442 = vpop.f32.mrb[0].mxu0
        %v3443 = vpop.f32.mrb[0].mxu0
        %v3444 = vadd.f32 %v364, %v3443
        %v3445 = vpop.f32.mrb[0].mxu0
        %3446 = vmatprep.mubr.bf16.mxu0 %v3381
        %3447 = vmatmul.mubr.bf16.gmra.mrb[0].mxu0 %v3379
        %v3448 = vpop.f32.mrb[0].mxu0
        %v3449 = vadd.f32 %v364, %v3448
        %v3450 = vpop.f32.mrb[0].mxu0
        %v3451 = vpop.f32.mrb[0].mxu0
        %v3452 = vadd.f32 %v364, %v3451
        %v3453 = vpop.f32.mrb[0].mxu0
        %3454 = vdwg.mxu0
        %v3455 = vld [vmem:[%s571 + $0x60] sm:$0xff]
        %v3456 = vld [vmem:[%s571 + $0x68] sm:$0xff]
        %s3457 = scalar_lea.vmem [#allocation3], 3200
        %v3458 = vld [vmem:[%s3457] sm:$0xff]
        %v3459 = vld [vmem:[%s3457 + $0x8] sm:$0xff]
        %v3460 = vld [vmem:[%s3457 + $0x10] sm:$0xff]
        %v3461 = vld [vmem:[%s3457 + $0x18] sm:$0xff]
        %v3462 = vld [vmem:[%s3457 + $0x20] sm:$0xff]
        %v3463 = vld [vmem:[%s3457 + $0x28] sm:$0xff]
        %v3464 = vld [vmem:[%s3457 + $0x30] sm:$0xff]
        %v3465 = vld [vmem:[%s3457 + $0x38] sm:$0xff]
        %v3466 = vld [vmem:[%s3457 + $0x40] sm:$0xff]
        %v3467 = vld [vmem:[%s3457 + $0x48] sm:$0xff]
        %v3468 = vld [vmem:[%s3457 + $0x50] sm:$0xff]
        %v3469 = vld [vmem:[%s3457 + $0x58] sm:$0xff]
        %v3470 = vld [vmem:[%s3457 + $0x60] sm:$0xff]
        %v3471 = vld [vmem:[%s3457 + $0x68] sm:$0xff]
        %v3472 = vld [vmem:[%s3457 + $0x70] sm:$0xff]
        %v3473 = vld [vmem:[%s3457 + $0x78] sm:$0xff]
        %3474 = vmatprep.subr.bf16.mxu0 0
        %3475 = vmatpush1.bf16.msra.mxu0 %v3458
        %3476 = vmatprep.subr.bf16.mxu0 0
        %3477 = vmatpush1.bf16.msra.mxu0 %v3459
        %3478 = vmatprep.subr.bf16.mxu0 0
        %3479 = vmatpush1.bf16.msra.mxu0 %v3460
        %3480 = vmatprep.subr.bf16.mxu0 0
        %3481 = vmatpush1.bf16.msra.mxu0 %v3461
        %3482 = vmatprep.subr.bf16.mxu0 0
        %3483 = vmatpush1.bf16.msra.mxu0 %v3462
        %3484 = vmatprep.subr.bf16.mxu0 0
        %3485 = vmatpush1.bf16.msra.mxu0 %v3463
        %3486 = vmatprep.subr.bf16.mxu0 0
        %3487 = vmatpush1.bf16.msra.mxu0 %v3464
        %3488 = vmatprep.subr.bf16.mxu0 0
        %3489 = vmatpush1.bf16.msra.mxu0 %v3465
        %3490 = vmatprep.subr.bf16.mxu0 0
        %3491 = vmatpush1.bf16.msra.mxu0 %v3466
        %3492 = vmatprep.subr.bf16.mxu0 0
        %3493 = vmatpush1.bf16.msra.mxu0 %v3467
        %3494 = vmatprep.subr.bf16.mxu0 0
        %3495 = vmatpush1.bf16.msra.mxu0 %v3468
        %3496 = vmatprep.subr.bf16.mxu0 0
        %3497 = vmatpush1.bf16.msra.mxu0 %v3469
        %3498 = vmatprep.subr.bf16.mxu0 0
        %3499 = vmatpush1.bf16.msra.mxu0 %v3470
        %3500 = vmatprep.subr.bf16.mxu0 0
        %3501 = vmatpush1.bf16.msra.mxu0 %v3471
        %3502 = vmatprep.subr.bf16.mxu0 0
        %3503 = vmatpush1.bf16.msra.mxu0 %v3472
        %3504 = vmatprep.subr.bf16.mxu0 0
        %3505 = vmatpush1.bf16.msra.mxu0 %v3473
        %3506 = vmatprep.mubr.bf16.mxu0 %v3330
        %3507 = vmatmul.mubr.bf16.gmra.mrb[0].mxu0 %v3329
        %v3508 = vpop.f32.mrb[0].mxu0
        %v3509 = vadd.f32 0.0, %v3508
        %v3510 = vpop.f32.mrb[0].mxu0
        %v3511 = vpop.f32.mrb[0].mxu0
        %v3512 = vadd.f32 0.0, %v3511
        %v3513 = vpop.f32.mrb[0].mxu0
        %3514 = vmatprep.mubr.bf16.mxu0 %v3332
        %3515 = vmatmul.mubr.bf16.gmra.mrb[0].mxu0 %v3331
        %v3516 = vpop.f32.mrb[0].mxu0
        %v3517 = vadd.f32 0.0, %v3516
        %v3518 = vpop.f32.mrb[0].mxu0
        %v3519 = vpop.f32.mrb[0].mxu0
        %v3520 = vadd.f32 0.0, %v3519
        %v3521 = vpop.f32.mrb[0].mxu0
        %3522 = vmatprep.mubr.bf16.mxu0 %v3334
        %3523 = vmatmul.mubr.bf16.gmra.mrb[0].mxu0 %v3333
        %v3524 = vpop.f32.mrb[0].mxu0
        %v3525 = vadd.f32 0.0, %v3524
        %v3526 = vpop.f32.mrb[0].mxu0
        %v3527 = vpop.f32.mrb[0].mxu0
        %v3528 = vadd.f32 0.0, %v3527
        %v3529 = vpop.f32.mrb[0].mxu0
        %3530 = vmatprep.mubr.bf16.mxu0 %v3456
        %3531 = vmatmul.mubr.bf16.gmra.mrb[0].mxu0 %v3455
        %v3532 = vpop.f32.mrb[0].mxu0
        %v3533 = vadd.f32 0.0, %v3532
        %v3534 = vpop.f32.mrb[0].mxu0
        %v3535 = vpop.f32.mrb[0].mxu0
        %v3536 = vadd.f32 0.0, %v3535
        %v3537 = vpop.f32.mrb[0].mxu0
        %3538 = vdwg.mxu0
        %v3539 = vadd.f32 %v3425, %v3509
        %v3540 = vadd.f32 %v3428, %v3512
        %v3541 = vadd.f32 %v3433, %v3517
        %v3542 = vadd.f32 %v3436, %v3520
        %v3543 = vadd.f32 %v3441, %v3525
        %v3544 = vadd.f32 %v3444, %v3528
        %v3545 = vadd.f32 %v3449, %v3533
        %v3546 = vadd.f32 %v3452, %v3536
        %v3547 = vld [vmem:[%s274] sm:$0xf0]
        %v3548 = vld [vmem:[%s274 + $0x8] sm:$0xf0]
        %v3549 = vld [vmem:[%s274 + $0x18] sm:$0xff]
        %v3550 = vld [vmem:[%s274 + $0x20] sm:$0xff]
        %v3551 = vld [vmem:[%s274 + $0x30] sm:$0xff]
        %v3552 = vld [vmem:[%s274 + $0x38] sm:$0xff]
        %v3553 = vld [vmem:[%s274 + $0x48] sm:$0xff]
        %v3554 = vld [vmem:[%s274 + $0x50] sm:$0xff]
        %v3555 = vld [vmem:[%s274 + $0x60] sm:$0xf]
        %v3556 = vld [vmem:[%s274 + $0x68] sm:$0xf]
        %s3557 = scalar_lea.vmem [#allocation3], 3328
        %v3558 = vld [vmem:[%s3557] sm:$0xff]
        %v3559 = vld [vmem:[%s3557 + $0x8] sm:$0xff]
        %v3560 = vld [vmem:[%s3557 + $0x10] sm:$0xff]
        %v3561 = vld [vmem:[%s3557 + $0x18] sm:$0xff]
        %v3562 = vld [vmem:[%s3557 + $0x20] sm:$0xff]
        %v3563 = vld [vmem:[%s3557 + $0x28] sm:$0xff]
        %v3564 = vld [vmem:[%s3557 + $0x30] sm:$0xff]
        %v3565 = vld [vmem:[%s3557 + $0x38] sm:$0xff]
        %v3566 = vld [vmem:[%s3557 + $0x40] sm:$0xff]
        %v3567 = vld [vmem:[%s3557 + $0x48] sm:$0xff]
        %v3568 = vld [vmem:[%s3557 + $0x50] sm:$0xff]
        %v3569 = vld [vmem:[%s3557 + $0x58] sm:$0xff]
        %v3570 = vld [vmem:[%s3557 + $0x60] sm:$0xff]
        %v3571 = vld [vmem:[%s3557 + $0x68] sm:$0xff]
        %v3572 = vld [vmem:[%s3557 + $0x70] sm:$0xff]
        %v3573 = vld [vmem:[%s3557 + $0x78] sm:$0xff]
        %v3584 = vrot.slane %v3547, 4
        %v3585 = vrot.slane %v3549, 4
        %v3586 = vsel %vm468, %v3584, %v3585
        %v3587 = vrot.slane %v3548, 4
        %v3588 = vrot.slane %v3550, 4
        %v3589 = vsel %vm468, %v3587, %v3588
        %v3590 = vrot.slane %v3551, 4
        %v3591 = vsel %vm468, %v3585, %v3590
        %v3592 = vrot.slane %v3552, 4
        %v3593 = vsel %vm468, %v3588, %v3592
        %v3594 = vrot.slane %v3553, 4
        %v3595 = vsel %vm468, %v3590, %v3594
        %v3596 = vrot.slane %v3554, 4
        %v3597 = vsel %vm468, %v3592, %v3596
        %v3598 = vrot.slane %v3555, 4
        %v3599 = vsel %vm468, %v3594, %v3598
        %v3600 = vrot.slane %v3556, 4
        %v3601 = vsel %vm468, %v3596, %v3600
        %3610 = vmatprep.subr.bf16.mxu0 0
        %3611 = vmatpush1.bf16.msra.mxu0 %v3558
        %3612 = vmatprep.subr.bf16.mxu0 0
        %3613 = vmatpush1.bf16.msra.mxu0 %v3559
        %3614 = vmatprep.subr.bf16.mxu0 0
        %3615 = vmatpush1.bf16.msra.mxu0 %v3560
        %3616 = vmatprep.subr.bf16.mxu0 0
        %3617 = vmatpush1.bf16.msra.mxu0 %v3561
        %3618 = vmatprep.subr.bf16.mxu0 0
        %3619 = vmatpush1.bf16.msra.mxu0 %v3562
        %3620 = vmatprep.subr.bf16.mxu0 0
        %3621 = vmatpush1.bf16.msra.mxu0 %v3563
        %3622 = vmatprep.subr.bf16.mxu0 0
        %3623 = vmatpush1.bf16.msra.mxu0 %v3564
        %3624 = vmatprep.subr.bf16.mxu0 0
        %3625 = vmatpush1.bf16.msra.mxu0 %v3565
        %3626 = vmatprep.subr.bf16.mxu0 0
        %3627 = vmatpush1.bf16.msra.mxu0 %v3566
        %3628 = vmatprep.subr.bf16.mxu0 0
        %3629 = vmatpush1.bf16.msra.mxu0 %v3567
        %3630 = vmatprep.subr.bf16.mxu0 0
        %3631 = vmatpush1.bf16.msra.mxu0 %v3568
        %3632 = vmatprep.subr.bf16.mxu0 0
        %3633 = vmatpush1.bf16.msra.mxu0 %v3569
        %3634 = vmatprep.subr.bf16.mxu0 0
        %3635 = vmatpush1.bf16.msra.mxu0 %v3570
        %3636 = vmatprep.subr.bf16.mxu0 0
        %3637 = vmatpush1.bf16.msra.mxu0 %v3571
        %3638 = vmatprep.subr.bf16.mxu0 0
        %3639 = vmatpush1.bf16.msra.mxu0 %v3572
        %3640 = vmatprep.subr.bf16.mxu0 0
        %3641 = vmatpush1.bf16.msra.mxu0 %v3573
        %3642 = vmatprep.mubr.bf16.mxu0 %v3589
        %3643 = vmatmul.mubr.bf16.gmra.mrb[0].mxu0 %v3586
        %v3644 = vpop.f32.mrb[0].mxu0
        %v3645 = vadd.f32 0.0, %v3644
        %v3646 = vpop.f32.mrb[0].mxu0
        %v3647 = vpop.f32.mrb[0].mxu0
        %v3648 = vadd.f32 0.0, %v3647
        %v3649 = vpop.f32.mrb[0].mxu0
        %3650 = vmatprep.mubr.bf16.mxu0 %v3593
        %3651 = vmatmul.mubr.bf16.gmra.mrb[0].mxu0 %v3591
        %v3652 = vpop.f32.mrb[0].mxu0
        %v3653 = vadd.f32 0.0, %v3652
        %v3654 = vpop.f32.mrb[0].mxu0
        %v3655 = vpop.f32.mrb[0].mxu0
        %v3656 = vadd.f32 0.0, %v3655
        %v3657 = vpop.f32.mrb[0].mxu0
        %3658 = vmatprep.mubr.bf16.mxu0 %v3597
        %3659 = vmatmul.mubr.bf16.gmra.mrb[0].mxu0 %v3595
        %v3660 = vpop.f32.mrb[0].mxu0
        %v3661 = vadd.f32 0.0, %v3660
        %v3662 = vpop.f32.mrb[0].mxu0
        %v3663 = vpop.f32.mrb[0].mxu0
        %v3664 = vadd.f32 0.0, %v3663
        %v3665 = vpop.f32.mrb[0].mxu0
        %3666 = vmatprep.mubr.bf16.mxu0 %v3601
        %3667 = vmatmul.mubr.bf16.gmra.mrb[0].mxu0 %v3599
        %v3668 = vpop.f32.mrb[0].mxu0
        %v3669 = vadd.f32 0.0, %v3668
        %v3670 = vpop.f32.mrb[0].mxu0
        %v3671 = vpop.f32.mrb[0].mxu0
        %v3672 = vadd.f32 0.0, %v3671
        %v3673 = vpop.f32.mrb[0].mxu0
        %3674 = vdwg.mxu0
        %v3675 = vadd.f32 %v3539, %v3645
        %v3676 = vadd.f32 %v3540, %v3648
        %v3677 = vadd.f32 %v3541, %v3653
        %v3678 = vadd.f32 %v3542, %v3656
        %v3679 = vadd.f32 %v3543, %v3661
        %v3680 = vadd.f32 %v3544, %v3664
        %v3681 = vadd.f32 %v3545, %v3669
        %v3682 = vadd.f32 %v3546, %v3672
        %v3683 = vld [vmem:[%s274 + $0x60] sm:$0xff]
        %v3684 = vld [vmem:[%s274 + $0x68] sm:$0xff]
        %s3685 = scalar_lea.vmem [#allocation3], 3456
        %v3686 = vld [vmem:[%s3685] sm:$0xff]
        %v3687 = vld [vmem:[%s3685 + $0x8] sm:$0xff]
        %v3688 = vld [vmem:[%s3685 + $0x10] sm:$0xff]
        %v3689 = vld [vmem:[%s3685 + $0x18] sm:$0xff]
        %v3690 = vld [vmem:[%s3685 + $0x20] sm:$0xff]
        %v3691 = vld [vmem:[%s3685 + $0x28] sm:$0xff]
        %v3692 = vld [vmem:[%s3685 + $0x30] sm:$0xff]
        %v3693 = vld [vmem:[%s3685 + $0x38] sm:$0xff]
        %v3694 = vld [vmem:[%s3685 + $0x40] sm:$0xff]
        %v3695 = vld [vmem:[%s3685 + $0x48] sm:$0xff]
        %v3696 = vld [vmem:[%s3685 + $0x50] sm:$0xff]
        %v3697 = vld [vmem:[%s3685 + $0x58] sm:$0xff]
        %v3698 = vld [vmem:[%s3685 + $0x60] sm:$0xff]
        %v3699 = vld [vmem:[%s3685 + $0x68] sm:$0xff]
        %v3700 = vld [vmem:[%s3685 + $0x70] sm:$0xff]
        %v3701 = vld [vmem:[%s3685 + $0x78] sm:$0xff]
        %3702 = vmatprep.subr.bf16.mxu0 0
        %3703 = vmatpush1.bf16.msra.mxu0 %v3686
        %3704 = vmatprep.subr.bf16.mxu0 0
        %3705 = vmatpush1.bf16.msra.mxu0 %v3687
        %3706 = vmatprep.subr.bf16.mxu0 0
        %3707 = vmatpush1.bf16.msra.mxu0 %v3688
        %3708 = vmatprep.subr.bf16.mxu0 0
        %3709 = vmatpush1.bf16.msra.mxu0 %v3689
        %3710 = vmatprep.subr.bf16.mxu0 0
        %3711 = vmatpush1.bf16.msra.mxu0 %v3690
        %3712 = vmatprep.subr.bf16.mxu0 0
        %3713 = vmatpush1.bf16.msra.mxu0 %v3691
        %3714 = vmatprep.subr.bf16.mxu0 0
        %3715 = vmatpush1.bf16.msra.mxu0 %v3692
        %3716 = vmatprep.subr.bf16.mxu0 0
        %3717 = vmatpush1.bf16.msra.mxu0 %v3693
        %3718 = vmatprep.subr.bf16.mxu0 0
        %3719 = vmatpush1.bf16.msra.mxu0 %v3694
        %3720 = vmatprep.subr.bf16.mxu0 0
        %3721 = vmatpush1.bf16.msra.mxu0 %v3695
        %3722 = vmatprep.subr.bf16.mxu0 0
        %3723 = vmatpush1.bf16.msra.mxu0 %v3696
        %3724 = vmatprep.subr.bf16.mxu0 0
        %3725 = vmatpush1.bf16.msra.mxu0 %v3697
        %3726 = vmatprep.subr.bf16.mxu0 0
        %3727 = vmatpush1.bf16.msra.mxu0 %v3698
        %3728 = vmatprep.subr.bf16.mxu0 0
        %3729 = vmatpush1.bf16.msra.mxu0 %v3699
        %3730 = vmatprep.subr.bf16.mxu0 0
        %3731 = vmatpush1.bf16.msra.mxu0 %v3700
        %3732 = vmatprep.subr.bf16.mxu0 0
        %3733 = vmatpush1.bf16.msra.mxu0 %v3701
        %3734 = vmatprep.mubr.bf16.mxu0 %v3550
        %3735 = vmatmul.mubr.bf16.gmra.mrb[0].mxu0 %v3549
        %v3736 = vpop.f32.mrb[0].mxu0
        %v3737 = vadd.f32 0.0, %v3736
        %v3738 = vpop.f32.mrb[0].mxu0
        %v3739 = vpop.f32.mrb[0].mxu0
        %v3740 = vadd.f32 0.0, %v3739
        %v3741 = vpop.f32.mrb[0].mxu0
        %3742 = vmatprep.mubr.bf16.mxu0 %v3552
        %3743 = vmatmul.mubr.bf16.gmra.mrb[0].mxu0 %v3551
        %v3744 = vpop.f32.mrb[0].mxu0
        %v3745 = vadd.f32 0.0, %v3744
        %v3746 = vpop.f32.mrb[0].mxu0
        %v3747 = vpop.f32.mrb[0].mxu0
        %v3748 = vadd.f32 0.0, %v3747
        %v3749 = vpop.f32.mrb[0].mxu0
        %3750 = vmatprep.mubr.bf16.mxu0 %v3554
        %3751 = vmatmul.mubr.bf16.gmra.mrb[0].mxu0 %v3553
        %v3752 = vpop.f32.mrb[0].mxu0
        %v3753 = vadd.f32 0.0, %v3752
        %v3754 = vpop.f32.mrb[0].mxu0
        %v3755 = vpop.f32.mrb[0].mxu0
        %v3756 = vadd.f32 0.0, %v3755
        %v3757 = vpop.f32.mrb[0].mxu0
        %3758 = vmatprep.mubr.bf16.mxu0 %v3684
        %3759 = vmatmul.mubr.bf16.gmra.mrb[0].mxu0 %v3683
        %v3760 = vpop.f32.mrb[0].mxu0
        %v3761 = vadd.f32 0.0, %v3760
        %v3762 = vpop.f32.mrb[0].mxu0
        %v3763 = vpop.f32.mrb[0].mxu0
        %v3764 = vadd.f32 0.0, %v3763
        %v3765 = vpop.f32.mrb[0].mxu0
        %3766 = vdwg.mxu0
        %v3767 = vadd.f32 %v3675, %v3737
        %v3768 = vadd.f32 %v3676, %v3740
        %v3769 = vadd.f32 %v3677, %v3745
        %v3770 = vadd.f32 %v3678, %v3748
        %v3771 = vadd.f32 %v3679, %v3753
        %v3772 = vadd.f32 %v3680, %v3756
        %v3773 = vadd.f32 %v3681, %v3761
        %v3774 = vadd.f32 %v3682, %v3764
        %v3775 = vpack.c.bf16 %v3768, %v3767
        %v3776 = vpack.c.bf16 %v3770, %v3769
        %v3777 = vpack.c.bf16 %v3772, %v3771
        %v3778 = vpack.c.bf16 %v3774, %v3773
        %v3783 = vunpack.c.l.b16 %v3775
        %v3784 = vunpack.c.h.b16 %v3775
        %v3785 = vunpack.c.l.b16 %v3776
        %v3786 = vunpack.c.h.b16 %v3776
        %v3787 = vunpack.c.l.b16 %v3777
        %v3788 = vunpack.c.h.b16 %v3777
        %v3789 = vunpack.c.l.b16 %v3778
        %v3790 = vunpack.c.h.b16 %v3778
        %v3791 = vpack.c.b16 %v3783, %v3783
        %v3792 = vpack.c.b16 %v3784, %v3784
        %v3793 = vpack.c.b16 %v3785, %v3785
        %v3794 = vpack.c.b16 %v3786, %v3786
        %v3795 = vpack.c.b16 %v3787, %v3787
        %v3796 = vpack.c.b16 %v3788, %v3788
        %v3797 = vpack.c.b16 %v3789, %v3789
        %v3798 = vpack.c.b16 %v3790, %v3790
        %s3807 = scalar_lea.vmem %s123, 192 [#allocation8]
        %3808 = vst [vmem:[%s3807] sm:$0xf] %v3791
        %3809 = vst [vmem:[%s3807 + $0x4] sm:$0xf] %v3792
        %3810 = vst [vmem:[%s3807 + $0x8] sm:$0xf] %v3793
        %3811 = vst [vmem:[%s3807 + $0xc] sm:$0xf] %v3794
        %3812 = vst [vmem:[%s3807 + $0x10] sm:$0xf] %v3795
        %3813 = vst [vmem:[%s3807 + $0x14] sm:$0xf] %v3796
        %3814 = vst [vmem:[%s3807 + $0x18] sm:$0xf] %v3797
        %3815 = vst [vmem:[%s3807 + $0x1c] sm:$0xf] %v3798
        %v3816 = vld [vmem:[%s571 + $0x8] sm:$0xf0]
        %v3817 = vld [vmem:[%s571 + $0x10] sm:$0xf0]
        %v3818 = vld [vmem:[%s571 + $0x20] sm:$0xff]
        %v3819 = vld [vmem:[%s571 + $0x28] sm:$0xff]
        %v3820 = vld [vmem:[%s571 + $0x38] sm:$0xff]
        %v3821 = vld [vmem:[%s571 + $0x40] sm:$0xff]
        %v3822 = vld [vmem:[%s571 + $0x50] sm:$0xff]
        %v3823 = vld [vmem:[%s571 + $0x58] sm:$0xff]
        %v3824 = vld [vmem:[%s571 + $0x68] sm:$0xf]
        %v3825 = vld [vmem:[%s571 + $0x70] sm:$0xf]
        %s3826 = scalar_lea.vmem [#allocation3], 3584
        %v3827 = vld [vmem:[%s3826] sm:$0xff]
        %v3828 = vld [vmem:[%s3826 + $0x8] sm:$0xff]
        %v3829 = vld [vmem:[%s3826 + $0x10] sm:$0xff]
        %v3830 = vld [vmem:[%s3826 + $0x18] sm:$0xff]
        %v3831 = vld [vmem:[%s3826 + $0x20] sm:$0xff]
        %v3832 = vld [vmem:[%s3826 + $0x28] sm:$0xff]
        %v3833 = vld [vmem:[%s3826 + $0x30] sm:$0xff]
        %v3834 = vld [vmem:[%s3826 + $0x38] sm:$0xff]
        %v3835 = vld [vmem:[%s3826 + $0x40] sm:$0xff]
        %v3836 = vld [vmem:[%s3826 + $0x48] sm:$0xff]
        %v3837 = vld [vmem:[%s3826 + $0x50] sm:$0xff]
        %v3838 = vld [vmem:[%s3826 + $0x58] sm:$0xff]
        %v3839 = vld [vmem:[%s3826 + $0x60] sm:$0xff]
        %v3840 = vld [vmem:[%s3826 + $0x68] sm:$0xff]
        %v3841 = vld [vmem:[%s3826 + $0x70] sm:$0xff]
        %v3842 = vld [vmem:[%s3826 + $0x78] sm:$0xff]
        %v3853 = vrot.slane %v3816, 4
        %v3854 = vrot.slane %v3818, 4
        %v3855 = vsel %vm468, %v3853, %v3854
        %v3856 = vrot.slane %v3817, 4
        %v3857 = vrot.slane %v3819, 4
        %v3858 = vsel %vm468, %v3856, %v3857
        %v3859 = vrot.slane %v3820, 4
        %v3860 = vsel %vm468, %v3854, %v3859
        %v3861 = vrot.slane %v3821, 4
        %v3862 = vsel %vm468, %v3857, %v3861
        %v3863 = vrot.slane %v3822, 4
        %v3864 = vsel %vm468, %v3859, %v3863
        %v3865 = vrot.slane %v3823, 4
        %v3866 = vsel %vm468, %v3861, %v3865
        %v3867 = vrot.slane %v3824, 4
        %v3868 = vsel %vm468, %v3863, %v3867
        %v3869 = vrot.slane %v3825, 4
        %v3870 = vsel %vm468, %v3865, %v3869
        %3879 = vmatprep.subr.bf16.mxu0 0
        %3880 = vmatpush1.bf16.msra.mxu0 %v3827
        %3881 = vmatprep.subr.bf16.mxu0 0
        %3882 = vmatpush1.bf16.msra.mxu0 %v3828
        %3883 = vmatprep.subr.bf16.mxu0 0
        %3884 = vmatpush1.bf16.msra.mxu0 %v3829
        %3885 = vmatprep.subr.bf16.mxu0 0
        %3886 = vmatpush1.bf16.msra.mxu0 %v3830
        %3887 = vmatprep.subr.bf16.mxu0 0
        %3888 = vmatpush1.bf16.msra.mxu0 %v3831
        %3889 = vmatprep.subr.bf16.mxu0 0
        %3890 = vmatpush1.bf16.msra.mxu0 %v3832
        %3891 = vmatprep.subr.bf16.mxu0 0
        %3892 = vmatpush1.bf16.msra.mxu0 %v3833
        %3893 = vmatprep.subr.bf16.mxu0 0
        %3894 = vmatpush1.bf16.msra.mxu0 %v3834
        %3895 = vmatprep.subr.bf16.mxu0 0
        %3896 = vmatpush1.bf16.msra.mxu0 %v3835
        %3897 = vmatprep.subr.bf16.mxu0 0
        %3898 = vmatpush1.bf16.msra.mxu0 %v3836
        %3899 = vmatprep.subr.bf16.mxu0 0
        %3900 = vmatpush1.bf16.msra.mxu0 %v3837
        %3901 = vmatprep.subr.bf16.mxu0 0
        %3902 = vmatpush1.bf16.msra.mxu0 %v3838
        %3903 = vmatprep.subr.bf16.mxu0 0
        %3904 = vmatpush1.bf16.msra.mxu0 %v3839
        %3905 = vmatprep.subr.bf16.mxu0 0
        %3906 = vmatpush1.bf16.msra.mxu0 %v3840
        %3907 = vmatprep.subr.bf16.mxu0 0
        %3908 = vmatpush1.bf16.msra.mxu0 %v3841
        %3909 = vmatprep.subr.bf16.mxu0 0
        %3910 = vmatpush1.bf16.msra.mxu0 %v3842
        %3911 = vmatprep.mubr.bf16.mxu0 %v3858
        %3912 = vmatmul.mubr.bf16.gmra.mrb[0].mxu0 %v3855
        %v3913 = vpop.f32.mrb[0].mxu0
        %v3914 = vadd.f32 %v364, %v3913
        %v3915 = vpop.f32.mrb[0].mxu0
        %v3916 = vpop.f32.mrb[0].mxu0
        %v3917 = vadd.f32 %v364, %v3916
        %v3918 = vpop.f32.mrb[0].mxu0
        %3919 = vmatprep.mubr.bf16.mxu0 %v3862
        %3920 = vmatmul.mubr.bf16.gmra.mrb[0].mxu0 %v3860
        %v3921 = vpop.f32.mrb[0].mxu0
        %v3922 = vadd.f32 %v364, %v3921
        %v3923 = vpop.f32.mrb[0].mxu0
        %v3924 = vpop.f32.mrb[0].mxu0
        %v3925 = vadd.f32 %v364, %v3924
        %v3926 = vpop.f32.mrb[0].mxu0
        %3927 = vmatprep.mubr.bf16.mxu0 %v3866
        %3928 = vmatmul.mubr.bf16.gmra.mrb[0].mxu0 %v3864
        %v3929 = vpop.f32.mrb[0].mxu0
        %v3930 = vadd.f32 %v364, %v3929
        %v3931 = vpop.f32.mrb[0].mxu0
        %v3932 = vpop.f32.mrb[0].mxu0
        %v3933 = vadd.f32 %v364, %v3932
        %v3934 = vpop.f32.mrb[0].mxu0
        %3935 = vmatprep.mubr.bf16.mxu0 %v3870
        %3936 = vmatmul.mubr.bf16.gmra.mrb[0].mxu0 %v3868
        %v3937 = vpop.f32.mrb[0].mxu0
        %v3938 = vadd.f32 %v364, %v3937
        %v3939 = vpop.f32.mrb[0].mxu0
        %v3940 = vpop.f32.mrb[0].mxu0
        %v3941 = vadd.f32 %v364, %v3940
        %v3942 = vpop.f32.mrb[0].mxu0
        %3943 = vdwg.mxu0
        %v3944 = vld [vmem:[%s571 + $0x68] sm:$0xff]
        %v3945 = vld [vmem:[%s571 + $0x70] sm:$0xff]
        %s3946 = scalar_lea.vmem [#allocation3], 3712
        %v3947 = vld [vmem:[%s3946] sm:$0xff]
        %v3948 = vld [vmem:[%s3946 + $0x8] sm:$0xff]
        %v3949 = vld [vmem:[%s3946 + $0x10] sm:$0xff]
        %v3950 = vld [vmem:[%s3946 + $0x18] sm:$0xff]
        %v3951 = vld [vmem:[%s3946 + $0x20] sm:$0xff]
        %v3952 = vld [vmem:[%s3946 + $0x28] sm:$0xff]
        %v3953 = vld [vmem:[%s3946 + $0x30] sm:$0xff]
        %v3954 = vld [vmem:[%s3946 + $0x38] sm:$0xff]
        %v3955 = vld [vmem:[%s3946 + $0x40] sm:$0xff]
        %v3956 = vld [vmem:[%s3946 + $0x48] sm:$0xff]
        %v3957 = vld [vmem:[%s3946 + $0x50] sm:$0xff]
        %v3958 = vld [vmem:[%s3946 + $0x58] sm:$0xff]
        %v3959 = vld [vmem:[%s3946 + $0x60] sm:$0xff]
        %v3960 = vld [vmem:[%s3946 + $0x68] sm:$0xff]
        %v3961 = vld [vmem:[%s3946 + $0x70] sm:$0xff]
        %v3962 = vld [vmem:[%s3946 + $0x78] sm:$0xff]
        %3963 = vmatprep.subr.bf16.mxu0 0
        %3964 = vmatpush1.bf16.msra.mxu0 %v3947
        %3965 = vmatprep.subr.bf16.mxu0 0
        %3966 = vmatpush1.bf16.msra.mxu0 %v3948
        %3967 = vmatprep.subr.bf16.mxu0 0
        %3968 = vmatpush1.bf16.msra.mxu0 %v3949
        %3969 = vmatprep.subr.bf16.mxu0 0
        %3970 = vmatpush1.bf16.msra.mxu0 %v3950
        %3971 = vmatprep.subr.bf16.mxu0 0
        %3972 = vmatpush1.bf16.msra.mxu0 %v3951
        %3973 = vmatprep.subr.bf16.mxu0 0
        %3974 = vmatpush1.bf16.msra.mxu0 %v3952
        %3975 = vmatprep.subr.bf16.mxu0 0
        %3976 = vmatpush1.bf16.msra.mxu0 %v3953
        %3977 = vmatprep.subr.bf16.mxu0 0
        %3978 = vmatpush1.bf16.msra.mxu0 %v3954
        %3979 = vmatprep.subr.bf16.mxu0 0
        %3980 = vmatpush1.bf16.msra.mxu0 %v3955
        %3981 = vmatprep.subr.bf16.mxu0 0
        %3982 = vmatpush1.bf16.msra.mxu0 %v3956
        %3983 = vmatprep.subr.bf16.mxu0 0
        %3984 = vmatpush1.bf16.msra.mxu0 %v3957
        %3985 = vmatprep.subr.bf16.mxu0 0
        %3986 = vmatpush1.bf16.msra.mxu0 %v3958
        %3987 = vmatprep.subr.bf16.mxu0 0
        %3988 = vmatpush1.bf16.msra.mxu0 %v3959
        %3989 = vmatprep.subr.bf16.mxu0 0
        %3990 = vmatpush1.bf16.msra.mxu0 %v3960
        %3991 = vmatprep.subr.bf16.mxu0 0
        %3992 = vmatpush1.bf16.msra.mxu0 %v3961
        %3993 = vmatprep.subr.bf16.mxu0 0
        %3994 = vmatpush1.bf16.msra.mxu0 %v3962
        %3995 = vmatprep.mubr.bf16.mxu0 %v3819
        %3996 = vmatmul.mubr.bf16.gmra.mrb[0].mxu0 %v3818
        %v3997 = vpop.f32.mrb[0].mxu0
        %v3998 = vadd.f32 0.0, %v3997
        %v3999 = vpop.f32.mrb[0].mxu0
        %v4000 = vpop.f32.mrb[0].mxu0
        %v4001 = vadd.f32 0.0, %v4000
        %v4002 = vpop.f32.mrb[0].mxu0
        %4003 = vmatprep.mubr.bf16.mxu0 %v3821
        %4004 = vmatmul.mubr.bf16.gmra.mrb[0].mxu0 %v3820
        %v4005 = vpop.f32.mrb[0].mxu0
        %v4006 = vadd.f32 0.0, %v4005
        %v4007 = vpop.f32.mrb[0].mxu0
        %v4008 = vpop.f32.mrb[0].mxu0
        %v4009 = vadd.f32 0.0, %v4008
        %v4010 = vpop.f32.mrb[0].mxu0
        %4011 = vmatprep.mubr.bf16.mxu0 %v3823
        %4012 = vmatmul.mubr.bf16.gmra.mrb[0].mxu0 %v3822
        %v4013 = vpop.f32.mrb[0].mxu0
        %v4014 = vadd.f32 0.0, %v4013
        %v4015 = vpop.f32.mrb[0].mxu0
        %v4016 = vpop.f32.mrb[0].mxu0
        %v4017 = vadd.f32 0.0, %v4016
        %v4018 = vpop.f32.mrb[0].mxu0
        %4019 = vmatprep.mubr.bf16.mxu0 %v3945
        %4020 = vmatmul.mubr.bf16.gmra.mrb[0].mxu0 %v3944
        %v4021 = vpop.f32.mrb[0].mxu0
        %v4022 = vadd.f32 0.0, %v4021
        %v4023 = vpop.f32.mrb[0].mxu0
        %v4024 = vpop.f32.mrb[0].mxu0
        %v4025 = vadd.f32 0.0, %v4024
        %v4026 = vpop.f32.mrb[0].mxu0
        %4027 = vdwg.mxu0
        %v4028 = vadd.f32 %v3914, %v3998
        %v4029 = vadd.f32 %v3917, %v4001
        %v4030 = vadd.f32 %v3922, %v4006
        %v4031 = vadd.f32 %v3925, %v4009
        %v4032 = vadd.f32 %v3930, %v4014
        %v4033 = vadd.f32 %v3933, %v4017
        %v4034 = vadd.f32 %v3938, %v4022
        %v4035 = vadd.f32 %v3941, %v4025
        %v4036 = vld [vmem:[%s274 + $0x8] sm:$0xf0]
        %v4037 = vld [vmem:[%s274 + $0x10] sm:$0xf0]
        %v4038 = vld [vmem:[%s274 + $0x20] sm:$0xff]
        %v4039 = vld [vmem:[%s274 + $0x28] sm:$0xff]
        %v4040 = vld [vmem:[%s274 + $0x38] sm:$0xff]
        %v4041 = vld [vmem:[%s274 + $0x40] sm:$0xff]
        %v4042 = vld [vmem:[%s274 + $0x50] sm:$0xff]
        %v4043 = vld [vmem:[%s274 + $0x58] sm:$0xff]
        %v4044 = vld [vmem:[%s274 + $0x68] sm:$0xf]
        %v4045 = vld [vmem:[%s274 + $0x70] sm:$0xf]
        %s4046 = scalar_lea.vmem [#allocation3], 3840
        %v4047 = vld [vmem:[%s4046] sm:$0xff]
        %v4048 = vld [vmem:[%s4046 + $0x8] sm:$0xff]
        %v4049 = vld [vmem:[%s4046 + $0x10] sm:$0xff]
        %v4050 = vld [vmem:[%s4046 + $0x18] sm:$0xff]
        %v4051 = vld [vmem:[%s4046 + $0x20] sm:$0xff]
        %v4052 = vld [vmem:[%s4046 + $0x28] sm:$0xff]
        %v4053 = vld [vmem:[%s4046 + $0x30] sm:$0xff]
        %v4054 = vld [vmem:[%s4046 + $0x38] sm:$0xff]
        %v4055 = vld [vmem:[%s4046 + $0x40] sm:$0xff]
        %v4056 = vld [vmem:[%s4046 + $0x48] sm:$0xff]
        %v4057 = vld [vmem:[%s4046 + $0x50] sm:$0xff]
        %v4058 = vld [vmem:[%s4046 + $0x58] sm:$0xff]
        %v4059 = vld [vmem:[%s4046 + $0x60] sm:$0xff]
        %v4060 = vld [vmem:[%s4046 + $0x68] sm:$0xff]
        %v4061 = vld [vmem:[%s4046 + $0x70] sm:$0xff]
        %v4062 = vld [vmem:[%s4046 + $0x78] sm:$0xff]
        %v4073 = vrot.slane %v4036, 4
        %v4074 = vrot.slane %v4038, 4
        %v4075 = vsel %vm468, %v4073, %v4074
        %v4076 = vrot.slane %v4037, 4
        %v4077 = vrot.slane %v4039, 4
        %v4078 = vsel %vm468, %v4076, %v4077
        %v4079 = vrot.slane %v4040, 4
        %v4080 = vsel %vm468, %v4074, %v4079
        %v4081 = vrot.slane %v4041, 4
        %v4082 = vsel %vm468, %v4077, %v4081
        %v4083 = vrot.slane %v4042, 4
        %v4084 = vsel %vm468, %v4079, %v4083
        %v4085 = vrot.slane %v4043, 4
        %v4086 = vsel %vm468, %v4081, %v4085
        %v4087 = vrot.slane %v4044, 4
        %v4088 = vsel %vm468, %v4083, %v4087
        %v4089 = vrot.slane %v4045, 4
        %v4090 = vsel %vm468, %v4085, %v4089
        %4099 = vmatprep.subr.bf16.mxu0 0
        %4100 = vmatpush1.bf16.msra.mxu0 %v4047
        %4101 = vmatprep.subr.bf16.mxu0 0
        %4102 = vmatpush1.bf16.msra.mxu0 %v4048
        %4103 = vmatprep.subr.bf16.mxu0 0
        %4104 = vmatpush1.bf16.msra.mxu0 %v4049
        %4105 = vmatprep.subr.bf16.mxu0 0
        %4106 = vmatpush1.bf16.msra.mxu0 %v4050
        %4107 = vmatprep.subr.bf16.mxu0 0
        %4108 = vmatpush1.bf16.msra.mxu0 %v4051
        %4109 = vmatprep.subr.bf16.mxu0 0
        %4110 = vmatpush1.bf16.msra.mxu0 %v4052
        %4111 = vmatprep.subr.bf16.mxu0 0
        %4112 = vmatpush1.bf16.msra.mxu0 %v4053
        %4113 = vmatprep.subr.bf16.mxu0 0
        %4114 = vmatpush1.bf16.msra.mxu0 %v4054
        %4115 = vmatprep.subr.bf16.mxu0 0
        %4116 = vmatpush1.bf16.msra.mxu0 %v4055
        %4117 = vmatprep.subr.bf16.mxu0 0
        %4118 = vmatpush1.bf16.msra.mxu0 %v4056
        %4119 = vmatprep.subr.bf16.mxu0 0
        %4120 = vmatpush1.bf16.msra.mxu0 %v4057
        %4121 = vmatprep.subr.bf16.mxu0 0
        %4122 = vmatpush1.bf16.msra.mxu0 %v4058
        %4123 = vmatprep.subr.bf16.mxu0 0
        %4124 = vmatpush1.bf16.msra.mxu0 %v4059
        %4125 = vmatprep.subr.bf16.mxu0 0
        %4126 = vmatpush1.bf16.msra.mxu0 %v4060
        %4127 = vmatprep.subr.bf16.mxu0 0
        %4128 = vmatpush1.bf16.msra.mxu0 %v4061
        %4129 = vmatprep.subr.bf16.mxu0 0
        %4130 = vmatpush1.bf16.msra.mxu0 %v4062
        %4131 = vmatprep.mubr.bf16.mxu0 %v4078
        %4132 = vmatmul.mubr.bf16.gmra.mrb[0].mxu0 %v4075
        %v4133 = vpop.f32.mrb[0].mxu0
        %v4134 = vadd.f32 0.0, %v4133
        %v4135 = vpop.f32.mrb[0].mxu0
        %v4136 = vpop.f32.mrb[0].mxu0
        %v4137 = vadd.f32 0.0, %v4136
        %v4138 = vpop.f32.mrb[0].mxu0
        %4139 = vmatprep.mubr.bf16.mxu0 %v4082
        %4140 = vmatmul.mubr.bf16.gmra.mrb[0].mxu0 %v4080
        %v4141 = vpop.f32.mrb[0].mxu0
        %v4142 = vadd.f32 0.0, %v4141
        %v4143 = vpop.f32.mrb[0].mxu0
        %v4144 = vpop.f32.mrb[0].mxu0
        %v4145 = vadd.f32 0.0, %v4144
        %v4146 = vpop.f32.mrb[0].mxu0
        %4147 = vmatprep.mubr.bf16.mxu0 %v4086
        %4148 = vmatmul.mubr.bf16.gmra.mrb[0].mxu0 %v4084
        %v4149 = vpop.f32.mrb[0].mxu0
        %v4150 = vadd.f32 0.0, %v4149
        %v4151 = vpop.f32.mrb[0].mxu0
        %v4152 = vpop.f32.mrb[0].mxu0
        %v4153 = vadd.f32 0.0, %v4152
        %v4154 = vpop.f32.mrb[0].mxu0
        %4155 = vmatprep.mubr.bf16.mxu0 %v4090
        %4156 = vmatmul.mubr.bf16.gmra.mrb[0].mxu0 %v4088
        %v4157 = vpop.f32.mrb[0].mxu0
        %v4158 = vadd.f32 0.0, %v4157
        %v4159 = vpop.f32.mrb[0].mxu0
        %v4160 = vpop.f32.mrb[0].mxu0
        %v4161 = vadd.f32 0.0, %v4160
        %v4162 = vpop.f32.mrb[0].mxu0
        %4163 = vdwg.mxu0
        %v4164 = vadd.f32 %v4028, %v4134
        %v4165 = vadd.f32 %v4029, %v4137
        %v4166 = vadd.f32 %v4030, %v4142
        %v4167 = vadd.f32 %v4031, %v4145
        %v4168 = vadd.f32 %v4032, %v4150
        %v4169 = vadd.f32 %v4033, %v4153
        %v4170 = vadd.f32 %v4034, %v4158
        %v4171 = vadd.f32 %v4035, %v4161
        %v4172 = vld [vmem:[%s274 + $0x68] sm:$0xff]
        %v4173 = vld [vmem:[%s274 + $0x70] sm:$0xff]
        %s4174 = scalar_lea.vmem [#allocation3], 3968
        %v4175 = vld [vmem:[%s4174] sm:$0xff]
        %v4176 = vld [vmem:[%s4174 + $0x8] sm:$0xff]
        %v4177 = vld [vmem:[%s4174 + $0x10] sm:$0xff]
        %v4178 = vld [vmem:[%s4174 + $0x18] sm:$0xff]
        %v4179 = vld [vmem:[%s4174 + $0x20] sm:$0xff]
        %v4180 = vld [vmem:[%s4174 + $0x28] sm:$0xff]
        %v4181 = vld [vmem:[%s4174 + $0x30] sm:$0xff]
        %v4182 = vld [vmem:[%s4174 + $0x38] sm:$0xff]
        %v4183 = vld [vmem:[%s4174 + $0x40] sm:$0xff]
        %v4184 = vld [vmem:[%s4174 + $0x48] sm:$0xff]
        %v4185 = vld [vmem:[%s4174 + $0x50] sm:$0xff]
        %v4186 = vld [vmem:[%s4174 + $0x58] sm:$0xff]
        %v4187 = vld [vmem:[%s4174 + $0x60] sm:$0xff]
        %v4188 = vld [vmem:[%s4174 + $0x68] sm:$0xff]
        %v4189 = vld [vmem:[%s4174 + $0x70] sm:$0xff]
        %v4190 = vld [vmem:[%s4174 + $0x78] sm:$0xff]
        %4191 = vmatprep.subr.bf16.mxu0 0
        %4192 = vmatpush1.bf16.msra.mxu0 %v4175
        %4193 = vmatprep.subr.bf16.mxu0 0
        %4194 = vmatpush1.bf16.msra.mxu0 %v4176
        %4195 = vmatprep.subr.bf16.mxu0 0
        %4196 = vmatpush1.bf16.msra.mxu0 %v4177
        %4197 = vmatprep.subr.bf16.mxu0 0
        %4198 = vmatpush1.bf16.msra.mxu0 %v4178
        %4199 = vmatprep.subr.bf16.mxu0 0
        %4200 = vmatpush1.bf16.msra.mxu0 %v4179
        %4201 = vmatprep.subr.bf16.mxu0 0
        %4202 = vmatpush1.bf16.msra.mxu0 %v4180
        %4203 = vmatprep.subr.bf16.mxu0 0
        %4204 = vmatpush1.bf16.msra.mxu0 %v4181
        %4205 = vmatprep.subr.bf16.mxu0 0
        %4206 = vmatpush1.bf16.msra.mxu0 %v4182
        %4207 = vmatprep.subr.bf16.mxu0 0
        %4208 = vmatpush1.bf16.msra.mxu0 %v4183
        %4209 = vmatprep.subr.bf16.mxu0 0
        %4210 = vmatpush1.bf16.msra.mxu0 %v4184
        %4211 = vmatprep.subr.bf16.mxu0 0
        %4212 = vmatpush1.bf16.msra.mxu0 %v4185
        %4213 = vmatprep.subr.bf16.mxu0 0
        %4214 = vmatpush1.bf16.msra.mxu0 %v4186
        %4215 = vmatprep.subr.bf16.mxu0 0
        %4216 = vmatpush1.bf16.msra.mxu0 %v4187
        %4217 = vmatprep.subr.bf16.mxu0 0
        %4218 = vmatpush1.bf16.msra.mxu0 %v4188
        %4219 = vmatprep.subr.bf16.mxu0 0
        %4220 = vmatpush1.bf16.msra.mxu0 %v4189
        %4221 = vmatprep.subr.bf16.mxu0 0
        %4222 = vmatpush1.bf16.msra.mxu0 %v4190
        %4223 = vmatprep.mubr.bf16.mxu0 %v4039
        %4224 = vmatmul.mubr.bf16.gmra.mrb[0].mxu0 %v4038
        %v4225 = vpop.f32.mrb[0].mxu0
        %v4226 = vadd.f32 0.0, %v4225
        %v4227 = vpop.f32.mrb[0].mxu0
        %v4228 = vpop.f32.mrb[0].mxu0
        %v4229 = vadd.f32 0.0, %v4228
        %v4230 = vpop.f32.mrb[0].mxu0
        %4231 = vmatprep.mubr.bf16.mxu0 %v4041
        %4232 = vmatmul.mubr.bf16.gmra.mrb[0].mxu0 %v4040
        %v4233 = vpop.f32.mrb[0].mxu0
        %v4234 = vadd.f32 0.0, %v4233
        %v4235 = vpop.f32.mrb[0].mxu0
        %v4236 = vpop.f32.mrb[0].mxu0
        %v4237 = vadd.f32 0.0, %v4236
        %v4238 = vpop.f32.mrb[0].mxu0
        %4239 = vmatprep.mubr.bf16.mxu0 %v4043
        %4240 = vmatmul.mubr.bf16.gmra.mrb[0].mxu0 %v4042
        %v4241 = vpop.f32.mrb[0].mxu0
        %v4242 = vadd.f32 0.0, %v4241
        %v4243 = vpop.f32.mrb[0].mxu0
        %v4244 = vpop.f32.mrb[0].mxu0
        %v4245 = vadd.f32 0.0, %v4244
        %v4246 = vpop.f32.mrb[0].mxu0
        %4247 = vmatprep.mubr.bf16.mxu0 %v4173
        %4248 = vmatmul.mubr.bf16.gmra.mrb[0].mxu0 %v4172
        %v4249 = vpop.f32.mrb[0].mxu0
        %v4250 = vadd.f32 0.0, %v4249
        %v4251 = vpop.f32.mrb[0].mxu0
        %v4252 = vpop.f32.mrb[0].mxu0
        %v4253 = vadd.f32 0.0, %v4252
        %v4254 = vpop.f32.mrb[0].mxu0
        %4255 = vdwg.mxu0
        %v4256 = vadd.f32 %v4164, %v4226
        %v4257 = vadd.f32 %v4165, %v4229
        %v4258 = vadd.f32 %v4166, %v4234
        %v4259 = vadd.f32 %v4167, %v4237
        %v4260 = vadd.f32 %v4168, %v4242
        %v4261 = vadd.f32 %v4169, %v4245
        %v4262 = vadd.f32 %v4170, %v4250
        %v4263 = vadd.f32 %v4171, %v4253
        %v4264 = vpack.c.bf16 %v4257, %v4256
        %v4265 = vpack.c.bf16 %v4259, %v4258
        %v4266 = vpack.c.bf16 %v4261, %v4260
        %v4267 = vpack.c.bf16 %v4263, %v4262
        %v4272 = vunpack.c.l.b16 %v4264
        %v4273 = vunpack.c.h.b16 %v4264
        %v4274 = vunpack.c.l.b16 %v4265
        %v4275 = vunpack.c.h.b16 %v4265
        %v4276 = vunpack.c.l.b16 %v4266
        %v4277 = vunpack.c.h.b16 %v4266
        %v4278 = vunpack.c.l.b16 %v4267
        %v4279 = vunpack.c.h.b16 %v4267
        %v4280 = vpack.c.b16 %v4272, %v4272
        %v4281 = vpack.c.b16 %v4273, %v4273
        %v4282 = vpack.c.b16 %v4274, %v4274
        %v4283 = vpack.c.b16 %v4275, %v4275
        %v4284 = vpack.c.b16 %v4276, %v4276
        %v4285 = vpack.c.b16 %v4277, %v4277
        %v4286 = vpack.c.b16 %v4278, %v4278
        %v4287 = vpack.c.b16 %v4279, %v4279
        %s4296 = scalar_lea.vmem %s123, 224 [#allocation8]
        %4297 = vst [vmem:[%s4296] sm:$0xf] %v4280
        %4298 = vst [vmem:[%s4296 + $0x4] sm:$0xf] %v4281
        %4299 = vst [vmem:[%s4296 + $0x8] sm:$0xf] %v4282
        %4300 = vst [vmem:[%s4296 + $0xc] sm:$0xf] %v4283
        %4301 = vst [vmem:[%s4296 + $0x10] sm:$0xf] %v4284
        %4302 = vst [vmem:[%s4296 + $0x14] sm:$0xf] %v4285
        %4303 = vst [vmem:[%s4296 + $0x18] sm:$0xf] %v4286
        %4304 = vst [vmem:[%s4296 + $0x1c] sm:$0xf] %v4287
        %s4305 = sand.u32 %s61, 1
        %s4306 = scalar_lea.sflag [#allocation7], %s4305
        %s4307 = sand.u32 %s61, 1
        %s4308 = smul.addr %s4307, 256
        %s4309 = scalar_lea.vmem [#allocation8], %s4308
        // Predicated region
        $region41: #{tpu_custom_call.1} parent=23 // pred_check
          %p4310 = pneg %p71
        $region42: #{tpu_custom_call.1} parent=23 // pred_check_branch
          %4312 = sbr.rel (%p4310) target = $region44
        $region43: #{tpu_custom_call.1} parent=23 // pred_region
          %s4314 = ssub.s32 4096, 4096
          %4315 = vsyncadd %s4306, %s4314
          %s4316 = smul.addr %s23, 64
          %s4317 = smul.addr %s22, 512
          %s4318 = sadd.s32 %s4316, %s4317
          %s4319 = smul.addr %s4318, 64
          %s4320 = scalar_lea.hbm %s3, %s4319
          %s4321 = sshll.u32 %s4309, 4
          %s4322 = int_to_ptr.vmem [resolvable:$true] %s4321
          %4327 = dma.vmem_to_hbm [thread:$0]  %s4322, 4096, %s4320, %s4306, 64, 64, 4
        $region44: #{tpu_custom_call.1} parent=23 // pred_fallthru
          _
      $region24: #{tpu_custom_call.1} parent=5 // pred_fallthru
        _
      %p4328 = scmp.le.s32.totalorder 2, %s13
      // Predicated region
      $region45: #{tpu_custom_call.1} parent=5 // pred_check
        %p4329 = pneg %p4328
      $region46: #{tpu_custom_call.1} parent=5 // pred_check_branch
        %4331 = sbr.rel (%p4329) target = $region48
      $region47: #{tpu_custom_call.1} parent=5 // pred_region
        %s4332 = ssub.s32 %s13, 2
        // Predicated region
        $region49: #{tpu_custom_call.1} parent=47 // pred_check
          %p4333 = pneg %p77
        $region50: #{tpu_custom_call.1} parent=47 // pred_check_branch
          %4335 = sbr.rel (%p4333) target = $region52
        $region51: #{tpu_custom_call.1} parent=47 // pred_region
          %s4336 = sand.u32 %s62, 1
          %s4337 = scalar_lea.sflag [#allocation7], %s4336
          %s4338 = sand.u32 %s62, 1
          %s4339 = smul.addr %s4338, 256
          %s4340 = scalar_lea.vmem [#allocation8], %s4339
          %4341 = dma.done %s4337, 4096
        $region52: #{tpu_custom_call.1} parent=47 // pred_fallthru
          _
      $region48: #{tpu_custom_call.1} parent=5 // pred_fallthru
        _
    $region6: #{tpu_custom_call.1} parent=1 // loop_footer
      %s17 = sadd.s32 1, %s13
    $region7: #{tpu_custom_call.1} parent=1 // loop_footer_branch
      %12 = sbr.rel target = $region3
    $region8: #{tpu_custom_call.1} parent=1 // loop_exit
      _
    %4342 = vsyncpa [#allocation6], 1
    %s4343 = scalar_lea.sflag [#allocation6], 1
    %4344 = vsyncpa %s4343, 1
    %4345 = vsyncpa [#allocation7], 1
    %s4346 = scalar_lea.sflag [#allocation7], 1
    %4347 = vsyncpa %s4346, 1
  %4348 = vsyncmov [#allocation4]
  %s4349 = vpop.sfrf %4348
  %p4350 = scmp.eq.s32.totalorder %s4349, 0
  %p4351 = pneg %p4350
  %4353 = shalt.err (%p4351)
  %s4354 = scalar_lea.sflag [#allocation4], 1
  %4355 = vsyncmov %s4354
  %s4356 = vpop.sfrf %4355
  %p4357 = scmp.eq.s32.totalorder %s4356, 0
  %p4358 = pneg %p4357
  %4360 = shalt.err (%p4358)
  %s4361 = scalar_lea.sflag [#allocation4], 2
  %4362 = vsyncmov %s4361
  %s4363 = vpop.sfrf %4362
  %p4364 = scmp.eq.s32.totalorder %s4363, 0
  %p4365 = pneg %p4364
  %4367 = shalt.err (%p4365)
  %s4368 = scalar_lea.sflag [#allocation4], 3
  %4369 = vsyncmov %s4368
  %s4370 = vpop.sfrf %4369
  %p4371 = scmp.eq.s32.totalorder %s4370, 0
  %p4372 = pneg %p4371
  %4374 = shalt.err (%p4372)
  %s4375 = scalar_lea.sflag [#allocation4], 4
  %4376 = vsyncmov %s4375
  %s4377 = vpop.sfrf %4376
  %p4378 = scmp.eq.s32.totalorder %s4377, 0
  %p4379 = pneg %p4378
  %4381 = shalt.err (%p4379)

</llo_original>
